<compile_context>
chip_gen: v7x
topology: tpu7x:2x2x1
jax: 0.10.0
libtpu: 0.0.40
codegen_flags: <defaults>
</compile_context>

<pallas_src>
import functools
import math

import jax
import jax.numpy as jnp
from jax.experimental import pallas as pl
from jax.experimental.pallas import tpu as pltpu

_TN = (((0,), (0,)), ((), ()))   # contract leading (edge) axis of both operands
_NT = (((1,), (1,)), ((), ()))   # contract trailing axis of both (A @ B.T)


# --------------------------------------------------------------------------
# Fused forward kernel
# --------------------------------------------------------------------------

def _fused_forward_kernel(
    # graph inputs
    x_ref, edge_vec_ref, edge_len_ref, src_col_ref, dst_col_ref,
    mask_atom_ref, mask_edge_ref, rnd_ref,
    # encoder / mask-token parameters
    embed_w_ref, embed_b_ref,
    rbf_gamma_ref, rbf_c_ref, rbf_w_ref, rbf_b_ref,
    s_mask_ref, e_mask_ref, v_mask_ref,
    # stacked per-layer GNN parameters (leading layer axis)
    w_msg_ref, b_msg_ref, w_upd_ref, b_upd_ref, w_gate_ref, b_gate_ref,
    # stacked per-layer self-attention parameters
    wq_ref, wk_ref, wv_ref, wo_ref, bq_ref, bk_ref, bv_ref, bo_ref,
    # outputs
    s_out_ref, v_out_ref,
    *, n_heads, num_layers):

    f32 = jnp.float32
    bf16 = jnp.bfloat16
    N, d_s = x_ref.shape
    E = edge_len_ref.shape[0]
    hd = d_s // n_heads
    scale = 1.0 / math.sqrt(hd)

    # ---------------- encoders (MXU inputs bf16, accumulate f32) -------------
    s = jnp.dot(x_ref[...].astype(bf16), embed_w_ref[...],
                preferred_element_type=f32) + embed_b_ref[...]          # AtomEncoder

    d = edge_len_ref[...]                                               # (E, 1)
    rbf = jnp.exp(-rbf_gamma_ref[...] * (d - rbf_c_ref[...]) ** 2)      # (E, num_rbf)
    ea = jnp.dot(rbf.astype(bf16), rbf_w_ref[...],
                 preferred_element_type=f32) + rbf_b_ref[...]
    edge_attr = ea * jax.nn.sigmoid(ea)                                 # SiLU (eval: dropout=id)

    edge_vec_unit = edge_vec_ref[...] * pl.reciprocal(d + 1e-8, approx=True)

    # ---------------- mask-token substitution --------------------------------
    atom_masked = mask_atom_ref[...] > 0.5
    edge_masked = mask_edge_ref[...] > 0.5
    s = jnp.where(atom_masked, s_mask_ref[...], s)
    edge_attr = jnp.where(edge_masked, e_mask_ref[...], edge_attr)
    edge_vec_unit = jnp.where(edge_masked, v_mask_ref[...], edge_vec_unit)

    # ---------------- one-hot adjacency: gathers & scatters on the MXU -------
    # One (E, N) bf16 one-hot per endpoint.  Gathers: onehot @ X.  Scatters:
    # dot_general contracting the edge axis (TN) -- no transposed copies.
    col_n = jax.lax.broadcasted_iota(jnp.int32, (E, N), 1)
    onehot_src = (col_n == src_col_ref[...]).astype(f32).astype(bf16)   # 0/1 exact in bf16
    onehot_dst = (col_n == dst_col_ref[...]).astype(f32).astype(bf16)

    ones_e = jnp.ones((E, 1), bf16)
    cnt_src = jax.lax.dot_general(onehot_src, ones_e, _TN,
                                  preferred_element_type=f32)           # (N,1) exact ints
    cnt_dst = jax.lax.dot_general(onehot_dst, ones_e, _TN,
                                  preferred_element_type=f32)
    inv_cnt_src = pl.reciprocal(jnp.maximum(cnt_src, 1.0), approx=True)
    inv_cnt_dst = pl.reciprocal(jnp.maximum(cnt_dst, 1.0), approx=True)

    # ---------------- initial vector features --------------------------------
    # scatter_mean(edge_vec_unit, src, dim_size=N)
    v = jax.lax.dot_general(onehot_src, edge_vec_unit.astype(bf16), _TN,
                            preferred_element_type=f32) * inv_cnt_src
    # Nodes with no outgoing edge -> random unit vector (count is exact).
    v = jnp.where(cnt_src == 0.0, rnd_ref[...], v)

    # Per-head lane masks, hoisted out of the layer loop.
    col_d = jax.lax.broadcasted_iota(jnp.int32, (1, d_s), 1)
    head_masks = [((col_d >= h * hd) & (col_d < (h + 1) * hd)).astype(f32)
                  for h in range(n_heads)]

    # ---------------- layers (static unroll; num_layers is small) ------------
    for l in range(num_layers):
        # --- UnifiedEquivariantGNN: message + scalar update ---
        s_bf = s.astype(bf16)
        s_src = jnp.dot(onehot_src, s_bf, preferred_element_type=f32)   # gather s[src]
        s_dst = jnp.dot(onehot_dst, s_bf, preferred_element_type=f32)   # gather s[dst]
        msg_in = s_src + s_dst + edge_attr
        m = jnp.dot(msg_in.astype(bf16), w_msg_ref[l],
                    preferred_element_type=f32) + b_msg_ref[l]
        m = m * jax.nn.sigmoid(m)                                       # SiLU
        s_agg = jax.lax.dot_general(onehot_dst, m.astype(bf16), _TN,
                                    preferred_element_type=f32) * inv_cnt_dst
        upd = jnp.dot(s_agg.astype(bf16), w_upd_ref[l],
                      preferred_element_type=f32) + b_upd_ref[l]
        s = s + upd * jax.nn.sigmoid(upd)

        # --- fused gate projection + gated equivariant vector update ---
        gate = jax.nn.sigmoid(
            jnp.sum(m * w_gate_ref[l], axis=-1, keepdims=True) + b_gate_ref[l])  # (E,1)
        v = v + jax.lax.dot_general(onehot_dst, (gate * edge_vec_unit).astype(bf16),
                                    _TN, preferred_element_type=f32) * inv_cnt_dst

        # --- multi-head self-attention: 2 MXU pushes for all heads ---
        s_bf = s.astype(bf16)
        q = jnp.dot(s_bf, wq_ref[l], preferred_element_type=f32) + bq_ref[l]
        k = jnp.dot(s_bf, wk_ref[l], preferred_element_type=f32) + bk_ref[l]
        vv = jnp.dot(s_bf, wv_ref[l], preferred_element_type=f32) + bv_ref[l]

        # Head-masked queries stacked along sublanes: row block h == head h.
        q_all = jnp.concatenate([q * mh for mh in head_masks], axis=0)  # (H*N, d_s)
        logits = jax.lax.dot_general(q_all.astype(bf16), k.astype(bf16), _NT,
                                     preferred_element_type=f32) * scale  # (H*N, N)
        logits = logits - jnp.max(logits, axis=-1, keepdims=True)
        p = jnp.exp(logits)
        p = p * pl.reciprocal(jnp.sum(p, axis=-1, keepdims=True), approx=True)
        o_all = jnp.dot(p.astype(bf16), vv.astype(bf16),
                        preferred_element_type=f32)                      # (H*N, d_s)
        attn = jnp.zeros((N, d_s), f32)
        for h in range(n_heads):      # lane-mask each head block back into place
            attn = attn + o_all[h * N:(h + 1) * N, :] * head_masks[h]
        s = s + jnp.dot(attn.astype(bf16), wo_ref[l],
                        preferred_element_type=f32) + bo_ref[l]

    s_out_ref[...] = s
    v_out_ref[...] = v


# --------------------------------------------------------------------------
# Wrapper: host-side packing + single pallas_call
# --------------------------------------------------------------------------

def cross_modal_ssl_forward(params, x, edge_vec, edge_len, edge_index,
                            mask_atom, mask_edge, missing_key, n_heads):
    N, d_s = x.shape
    E = edge_vec.shape[0]
    num_layers = len(params["gnn"])
    num_rbf = params["rbf_w"].shape[0]
    assert d_s % n_heads == 0, "d_scalar must be divisible by num_attn_heads"

    f32 = jnp.float32
    bf16 = jnp.bfloat16
    src = edge_index[0].astype(jnp.int32)
    dst = edge_index[1].astype(jnp.int32)

    # Random unit vectors for isolated nodes (matches torch.randn + normalize);
    # generated on host with jax.random and passed in as a plain input.
    rnd = jax.random.normal(missing_key, (N, 3), dtype=f32)
    rnd = rnd / jnp.maximum(jnp.linalg.norm(rnd, axis=-1, keepdims=True), 1e-8)

    def stack(group, field, dtype=f32):
        return jnp.stack([lp[field] for lp in params[group]], axis=0).astype(dtype)

    # Per-layer weight stacks: bf16 for the MXU inputs, biases/gates stay f32.
    w_msg = stack("gnn", "w_msg", bf16)                            # (L, d, d) bf16
    b_msg = stack("gnn", "b_msg")[:, None, :]                      # (L, 1, d) f32
    w_upd = stack("gnn", "w_upd", bf16)
    b_upd = stack("gnn", "b_upd")[:, None, :]
    w_gate = jnp.transpose(stack("gnn", "w_gate"), (0, 2, 1))      # (L, 1, d) f32
    b_gate = stack("gnn", "b_gate")[:, :, None]                    # (L, 1, 1) f32
    wq = stack("sa", "wq", bf16); bq = stack("sa", "bq")[:, None, :]
    wk = stack("sa", "wk", bf16); bk = stack("sa", "bk")[:, None, :]
    wv = stack("sa", "wv", bf16); bv = stack("sa", "bv")[:, None, :]
    wo = stack("sa", "wo", bf16); bo = stack("sa", "bo")[:, None, :]

    operands = (
        x.astype(f32), edge_vec.astype(f32), edge_len.astype(f32).reshape(E, 1),
        src.reshape(E, 1), dst.reshape(E, 1),
        mask_atom.astype(f32).reshape(N, 1), mask_edge.astype(f32).reshape(E, 1),
        rnd,
        params["embed_w"].astype(bf16), params["embed_b"].reshape(1, d_s).astype(f32),
        jnp.asarray(params["rbf_gamma"], f32).reshape(1, 1),
        params["rbf_centers"].reshape(1, num_rbf).astype(f32),
        params["rbf_w"].astype(bf16), params["rbf_b"].reshape(1, d_s).astype(f32),
        params["s_mask"].reshape(1, d_s).astype(f32),
        params["e_mask"].reshape(1, d_s).astype(f32),
        params["v_mask"].reshape(1, 3).astype(f32),
        w_msg, b_msg, w_upd, b_upd, w_gate, b_gate,
        wq, wk, wv, wo, bq, bk, bv, bo,
    )

    # Advisory cost hints for XLA's scheduler (all tiny at these sizes).
    HN = n_heads * N
    flops = 2 * (N * d_s * d_s + E * num_rbf * d_s + 2 * E * N + 3 * E * N) \
        + 2 * num_layers * (2 * E * N * d_s + E * d_s * d_s + E * N * d_s
                            + N * d_s * d_s + 3 * E * N + 4 * N * d_s * d_s
                            + 2 * HN * N * d_s)
    transcendentals = E * num_rbf + E + 2 * N + num_layers * (
        E * d_s + N * d_s + E + HN * N + HN)
    bytes_accessed = sum(int(o.size) * o.dtype.itemsize for o in operands) \
        + 4 * (N * d_s + N * 3)
    cost = pl.CostEstimate(flops=int(flops), transcendentals=int(transcendentals),
                           bytes_accessed=int(bytes_accessed))

    vmem_spec = pl.BlockSpec(memory_space=pltpu.MemorySpace.VMEM)
    s_out, v_out = pl.pallas_call(
        functools.partial(_fused_forward_kernel,
                          n_heads=n_heads, num_layers=num_layers),
        out_shape=(jax.ShapeDtypeStruct((N, d_s), f32),
                   jax.ShapeDtypeStruct((N, 3), f32)),
        in_specs=[vmem_spec] * len(operands),
        out_specs=(vmem_spec, vmem_spec),
        compiler_params=pltpu.CompilerParams(vmem_limit_bytes=32 * 1024 * 1024),
        cost_estimate=cost,
    )(*operands)
    return s_out, v_out


# --------------------------------------------------------------------------
# Deterministic parameter init (shapes from the module's __init__)
# --------------------------------------------------------------------------

def init_params(key, d_s, num_rbf, num_layers, cutoff):
    ks = iter(jax.random.split(key, 8 + 8 * num_layers))

    def lin(din, dout):
        w = jax.random.normal(next(ks), (din, dout), jnp.float32) * (din ** -0.5)
        return w, jnp.zeros((dout,), jnp.float32)

    params = {}
    params["embed_w"], params["embed_b"] = lin(d_s, d_s)            # AtomEncoder
    params["rbf_centers"] = jnp.linspace(0.0, cutoff, num_rbf, dtype=jnp.float32)
    params["rbf_gamma"] = float((num_rbf / cutoff) ** 2)
    params["rbf_w"], params["rbf_b"] = lin(num_rbf, d_s)            # RBFEncoder
    params["s_mask"] = jax.random.normal(next(ks), (d_s,), jnp.float32) * d_s ** -0.5
    params["e_mask"] = jax.random.normal(next(ks), (d_s,), jnp.float32) * d_s ** -0.5
    vm = jax.random.normal(next(ks), (3,), jnp.float32)
    params["v_mask"] = vm / jnp.linalg.norm(vm)                      # unit_sphere_

    gnn, sa = [], []
    for _ in range(num_layers):
        g = {}
        g["w_msg"], g["b_msg"] = lin(d_s, d_s)
        g["w_upd"], g["b_upd"] = lin(d_s, d_s)
        g["w_gate"] = jax.random.normal(next(ks), (d_s, 1), jnp.float32) * d_s ** -0.5
        g["b_gate"] = jnp.zeros((1,), jnp.float32)
        gnn.append(g)
        a = {}
        a["wq"], a["bq"] = lin(d_s, d_s)
        a["wk"], a["bk"] = lin(d_s, d_s)
        a["wv"], a["bv"] = lin(d_s, d_s)
        a["wo"], a["bo"] = lin(d_s, d_s)
        sa.append(a)
    params["gnn"] = gnn
    params["sa"] = sa
    return params


# --------------------------------------------------------------------------
# main
# --------------------------------------------------------------------------

if __name__ == "__main__":
    N, E = 16, 32                 # nodes, edges
    d_s, num_rbf = 32, 16
    num_layers, n_heads = 2, 4
    cutoff = 5.0

    key = jax.random.PRNGKey(0)
    kx, kvec, kidx, kmask, kparams, kmiss = jax.random.split(key, 6)

    x = jax.random.normal(kx, (N, d_s), jnp.float32)
    edge_vec = jax.random.normal(kvec, (E, 3), jnp.float32)
    edge_len = jnp.linalg.norm(edge_vec, axis=-1)
    edge_index = jax.random.randint(kidx, (2, E), 0, N)
    mask_atom = jax.random.bernoulli(kmask, 0.2, (N,))
    mask_edge = jax.random.bernoulli(jax.random.fold_in(kmask, 1), 0.2, (E,))

    params = init_params(kparams, d_s, num_rbf, num_layers, cutoff)

    fwd = jax.jit(cross_modal_ssl_forward, static_argnames=("n_heads",))
    s_out, v_out = fwd(params, x, edge_vec, edge_len, edge_index,
                       mask_atom, mask_edge, kmiss, n_heads=n_heads)
    jax.block_until_ready((s_out, v_out))

    assert s_out.shape == (N, d_s) and v_out.shape == (N, 3)
    assert bool(jnp.all(jnp.isfinite(s_out))) and bool(jnp.all(jnp.isfinite(v_out)))
    print("KERNEL_OK")
</pallas_src>

<mosaic_0001>
module attributes {stable_mosaic.version = 11 : i64} {
  func.func @_fused_forward_kernel(%arg0: memref<16x32xf32, #tpu.memory_space<vmem>>, %arg1: memref<32x3xf32, #tpu.memory_space<vmem>>, %arg2: memref<32x1xf32, #tpu.memory_space<vmem>>, %arg3: memref<32x1xi32, #tpu.memory_space<vmem>>, %arg4: memref<32x1xi32, #tpu.memory_space<vmem>>, %arg5: memref<16x1xf32, #tpu.memory_space<vmem>>, %arg6: memref<32x1xf32, #tpu.memory_space<vmem>>, %arg7: memref<16x3xf32, #tpu.memory_space<vmem>>, %arg8: memref<32x32xbf16, #tpu.memory_space<vmem>>, %arg9: memref<1x32xf32, #tpu.memory_space<vmem>>, %arg10: memref<1x1xf32, #tpu.memory_space<vmem>>, %arg11: memref<1x16xf32, #tpu.memory_space<vmem>>, %arg12: memref<16x32xbf16, #tpu.memory_space<vmem>>, %arg13: memref<1x32xf32, #tpu.memory_space<vmem>>, %arg14: memref<1x32xf32, #tpu.memory_space<vmem>>, %arg15: memref<1x32xf32, #tpu.memory_space<vmem>>, %arg16: memref<1x3xf32, #tpu.memory_space<vmem>>, %arg17: memref<2x32x32xbf16, #tpu.memory_space<vmem>>, %arg18: memref<2x1x32xf32, #tpu.memory_space<vmem>>, %arg19: memref<2x32x32xbf16, #tpu.memory_space<vmem>>, %arg20: memref<2x1x32xf32, #tpu.memory_space<vmem>>, %arg21: memref<2x1x32xf32, #tpu.memory_space<vmem>>, %arg22: memref<2x1x1xf32, #tpu.memory_space<vmem>>, %arg23: memref<2x32x32xbf16, #tpu.memory_space<vmem>>, %arg24: memref<2x32x32xbf16, #tpu.memory_space<vmem>>, %arg25: memref<2x32x32xbf16, #tpu.memory_space<vmem>>, %arg26: memref<2x32x32xbf16, #tpu.memory_space<vmem>>, %arg27: memref<2x1x32xf32, #tpu.memory_space<vmem>>, %arg28: memref<2x1x32xf32, #tpu.memory_space<vmem>>, %arg29: memref<2x1x32xf32, #tpu.memory_space<vmem>>, %arg30: memref<2x1x32xf32, #tpu.memory_space<vmem>>, %arg31: memref<16x32xf32, #tpu.memory_space<vmem>>, %arg32: memref<16x3xf32, #tpu.memory_space<vmem>>) attributes {dimension_semantics = [], scalar_prefetch = 0 : i64, scratch_operands = 0 : i64, tpu.core_type = #tpu.core_type<tc>} {
    %c0 = arith.constant 0 : index
    %c0_0 = arith.constant 0 : index
    %0 = vector.load %arg0[%c0, %c0_0] : memref<16x32xf32, #tpu.memory_space<vmem>>, vector<16x32xf32>
    %1 = arith.truncf %0 : vector<16x32xf32> to vector<16x32xbf16>
    %c0_1 = arith.constant 0 : index
    %c0_2 = arith.constant 0 : index
    %2 = vector.load %arg8[%c0_1, %c0_2] : memref<32x32xbf16, #tpu.memory_space<vmem>>, vector<32x32xbf16>
    %cst = arith.constant dense<0.000000e+00> : vector<16x32xf32>
    %3 = tpu.matmul %1, %2, %cst {dimension_numbers = #tpu.dot_dimension_numbers<[1], [0], [0], [1], [0, 0, 1, 1], [], []>} : vector<16x32xbf16>, vector<32x32xbf16>, vector<16x32xf32> -> vector<16x32xf32>
    %c0_3 = arith.constant 0 : index
    %c0_4 = arith.constant 0 : index
    %4 = vector.load %arg9[%c0_3, %c0_4] : memref<1x32xf32, #tpu.memory_space<vmem>>, vector<1x32xf32>
    %5 = vector.broadcast %4 : vector<1x32xf32> to vector<16x32xf32>
    %6 = arith.addf %3, %5 : vector<16x32xf32>
    %c0_5 = arith.constant 0 : index
    %c0_6 = arith.constant 0 : index
    %7 = vector.load %arg2[%c0_5, %c0_6] : memref<32x1xf32, #tpu.memory_space<vmem>>, vector<32x1xf32>
    %c0_7 = arith.constant 0 : index
    %c0_8 = arith.constant 0 : index
    %8 = vector.load %arg10[%c0_7, %c0_8] : memref<1x1xf32, #tpu.memory_space<vmem>>, vector<1x1xf32>
    %cst_9 = arith.constant 0.000000e+00 : f32
    %9 = vector.broadcast %cst_9 : f32 to vector<1x1xf32>
    %10 = arith.subf %9, %8 : vector<1x1xf32>
    %c0_10 = arith.constant 0 : index
    %c0_11 = arith.constant 0 : index
    %11 = vector.load %arg11[%c0_10, %c0_11] : memref<1x16xf32, #tpu.memory_space<vmem>>, vector<1x16xf32>
    %12 = vector.broadcast %7 : vector<32x1xf32> to vector<32x16xf32>
    %13 = vector.broadcast %11 : vector<1x16xf32> to vector<32x16xf32>
    %14 = arith.subf %12, %13 : vector<32x16xf32>
    %15 = arith.mulf %14, %14 : vector<32x16xf32>
    %16 = vector.broadcast %10 : vector<1x1xf32> to vector<32x16xf32>
    %17 = arith.mulf %16, %15 : vector<32x16xf32>
    %18 = math.exp %17 : vector<32x16xf32>
    %19 = arith.truncf %18 : vector<32x16xf32> to vector<32x16xbf16>
    %c0_12 = arith.constant 0 : index
    %c0_13 = arith.constant 0 : index
    %20 = vector.load %arg12[%c0_12, %c0_13] : memref<16x32xbf16, #tpu.memory_space<vmem>>, vector<16x32xbf16>
    %cst_14 = arith.constant dense<0.000000e+00> : vector<32x32xf32>
    %21 = tpu.matmul %19, %20, %cst_14 {dimension_numbers = #tpu.dot_dimension_numbers<[1], [0], [0], [1], [0, 0, 1, 1], [], []>} : vector<32x16xbf16>, vector<16x32xbf16>, vector<32x32xf32> -> vector<32x32xf32>
    %c0_15 = arith.constant 0 : index
    %c0_16 = arith.constant 0 : index
    %22 = vector.load %arg13[%c0_15, %c0_16] : memref<1x32xf32, #tpu.memory_space<vmem>>, vector<1x32xf32>
    %23 = vector.broadcast %22 : vector<1x32xf32> to vector<32x32xf32>
    %24 = arith.addf %21, %23 : vector<32x32xf32>
    %25 = arith.negf %24 : vector<32x32xf32>
    %26 = math.exp %25 : vector<32x32xf32>
    %cst_17 = arith.constant 1.000000e+00 : f32
    %27 = vector.broadcast %cst_17 : f32 to vector<32x32xf32>
    %28 = arith.addf %27, %26 : vector<32x32xf32>
    %29 = arith.divf %27, %28 : vector<32x32xf32>
    %30 = arith.mulf %24, %29 : vector<32x32xf32>
    %c0_18 = arith.constant 0 : index
    %c0_19 = arith.constant 0 : index
    %31 = vector.load %arg1[%c0_18, %c0_19] : memref<32x3xf32, #tpu.memory_space<vmem>>, vector<32x3xf32>
    %cst_20 = arith.constant 9.99999993E-9 : f32
    %32 = vector.broadcast %cst_20 : f32 to vector<32x1xf32>
    %33 = arith.addf %7, %32 : vector<32x1xf32>
    %34 = tpu.reciprocal %33 {approx = true} : vector<32x1xf32> -> vector<32x1xf32>
    %35 = vector.broadcast %34 : vector<32x1xf32> to vector<32x3xf32>
    %36 = arith.mulf %31, %35 : vector<32x3xf32>
    %c0_21 = arith.constant 0 : index
    %c0_22 = arith.constant 0 : index
    %37 = vector.load %arg5[%c0_21, %c0_22] : memref<16x1xf32, #tpu.memory_space<vmem>>, vector<16x1xf32>
    %cst_23 = arith.constant 5.000000e-01 : f32
    %38 = vector.broadcast %cst_23 : f32 to vector<16x1xf32>
    %39 = arith.cmpf ogt, %37, %38 : vector<16x1xf32>
    %c0_24 = arith.constant 0 : index
    %c0_25 = arith.constant 0 : index
    %40 = vector.load %arg6[%c0_24, %c0_25] : memref<32x1xf32, #tpu.memory_space<vmem>>, vector<32x1xf32>
    %cst_26 = arith.constant 5.000000e-01 : f32
    %41 = vector.broadcast %cst_26 : f32 to vector<32x1xf32>
    %42 = arith.cmpf ogt, %40, %41 : vector<32x1xf32>
    %c0_27 = arith.constant 0 : index
    %c0_28 = arith.constant 0 : index
    %43 = vector.load %arg14[%c0_27, %c0_28] : memref<1x32xf32, #tpu.memory_space<vmem>>, vector<1x32xf32>
    %44 = vector.shape_cast %39 : vector<16x1xi1> to vector<16x1xi1>
    %45 = vector.broadcast %44 : vector<16x1xi1> to vector<16x32xi1>
    %46 = vector.shape_cast %43 : vector<1x32xf32> to vector<1x32xf32>
    %47 = vector.broadcast %46 : vector<1x32xf32> to vector<16x32xf32>
    %48 = arith.select %45, %47, %6 : vector<16x32xi1>, vector<16x32xf32>
    %c0_29 = arith.constant 0 : index
    %c0_30 = arith.constant 0 : index
    %49 = vector.load %arg15[%c0_29, %c0_30] : memref<1x32xf32, #tpu.memory_space<vmem>>, vector<1x32xf32>
    %50 = vector.shape_cast %42 : vector<32x1xi1> to vector<32x1xi1>
    %51 = vector.broadcast %50 : vector<32x1xi1> to vector<32x32xi1>
    %52 = vector.shape_cast %49 : vector<1x32xf32> to vector<1x32xf32>
    %53 = vector.broadcast %52 : vector<1x32xf32> to vector<32x32xf32>
    %54 = arith.select %51, %53, %30 : vector<32x32xi1>, vector<32x32xf32>
    %c0_31 = arith.constant 0 : index
    %c0_32 = arith.constant 0 : index
    %55 = vector.load %arg16[%c0_31, %c0_32] : memref<1x3xf32, #tpu.memory_space<vmem>>, vector<1x3xf32>
    %56 = vector.shape_cast %42 : vector<32x1xi1> to vector<32x1xi1>
    %57 = vector.broadcast %56 : vector<32x1xi1> to vector<32x3xi1>
    %58 = vector.shape_cast %55 : vector<1x3xf32> to vector<1x3xf32>
    %59 = vector.broadcast %58 : vector<1x3xf32> to vector<32x3xf32>
    %60 = arith.select %57, %59, %36 : vector<32x3xi1>, vector<32x3xf32>
    %61 = tpu.iota {dimensions = array<i32: 1>} : vector<32x16xi32>
    %c0_33 = arith.constant 0 : index
    %c0_34 = arith.constant 0 : index
    %62 = vector.load %arg3[%c0_33, %c0_34] : memref<32x1xi32, #tpu.memory_space<vmem>>, vector<32x1xi32>
    %63 = vector.broadcast %62 : vector<32x1xi32> to vector<32x16xi32>
    %64 = arith.cmpi eq, %61, %63 : vector<32x16xi32>
    %65 = arith.extui %64 : vector<32x16xi1> to vector<32x16xi32>
    %66 = arith.sitofp %65 : vector<32x16xi32> to vector<32x16xf32>
    %67 = arith.truncf %66 : vector<32x16xf32> to vector<32x16xbf16>
    %c0_35 = arith.constant 0 : index
    %c0_36 = arith.constant 0 : index
    %68 = vector.load %arg4[%c0_35, %c0_36] : memref<32x1xi32, #tpu.memory_space<vmem>>, vector<32x1xi32>
    %69 = vector.broadcast %68 : vector<32x1xi32> to vector<32x16xi32>
    %70 = arith.cmpi eq, %61, %69 : vector<32x16xi32>
    %71 = arith.extui %70 : vector<32x16xi1> to vector<32x16xi32>
    %72 = arith.sitofp %71 : vector<32x16xi32> to vector<32x16xf32>
    %73 = arith.truncf %72 : vector<32x16xf32> to vector<32x16xbf16>
    %cst_37 = arith.constant 1.000000e+00 : bf16
    %74 = vector.broadcast %cst_37 : bf16 to vector<32x1xbf16>
    %cst_38 = arith.constant dense<0.000000e+00> : vector<16x1xf32>
    %75 = tpu.matmul %67, %74, %cst_38 {dimension_numbers = #tpu.dot_dimension_numbers<[0], [0], [1], [1], [0, 1, 1, 1], [], []>} : vector<32x16xbf16>, vector<32x1xbf16>, vector<16x1xf32> -> vector<16x1xf32>
    %cst_39 = arith.constant dense<0.000000e+00> : vector<16x1xf32>
    %76 = tpu.matmul %73, %74, %cst_39 {dimension_numbers = #tpu.dot_dimension_numbers<[0], [0], [1], [1], [0, 1, 1, 1], [], []>} : vector<32x16xbf16>, vector<32x1xbf16>, vector<16x1xf32> -> vector<16x1xf32>
    %cst_40 = arith.constant 1.000000e+00 : f32
    %77 = vector.broadcast %cst_40 : f32 to vector<16x1xf32>
    %78 = arith.maximumf %75, %77 : vector<16x1xf32>
    %79 = tpu.reciprocal %78 {approx = true} : vector<16x1xf32> -> vector<16x1xf32>
    %cst_41 = arith.constant 1.000000e+00 : f32
    %80 = vector.broadcast %cst_41 : f32 to vector<16x1xf32>
    %81 = arith.maximumf %76, %80 : vector<16x1xf32>
    %82 = tpu.reciprocal %81 {approx = true} : vector<16x1xf32> -> vector<16x1xf32>
    %83 = arith.truncf %60 : vector<32x3xf32> to vector<32x3xbf16>
    %cst_42 = arith.constant dense<0.000000e+00> : vector<16x3xf32>
    %84 = tpu.matmul %67, %83, %cst_42 {dimension_numbers = #tpu.dot_dimension_numbers<[0], [0], [1], [1], [0, 1, 1, 1], [], []>} : vector<32x16xbf16>, vector<32x3xbf16>, vector<16x3xf32> -> vector<16x3xf32>
    %85 = vector.broadcast %79 : vector<16x1xf32> to vector<16x3xf32>
    %86 = arith.mulf %84, %85 : vector<16x3xf32>
    %cst_43 = arith.constant 0.000000e+00 : f32
    %87 = vector.broadcast %cst_43 : f32 to vector<16x1xf32>
    %88 = arith.cmpf oeq, %75, %87 : vector<16x1xf32>
    %c0_44 = arith.constant 0 : index
    %c0_45 = arith.constant 0 : index
    %89 = vector.load %arg7[%c0_44, %c0_45] : memref<16x3xf32, #tpu.memory_space<vmem>>, vector<16x3xf32>
    %90 = vector.shape_cast %88 : vector<16x1xi1> to vector<16x1xi1>
    %91 = vector.broadcast %90 : vector<16x1xi1> to vector<16x3xi1>
    %92 = arith.select %91, %89, %86 : vector<16x3xi1>, vector<16x3xf32>
    %93 = tpu.iota {dimensions = array<i32: 1>} : vector<1x32xi32>
    %c0_i32 = arith.constant 0 : i32
    %94 = vector.broadcast %c0_i32 : i32 to vector<1x32xi32>
    %95 = arith.cmpi sge, %93, %94 : vector<1x32xi32>
    %c8_i32 = arith.constant 8 : i32
    %96 = vector.broadcast %c8_i32 : i32 to vector<1x32xi32>
    %97 = arith.cmpi slt, %93, %96 : vector<1x32xi32>
    %98 = arith.andi %95, %97 : vector<1x32xi1>
    %99 = arith.extui %98 : vector<1x32xi1> to vector<1x32xi32>
    %100 = arith.sitofp %99 : vector<1x32xi32> to vector<1x32xf32>
    %c8_i32_46 = arith.constant 8 : i32
    %101 = vector.broadcast %c8_i32_46 : i32 to vector<1x32xi32>
    %102 = arith.cmpi sge, %93, %101 : vector<1x32xi32>
    %c16_i32 = arith.constant 16 : i32
    %103 = vector.broadcast %c16_i32 : i32 to vector<1x32xi32>
    %104 = arith.cmpi slt, %93, %103 : vector<1x32xi32>
    %105 = arith.andi %102, %104 : vector<1x32xi1>
    %106 = arith.extui %105 : vector<1x32xi1> to vector<1x32xi32>
    %107 = arith.sitofp %106 : vector<1x32xi32> to vector<1x32xf32>
    %c16_i32_47 = arith.constant 16 : i32
    %108 = vector.broadcast %c16_i32_47 : i32 to vector<1x32xi32>
    %109 = arith.cmpi sge, %93, %108 : vector<1x32xi32>
    %c24_i32 = arith.constant 24 : i32
    %110 = vector.broadcast %c24_i32 : i32 to vector<1x32xi32>
    %111 = arith.cmpi slt, %93, %110 : vector<1x32xi32>
    %112 = arith.andi %109, %111 : vector<1x32xi1>
    %113 = arith.extui %112 : vector<1x32xi1> to vector<1x32xi32>
    %114 = arith.sitofp %113 : vector<1x32xi32> to vector<1x32xf32>
    %c24_i32_48 = arith.constant 24 : i32
    %115 = vector.broadcast %c24_i32_48 : i32 to vector<1x32xi32>
    %116 = arith.cmpi sge, %93, %115 : vector<1x32xi32>
    %c32_i32 = arith.constant 32 : i32
    %117 = vector.broadcast %c32_i32 : i32 to vector<1x32xi32>
    %118 = arith.cmpi slt, %93, %117 : vector<1x32xi32>
    %119 = arith.andi %116, %118 : vector<1x32xi1>
    %120 = arith.extui %119 : vector<1x32xi1> to vector<1x32xi32>
    %121 = arith.sitofp %120 : vector<1x32xi32> to vector<1x32xf32>
    %122 = arith.truncf %48 : vector<16x32xf32> to vector<16x32xbf16>
    %cst_49 = arith.constant dense<0.000000e+00> : vector<32x32xf32>
    %123 = tpu.matmul %67, %122, %cst_49 {dimension_numbers = #tpu.dot_dimension_numbers<[1], [0], [0], [1], [0, 0, 1, 1], [], []>} : vector<32x16xbf16>, vector<16x32xbf16>, vector<32x32xf32> -> vector<32x32xf32>
    %cst_50 = arith.constant dense<0.000000e+00> : vector<32x32xf32>
    %124 = tpu.matmul %73, %122, %cst_50 {dimension_numbers = #tpu.dot_dimension_numbers<[1], [0], [0], [1], [0, 0, 1, 1], [], []>} : vector<32x16xbf16>, vector<16x32xbf16>, vector<32x32xf32> -> vector<32x32xf32>
    %125 = arith.addf %123, %124 : vector<32x32xf32>
    %126 = arith.addf %125, %54 : vector<32x32xf32>
    %127 = arith.truncf %126 : vector<32x32xf32> to vector<32x32xbf16>
    %c0_51 = arith.constant 0 : index
    %c0_52 = arith.constant 0 : index
    %c0_53 = arith.constant 0 : index
    %128 = vector.load %arg17[%c0_51, %c0_52, %c0_53] : memref<2x32x32xbf16, #tpu.memory_space<vmem>>, vector<1x32x32xbf16>
    %129 = vector.shape_cast %128 : vector<1x32x32xbf16> to vector<32x32xbf16>
    %cst_54 = arith.constant dense<0.000000e+00> : vector<32x32xf32>
    %130 = tpu.matmul %127, %129, %cst_54 {dimension_numbers = #tpu.dot_dimension_numbers<[1], [0], [0], [1], [0, 0, 1, 1], [], []>} : vector<32x32xbf16>, vector<32x32xbf16>, vector<32x32xf32> -> vector<32x32xf32>
    %c0_55 = arith.constant 0 : index
    %c0_56 = arith.constant 0 : index
    %c0_57 = arith.constant 0 : index
    %131 = vector.load %arg18[%c0_55, %c0_56, %c0_57] : memref<2x1x32xf32, #tpu.memory_space<vmem>>, vector<1x1x32xf32>
    %132 = vector.shape_cast %131 : vector<1x1x32xf32> to vector<1x32xf32>
    %133 = vector.broadcast %132 : vector<1x32xf32> to vector<32x32xf32>
    %134 = arith.addf %130, %133 : vector<32x32xf32>
    %135 = arith.negf %134 : vector<32x32xf32>
    %136 = math.exp %135 : vector<32x32xf32>
    %cst_58 = arith.constant 1.000000e+00 : f32
    %137 = vector.broadcast %cst_58 : f32 to vector<32x32xf32>
    %138 = arith.addf %137, %136 : vector<32x32xf32>
    %139 = arith.divf %137, %138 : vector<32x32xf32>
    %140 = arith.mulf %134, %139 : vector<32x32xf32>
    %141 = arith.truncf %140 : vector<32x32xf32> to vector<32x32xbf16>
    %cst_59 = arith.constant dense<0.000000e+00> : vector<16x32xf32>
    %142 = tpu.matmul %73, %141, %cst_59 {dimension_numbers = #tpu.dot_dimension_numbers<[0], [0], [1], [1], [0, 1, 1, 1], [], []>} : vector<32x16xbf16>, vector<32x32xbf16>, vector<16x32xf32> -> vector<16x32xf32>
    %143 = vector.broadcast %82 : vector<16x1xf32> to vector<16x32xf32>
    %144 = arith.mulf %142, %143 : vector<16x32xf32>
    %145 = arith.truncf %144 : vector<16x32xf32> to vector<16x32xbf16>
    %c0_60 = arith.constant 0 : index
    %c0_61 = arith.constant 0 : index
    %c0_62 = arith.constant 0 : index
    %146 = vector.load %arg19[%c0_60, %c0_61, %c0_62] : memref<2x32x32xbf16, #tpu.memory_space<vmem>>, vector<1x32x32xbf16>
    %147 = vector.shape_cast %146 : vector<1x32x32xbf16> to vector<32x32xbf16>
    %cst_63 = arith.constant dense<0.000000e+00> : vector<16x32xf32>
    %148 = tpu.matmul %145, %147, %cst_63 {dimension_numbers = #tpu.dot_dimension_numbers<[1], [0], [0], [1], [0, 0, 1, 1], [], []>} : vector<16x32xbf16>, vector<32x32xbf16>, vector<16x32xf32> -> vector<16x32xf32>
    %c0_64 = arith.constant 0 : index
    %c0_65 = arith.constant 0 : index
    %c0_66 = arith.constant 0 : index
    %149 = vector.load %arg20[%c0_64, %c0_65, %c0_66] : memref<2x1x32xf32, #tpu.memory_space<vmem>>, vector<1x1x32xf32>
    %150 = vector.shape_cast %149 : vector<1x1x32xf32> to vector<1x32xf32>
    %151 = vector.broadcast %150 : vector<1x32xf32> to vector<16x32xf32>
    %152 = arith.addf %148, %151 : vector<16x32xf32>
    %153 = arith.negf %152 : vector<16x32xf32>
    %154 = math.exp %153 : vector<16x32xf32>
    %cst_67 = arith.constant 1.000000e+00 : f32
    %155 = vector.broadcast %cst_67 : f32 to vector<16x32xf32>
    %156 = arith.addf %155, %154 : vector<16x32xf32>
    %157 = arith.divf %155, %156 : vector<16x32xf32>
    %158 = arith.mulf %152, %157 : vector<16x32xf32>
    %159 = arith.addf %48, %158 : vector<16x32xf32>
    %c0_68 = arith.constant 0 : index
    %c0_69 = arith.constant 0 : index
    %c0_70 = arith.constant 0 : index
    %160 = vector.load %arg21[%c0_68, %c0_69, %c0_70] : memref<2x1x32xf32, #tpu.memory_space<vmem>>, vector<1x1x32xf32>
    %161 = vector.shape_cast %160 : vector<1x1x32xf32> to vector<1x32xf32>
    %162 = vector.broadcast %161 : vector<1x32xf32> to vector<32x32xf32>
    %163 = arith.mulf %140, %162 : vector<32x32xf32>
    %cst_71 = arith.constant dense<0.000000e+00> : vector<32xf32>
    %164 = vector.multi_reduction <add>, %163, %cst_71 [1] : vector<32x32xf32> to vector<32xf32>
    %165 = vector.shape_cast %164 : vector<32xf32> to vector<32x1xf32>
    %c0_72 = arith.constant 0 : index
    %c0_73 = arith.constant 0 : index
    %c0_74 = arith.constant 0 : index
    %166 = vector.load %arg22[%c0_72, %c0_73, %c0_74] : memref<2x1x1xf32, #tpu.memory_space<vmem>>, vector<1x1x1xf32>
    %167 = vector.shape_cast %166 : vector<1x1x1xf32> to vector<1x1xf32>
    %168 = vector.broadcast %167 : vector<1x1xf32> to vector<32x1xf32>
    %169 = arith.addf %165, %168 : vector<32x1xf32>
    %170 = arith.negf %169 : vector<32x1xf32>
    %171 = math.exp %170 : vector<32x1xf32>
    %cst_75 = arith.constant 1.000000e+00 : f32
    %172 = vector.broadcast %cst_75 : f32 to vector<32x1xf32>
    %173 = arith.addf %172, %171 : vector<32x1xf32>
    %174 = arith.divf %172, %173 : vector<32x1xf32>
    %175 = vector.broadcast %174 : vector<32x1xf32> to vector<32x3xf32>
    %176 = arith.mulf %175, %60 : vector<32x3xf32>
    %177 = arith.truncf %176 : vector<32x3xf32> to vector<32x3xbf16>
    %cst_76 = arith.constant dense<0.000000e+00> : vector<16x3xf32>
    %178 = tpu.matmul %73, %177, %cst_76 {dimension_numbers = #tpu.dot_dimension_numbers<[0], [0], [1], [1], [0, 1, 1, 1], [], []>} : vector<32x16xbf16>, vector<32x3xbf16>, vector<16x3xf32> -> vector<16x3xf32>
    %179 = vector.broadcast %82 : vector<16x1xf32> to vector<16x3xf32>
    %180 = arith.mulf %178, %179 : vector<16x3xf32>
    %181 = arith.addf %92, %180 : vector<16x3xf32>
    %182 = arith.truncf %159 : vector<16x32xf32> to vector<16x32xbf16>
    %c0_77 = arith.constant 0 : index
    %c0_78 = arith.constant 0 : index
    %c0_79 = arith.constant 0 : index
    %183 = vector.load %arg23[%c0_77, %c0_78, %c0_79] : memref<2x32x32xbf16, #tpu.memory_space<vmem>>, vector<1x32x32xbf16>
    %184 = vector.shape_cast %183 : vector<1x32x32xbf16> to vector<32x32xbf16>
    %cst_80 = arith.constant dense<0.000000e+00> : vector<16x32xf32>
    %185 = tpu.matmul %182, %184, %cst_80 {dimension_numbers = #tpu.dot_dimension_numbers<[1], [0], [0], [1], [0, 0, 1, 1], [], []>} : vector<16x32xbf16>, vector<32x32xbf16>, vector<16x32xf32> -> vector<16x32xf32>
    %c0_81 = arith.constant 0 : index
    %c0_82 = arith.constant 0 : index
    %c0_83 = arith.constant 0 : index
    %186 = vector.load %arg27[%c0_81, %c0_82, %c0_83] : memref<2x1x32xf32, #tpu.memory_space<vmem>>, vector<1x1x32xf32>
    %187 = vector.shape_cast %186 : vector<1x1x32xf32> to vector<1x32xf32>
    %188 = vector.broadcast %187 : vector<1x32xf32> to vector<16x32xf32>
    %189 = arith.addf %185, %188 : vector<16x32xf32>
    %c0_84 = arith.constant 0 : index
    %c0_85 = arith.constant 0 : index
    %c0_86 = arith.constant 0 : index
    %190 = vector.load %arg24[%c0_84, %c0_85, %c0_86] : memref<2x32x32xbf16, #tpu.memory_space<vmem>>, vector<1x32x32xbf16>
    %191 = vector.shape_cast %190 : vector<1x32x32xbf16> to vector<32x32xbf16>
    %cst_87 = arith.constant dense<0.000000e+00> : vector<16x32xf32>
    %192 = tpu.matmul %182, %191, %cst_87 {dimension_numbers = #tpu.dot_dimension_numbers<[1], [0], [0], [1], [0, 0, 1, 1], [], []>} : vector<16x32xbf16>, vector<32x32xbf16>, vector<16x32xf32> -> vector<16x32xf32>
    %c0_88 = arith.constant 0 : index
    %c0_89 = arith.constant 0 : index
    %c0_90 = arith.constant 0 : index
    %193 = vector.load %arg28[%c0_88, %c0_89, %c0_90] : memref<2x1x32xf32, #tpu.memory_space<vmem>>, vector<1x1x32xf32>
    %194 = vector.shape_cast %193 : vector<1x1x32xf32> to vector<1x32xf32>
    %195 = vector.broadcast %194 : vector<1x32xf32> to vector<16x32xf32>
    %196 = arith.addf %192, %195 : vector<16x32xf32>
    %c0_91 = arith.constant 0 : index
    %c0_92 = arith.constant 0 : index
    %c0_93 = arith.constant 0 : index
    %197 = vector.load %arg25[%c0_91, %c0_92, %c0_93] : memref<2x32x32xbf16, #tpu.memory_space<vmem>>, vector<1x32x32xbf16>
    %198 = vector.shape_cast %197 : vector<1x32x32xbf16> to vector<32x32xbf16>
    %cst_94 = arith.constant dense<0.000000e+00> : vector<16x32xf32>
    %199 = tpu.matmul %182, %198, %cst_94 {dimension_numbers = #tpu.dot_dimension_numbers<[1], [0], [0], [1], [0, 0, 1, 1], [], []>} : vector<16x32xbf16>, vector<32x32xbf16>, vector<16x32xf32> -> vector<16x32xf32>
    %c0_95 = arith.constant 0 : index
    %c0_96 = arith.constant 0 : index
    %c0_97 = arith.constant 0 : index
    %200 = vector.load %arg29[%c0_95, %c0_96, %c0_97] : memref<2x1x32xf32, #tpu.memory_space<vmem>>, vector<1x1x32xf32>
    %201 = vector.shape_cast %200 : vector<1x1x32xf32> to vector<1x32xf32>
    %202 = vector.broadcast %201 : vector<1x32xf32> to vector<16x32xf32>
    %203 = arith.addf %199, %202 : vector<16x32xf32>
    %204 = vector.broadcast %100 : vector<1x32xf32> to vector<16x32xf32>
    %205 = arith.mulf %189, %204 : vector<16x32xf32>
    %206 = vector.broadcast %107 : vector<1x32xf32> to vector<16x32xf32>
    %207 = arith.mulf %189, %206 : vector<16x32xf32>
    %208 = vector.broadcast %114 : vector<1x32xf32> to vector<16x32xf32>
    %209 = arith.mulf %189, %208 : vector<16x32xf32>
    %210 = vector.broadcast %121 : vector<1x32xf32> to vector<16x32xf32>
    %211 = arith.mulf %189, %210 : vector<16x32xf32>
    %212 = tpu.concatenate %205, %207, %209, %211 in 0 : vector<16x32xf32>, vector<16x32xf32>, vector<16x32xf32>, vector<16x32xf32> -> vector<64x32xf32>
    %213 = arith.truncf %212 : vector<64x32xf32> to vector<64x32xbf16>
    %214 = arith.truncf %196 : vector<16x32xf32> to vector<16x32xbf16>
    %cst_98 = arith.constant dense<0.000000e+00> : vector<64x16xf32>
    %215 = tpu.matmul %213, %214, %cst_98 {dimension_numbers = #tpu.dot_dimension_numbers<[1], [1], [0], [0], [0, 0, 1, 0], [], []>} : vector<64x32xbf16>, vector<16x32xbf16>, vector<64x16xf32> -> vector<64x16xf32>
    %cst_99 = arith.constant 0.353553385 : f32
    %216 = vector.broadcast %cst_99 : f32 to vector<64x16xf32>
    %217 = arith.mulf %215, %216 : vector<64x16xf32>
    %cst_100 = arith.constant dense<0xFF800000> : vector<64xf32>
    %218 = vector.multi_reduction <maximumf>, %217, %cst_100 [1] : vector<64x16xf32> to vector<64xf32>
    %219 = vector.shape_cast %218 : vector<64xf32> to vector<64x1xf32>
    %220 = vector.broadcast %219 : vector<64x1xf32> to vector<64x16xf32>
    %221 = arith.subf %217, %220 : vector<64x16xf32>
    %222 = math.exp %221 : vector<64x16xf32>
    %cst_101 = arith.constant dense<0.000000e+00> : vector<64xf32>
    %223 = vector.multi_reduction <add>, %222, %cst_101 [1] : vector<64x16xf32> to vector<64xf32>
    %224 = vector.shape_cast %223 : vector<64xf32> to vector<64x1xf32>
    %225 = tpu.reciprocal %224 {approx = true} : vector<64x1xf32> -> vector<64x1xf32>
    %226 = vector.broadcast %225 : vector<64x1xf32> to vector<64x16xf32>
    %227 = arith.mulf %222, %226 : vector<64x16xf32>
    %228 = arith.truncf %227 : vector<64x16xf32> to vector<64x16xbf16>
    %229 = arith.truncf %203 : vector<16x32xf32> to vector<16x32xbf16>
    %cst_102 = arith.constant dense<0.000000e+00> : vector<64x32xf32>
    %230 = tpu.matmul %228, %229, %cst_102 {dimension_numbers = #tpu.dot_dimension_numbers<[1], [0], [0], [1], [0, 0, 1, 1], [], []>} : vector<64x16xbf16>, vector<16x32xbf16>, vector<64x32xf32> -> vector<64x32xf32>
    %cst_103 = arith.constant 0.000000e+00 : f32
    %231 = vector.broadcast %cst_103 : f32 to vector<16x32xf32>
    %232 = vector.extract_strided_slice %230 {offsets = [0, 0], sizes = [16, 32], strides = [1, 1]} : vector<64x32xf32> to vector<16x32xf32>
    %233 = vector.broadcast %100 : vector<1x32xf32> to vector<16x32xf32>
    %234 = arith.mulf %232, %233 : vector<16x32xf32>
    %235 = arith.addf %231, %234 : vector<16x32xf32>
    %236 = vector.extract_strided_slice %230 {offsets = [16, 0], sizes = [16, 32], strides = [1, 1]} : vector<64x32xf32> to vector<16x32xf32>
    %237 = vector.broadcast %107 : vector<1x32xf32> to vector<16x32xf32>
    %238 = arith.mulf %236, %237 : vector<16x32xf32>
    %239 = arith.addf %235, %238 : vector<16x32xf32>
    %240 = vector.extract_strided_slice %230 {offsets = [32, 0], sizes = [16, 32], strides = [1, 1]} : vector<64x32xf32> to vector<16x32xf32>
    %241 = vector.broadcast %114 : vector<1x32xf32> to vector<16x32xf32>
    %242 = arith.mulf %240, %241 : vector<16x32xf32>
    %243 = arith.addf %239, %242 : vector<16x32xf32>
    %244 = vector.extract_strided_slice %230 {offsets = [48, 0], sizes = [16, 32], strides = [1, 1]} : vector<64x32xf32> to vector<16x32xf32>
    %245 = vector.broadcast %121 : vector<1x32xf32> to vector<16x32xf32>
    %246 = arith.mulf %244, %245 : vector<16x32xf32>
    %247 = arith.addf %243, %246 : vector<16x32xf32>
    %248 = arith.truncf %247 : vector<16x32xf32> to vector<16x32xbf16>
    %c0_104 = arith.constant 0 : index
    %c0_105 = arith.constant 0 : index
    %c0_106 = arith.constant 0 : index
    %249 = vector.load %arg26[%c0_104, %c0_105, %c0_106] : memref<2x32x32xbf16, #tpu.memory_space<vmem>>, vector<1x32x32xbf16>
    %250 = vector.shape_cast %249 : vector<1x32x32xbf16> to vector<32x32xbf16>
    %cst_107 = arith.constant dense<0.000000e+00> : vector<16x32xf32>
    %251 = tpu.matmul %248, %250, %cst_107 {dimension_numbers = #tpu.dot_dimension_numbers<[1], [0], [0], [1], [0, 0, 1, 1], [], []>} : vector<16x32xbf16>, vector<32x32xbf16>, vector<16x32xf32> -> vector<16x32xf32>
    %252 = arith.addf %159, %251 : vector<16x32xf32>
    %c0_108 = arith.constant 0 : index
    %c0_109 = arith.constant 0 : index
    %c0_110 = arith.constant 0 : index
    %253 = vector.load %arg30[%c0_108, %c0_109, %c0_110] : memref<2x1x32xf32, #tpu.memory_space<vmem>>, vector<1x1x32xf32>
    %254 = vector.shape_cast %253 : vector<1x1x32xf32> to vector<1x32xf32>
    %255 = vector.broadcast %254 : vector<1x32xf32> to vector<16x32xf32>
    %256 = arith.addf %252, %255 : vector<16x32xf32>
    %257 = arith.truncf %256 : vector<16x32xf32> to vector<16x32xbf16>
    %cst_111 = arith.constant dense<0.000000e+00> : vector<32x32xf32>
    %258 = tpu.matmul %67, %257, %cst_111 {dimension_numbers = #tpu.dot_dimension_numbers<[1], [0], [0], [1], [0, 0, 1, 1], [], []>} : vector<32x16xbf16>, vector<16x32xbf16>, vector<32x32xf32> -> vector<32x32xf32>
    %cst_112 = arith.constant dense<0.000000e+00> : vector<32x32xf32>
    %259 = tpu.matmul %73, %257, %cst_112 {dimension_numbers = #tpu.dot_dimension_numbers<[1], [0], [0], [1], [0, 0, 1, 1], [], []>} : vector<32x16xbf16>, vector<16x32xbf16>, vector<32x32xf32> -> vector<32x32xf32>
    %260 = arith.addf %258, %259 : vector<32x32xf32>
    %261 = arith.addf %260, %54 : vector<32x32xf32>
    %262 = arith.truncf %261 : vector<32x32xf32> to vector<32x32xbf16>
    %c1 = arith.constant 1 : index
    %c0_113 = arith.constant 0 : index
    %c0_114 = arith.constant 0 : index
    %263 = vector.load %arg17[%c1, %c0_113, %c0_114] : memref<2x32x32xbf16, #tpu.memory_space<vmem>>, vector<1x32x32xbf16>
    %264 = vector.shape_cast %263 : vector<1x32x32xbf16> to vector<32x32xbf16>
    %cst_115 = arith.constant dense<0.000000e+00> : vector<32x32xf32>
    %265 = tpu.matmul %262, %264, %cst_115 {dimension_numbers = #tpu.dot_dimension_numbers<[1], [0], [0], [1], [0, 0, 1, 1], [], []>} : vector<32x32xbf16>, vector<32x32xbf16>, vector<32x32xf32> -> vector<32x32xf32>
    %c1_116 = arith.constant 1 : index
    %c0_117 = arith.constant 0 : index
    %c0_118 = arith.constant 0 : index
    %266 = vector.load %arg18[%c1_116, %c0_117, %c0_118] : memref<2x1x32xf32, #tpu.memory_space<vmem>>, vector<1x1x32xf32>
    %267 = vector.shape_cast %266 : vector<1x1x32xf32> to vector<1x32xf32>
    %268 = vector.broadcast %267 : vector<1x32xf32> to vector<32x32xf32>
    %269 = arith.addf %265, %268 : vector<32x32xf32>
    %270 = arith.negf %269 : vector<32x32xf32>
    %271 = math.exp %270 : vector<32x32xf32>
    %cst_119 = arith.constant 1.000000e+00 : f32
    %272 = vector.broadcast %cst_119 : f32 to vector<32x32xf32>
    %273 = arith.addf %272, %271 : vector<32x32xf32>
    %274 = arith.divf %272, %273 : vector<32x32xf32>
    %275 = arith.mulf %269, %274 : vector<32x32xf32>
    %276 = arith.truncf %275 : vector<32x32xf32> to vector<32x32xbf16>
    %cst_120 = arith.constant dense<0.000000e+00> : vector<16x32xf32>
    %277 = tpu.matmul %73, %276, %cst_120 {dimension_numbers = #tpu.dot_dimension_numbers<[0], [0], [1], [1], [0, 1, 1, 1], [], []>} : vector<32x16xbf16>, vector<32x32xbf16>, vector<16x32xf32> -> vector<16x32xf32>
    %278 = vector.broadcast %82 : vector<16x1xf32> to vector<16x32xf32>
    %279 = arith.mulf %277, %278 : vector<16x32xf32>
    %280 = arith.truncf %279 : vector<16x32xf32> to vector<16x32xbf16>
    %c1_121 = arith.constant 1 : index
    %c0_122 = arith.constant 0 : index
    %c0_123 = arith.constant 0 : index
    %281 = vector.load %arg19[%c1_121, %c0_122, %c0_123] : memref<2x32x32xbf16, #tpu.memory_space<vmem>>, vector<1x32x32xbf16>
    %282 = vector.shape_cast %281 : vector<1x32x32xbf16> to vector<32x32xbf16>
    %cst_124 = arith.constant dense<0.000000e+00> : vector<16x32xf32>
    %283 = tpu.matmul %280, %282, %cst_124 {dimension_numbers = #tpu.dot_dimension_numbers<[1], [0], [0], [1], [0, 0, 1, 1], [], []>} : vector<16x32xbf16>, vector<32x32xbf16>, vector<16x32xf32> -> vector<16x32xf32>
    %c1_125 = arith.constant 1 : index
    %c0_126 = arith.constant 0 : index
    %c0_127 = arith.constant 0 : index
    %284 = vector.load %arg20[%c1_125, %c0_126, %c0_127] : memref<2x1x32xf32, #tpu.memory_space<vmem>>, vector<1x1x32xf32>
    %285 = vector.shape_cast %284 : vector<1x1x32xf32> to vector<1x32xf32>
    %286 = vector.broadcast %285 : vector<1x32xf32> to vector<16x32xf32>
    %287 = arith.addf %283, %286 : vector<16x32xf32>
    %288 = arith.negf %287 : vector<16x32xf32>
    %289 = math.exp %288 : vector<16x32xf32>
    %cst_128 = arith.constant 1.000000e+00 : f32
    %290 = vector.broadcast %cst_128 : f32 to vector<16x32xf32>
    %291 = arith.addf %290, %289 : vector<16x32xf32>
    %292 = arith.divf %290, %291 : vector<16x32xf32>
    %293 = arith.mulf %287, %292 : vector<16x32xf32>
    %294 = arith.addf %256, %293 : vector<16x32xf32>
    %c1_129 = arith.constant 1 : index
    %c0_130 = arith.constant 0 : index
    %c0_131 = arith.constant 0 : index
    %295 = vector.load %arg21[%c1_129, %c0_130, %c0_131] : memref<2x1x32xf32, #tpu.memory_space<vmem>>, vector<1x1x32xf32>
    %296 = vector.shape_cast %295 : vector<1x1x32xf32> to vector<1x32xf32>
    %297 = vector.broadcast %296 : vector<1x32xf32> to vector<32x32xf32>
    %298 = arith.mulf %275, %297 : vector<32x32xf32>
    %cst_132 = arith.constant dense<0.000000e+00> : vector<32xf32>
    %299 = vector.multi_reduction <add>, %298, %cst_132 [1] : vector<32x32xf32> to vector<32xf32>
    %300 = vector.shape_cast %299 : vector<32xf32> to vector<32x1xf32>
    %c1_133 = arith.constant 1 : index
    %c0_134 = arith.constant 0 : index
    %c0_135 = arith.constant 0 : index
    %301 = vector.load %arg22[%c1_133, %c0_134, %c0_135] : memref<2x1x1xf32, #tpu.memory_space<vmem>>, vector<1x1x1xf32>
    %302 = vector.shape_cast %301 : vector<1x1x1xf32> to vector<1x1xf32>
    %303 = vector.broadcast %302 : vector<1x1xf32> to vector<32x1xf32>
    %304 = arith.addf %300, %303 : vector<32x1xf32>
    %305 = arith.negf %304 : vector<32x1xf32>
    %306 = math.exp %305 : vector<32x1xf32>
    %cst_136 = arith.constant 1.000000e+00 : f32
    %307 = vector.broadcast %cst_136 : f32 to vector<32x1xf32>
    %308 = arith.addf %307, %306 : vector<32x1xf32>
    %309 = arith.divf %307, %308 : vector<32x1xf32>
    %310 = vector.broadcast %309 : vector<32x1xf32> to vector<32x3xf32>
    %311 = arith.mulf %310, %60 : vector<32x3xf32>
    %312 = arith.truncf %311 : vector<32x3xf32> to vector<32x3xbf16>
    %cst_137 = arith.constant dense<0.000000e+00> : vector<16x3xf32>
    %313 = tpu.matmul %73, %312, %cst_137 {dimension_numbers = #tpu.dot_dimension_numbers<[0], [0], [1], [1], [0, 1, 1, 1], [], []>} : vector<32x16xbf16>, vector<32x3xbf16>, vector<16x3xf32> -> vector<16x3xf32>
    %314 = vector.broadcast %82 : vector<16x1xf32> to vector<16x3xf32>
    %315 = arith.mulf %313, %314 : vector<16x3xf32>
    %316 = arith.addf %181, %315 : vector<16x3xf32>
    %317 = arith.truncf %294 : vector<16x32xf32> to vector<16x32xbf16>
    %c1_138 = arith.constant 1 : index
    %c0_139 = arith.constant 0 : index
    %c0_140 = arith.constant 0 : index
    %318 = vector.load %arg23[%c1_138, %c0_139, %c0_140] : memref<2x32x32xbf16, #tpu.memory_space<vmem>>, vector<1x32x32xbf16>
    %319 = vector.shape_cast %318 : vector<1x32x32xbf16> to vector<32x32xbf16>
    %cst_141 = arith.constant dense<0.000000e+00> : vector<16x32xf32>
    %320 = tpu.matmul %317, %319, %cst_141 {dimension_numbers = #tpu.dot_dimension_numbers<[1], [0], [0], [1], [0, 0, 1, 1], [], []>} : vector<16x32xbf16>, vector<32x32xbf16>, vector<16x32xf32> -> vector<16x32xf32>
    %c1_142 = arith.constant 1 : index
    %c0_143 = arith.constant 0 : index
    %c0_144 = arith.constant 0 : index
    %321 = vector.load %arg27[%c1_142, %c0_143, %c0_144] : memref<2x1x32xf32, #tpu.memory_space<vmem>>, vector<1x1x32xf32>
    %322 = vector.shape_cast %321 : vector<1x1x32xf32> to vector<1x32xf32>
    %323 = vector.broadcast %322 : vector<1x32xf32> to vector<16x32xf32>
    %324 = arith.addf %320, %323 : vector<16x32xf32>
    %c1_145 = arith.constant 1 : index
    %c0_146 = arith.constant 0 : index
    %c0_147 = arith.constant 0 : index
    %325 = vector.load %arg24[%c1_145, %c0_146, %c0_147] : memref<2x32x32xbf16, #tpu.memory_space<vmem>>, vector<1x32x32xbf16>
    %326 = vector.shape_cast %325 : vector<1x32x32xbf16> to vector<32x32xbf16>
    %cst_148 = arith.constant dense<0.000000e+00> : vector<16x32xf32>
    %327 = tpu.matmul %317, %326, %cst_148 {dimension_numbers = #tpu.dot_dimension_numbers<[1], [0], [0], [1], [0, 0, 1, 1], [], []>} : vector<16x32xbf16>, vector<32x32xbf16>, vector<16x32xf32> -> vector<16x32xf32>
    %c1_149 = arith.constant 1 : index
    %c0_150 = arith.constant 0 : index
    %c0_151 = arith.constant 0 : index
    %328 = vector.load %arg28[%c1_149, %c0_150, %c0_151] : memref<2x1x32xf32, #tpu.memory_space<vmem>>, vector<1x1x32xf32>
    %329 = vector.shape_cast %328 : vector<1x1x32xf32> to vector<1x32xf32>
    %330 = vector.broadcast %329 : vector<1x32xf32> to vector<16x32xf32>
    %331 = arith.addf %327, %330 : vector<16x32xf32>
    %c1_152 = arith.constant 1 : index
    %c0_153 = arith.constant 0 : index
    %c0_154 = arith.constant 0 : index
    %332 = vector.load %arg25[%c1_152, %c0_153, %c0_154] : memref<2x32x32xbf16, #tpu.memory_space<vmem>>, vector<1x32x32xbf16>
    %333 = vector.shape_cast %332 : vector<1x32x32xbf16> to vector<32x32xbf16>
    %cst_155 = arith.constant dense<0.000000e+00> : vector<16x32xf32>
    %334 = tpu.matmul %317, %333, %cst_155 {dimension_numbers = #tpu.dot_dimension_numbers<[1], [0], [0], [1], [0, 0, 1, 1], [], []>} : vector<16x32xbf16>, vector<32x32xbf16>, vector<16x32xf32> -> vector<16x32xf32>
    %c1_156 = arith.constant 1 : index
    %c0_157 = arith.constant 0 : index
    %c0_158 = arith.constant 0 : index
    %335 = vector.load %arg29[%c1_156, %c0_157, %c0_158] : memref<2x1x32xf32, #tpu.memory_space<vmem>>, vector<1x1x32xf32>
    %336 = vector.shape_cast %335 : vector<1x1x32xf32> to vector<1x32xf32>
    %337 = vector.broadcast %336 : vector<1x32xf32> to vector<16x32xf32>
    %338 = arith.addf %334, %337 : vector<16x32xf32>
    %339 = vector.broadcast %100 : vector<1x32xf32> to vector<16x32xf32>
    %340 = arith.mulf %324, %339 : vector<16x32xf32>
    %341 = vector.broadcast %107 : vector<1x32xf32> to vector<16x32xf32>
    %342 = arith.mulf %324, %341 : vector<16x32xf32>
    %343 = vector.broadcast %114 : vector<1x32xf32> to vector<16x32xf32>
    %344 = arith.mulf %324, %343 : vector<16x32xf32>
    %345 = vector.broadcast %121 : vector<1x32xf32> to vector<16x32xf32>
    %346 = arith.mulf %324, %345 : vector<16x32xf32>
    %347 = tpu.concatenate %340, %342, %344, %346 in 0 : vector<16x32xf32>, vector<16x32xf32>, vector<16x32xf32>, vector<16x32xf32> -> vector<64x32xf32>
    %348 = arith.truncf %347 : vector<64x32xf32> to vector<64x32xbf16>
    %349 = arith.truncf %331 : vector<16x32xf32> to vector<16x32xbf16>
    %cst_159 = arith.constant dense<0.000000e+00> : vector<64x16xf32>
    %350 = tpu.matmul %348, %349, %cst_159 {dimension_numbers = #tpu.dot_dimension_numbers<[1], [1], [0], [0], [0, 0, 1, 0], [], []>} : vector<64x32xbf16>, vector<16x32xbf16>, vector<64x16xf32> -> vector<64x16xf32>
    %cst_160 = arith.constant 0.353553385 : f32
    %351 = vector.broadcast %cst_160 : f32 to vector<64x16xf32>
    %352 = arith.mulf %350, %351 : vector<64x16xf32>
    %cst_161 = arith.constant dense<0xFF800000> : vector<64xf32>
    %353 = vector.multi_reduction <maximumf>, %352, %cst_161 [1] : vector<64x16xf32> to vector<64xf32>
    %354 = vector.shape_cast %353 : vector<64xf32> to vector<64x1xf32>
    %355 = vector.broadcast %354 : vector<64x1xf32> to vector<64x16xf32>
    %356 = arith.subf %352, %355 : vector<64x16xf32>
    %357 = math.exp %356 : vector<64x16xf32>
    %cst_162 = arith.constant dense<0.000000e+00> : vector<64xf32>
    %358 = vector.multi_reduction <add>, %357, %cst_162 [1] : vector<64x16xf32> to vector<64xf32>
    %359 = vector.shape_cast %358 : vector<64xf32> to vector<64x1xf32>
    %360 = tpu.reciprocal %359 {approx = true} : vector<64x1xf32> -> vector<64x1xf32>
    %361 = vector.broadcast %360 : vector<64x1xf32> to vector<64x16xf32>
    %362 = arith.mulf %357, %361 : vector<64x16xf32>
    %363 = arith.truncf %362 : vector<64x16xf32> to vector<64x16xbf16>
    %364 = arith.truncf %338 : vector<16x32xf32> to vector<16x32xbf16>
    %cst_163 = arith.constant dense<0.000000e+00> : vector<64x32xf32>
    %365 = tpu.matmul %363, %364, %cst_163 {dimension_numbers = #tpu.dot_dimension_numbers<[1], [0], [0], [1], [0, 0, 1, 1], [], []>} : vector<64x16xbf16>, vector<16x32xbf16>, vector<64x32xf32> -> vector<64x32xf32>
    %cst_164 = arith.constant 0.000000e+00 : f32
    %366 = vector.broadcast %cst_164 : f32 to vector<16x32xf32>
    %367 = vector.extract_strided_slice %365 {offsets = [0, 0], sizes = [16, 32], strides = [1, 1]} : vector<64x32xf32> to vector<16x32xf32>
    %368 = vector.broadcast %100 : vector<1x32xf32> to vector<16x32xf32>
    %369 = arith.mulf %367, %368 : vector<16x32xf32>
    %370 = arith.addf %366, %369 : vector<16x32xf32>
    %371 = vector.extract_strided_slice %365 {offsets = [16, 0], sizes = [16, 32], strides = [1, 1]} : vector<64x32xf32> to vector<16x32xf32>
    %372 = vector.broadcast %107 : vector<1x32xf32> to vector<16x32xf32>
    %373 = arith.mulf %371, %372 : vector<16x32xf32>
    %374 = arith.addf %370, %373 : vector<16x32xf32>
    %375 = vector.extract_strided_slice %365 {offsets = [32, 0], sizes = [16, 32], strides = [1, 1]} : vector<64x32xf32> to vector<16x32xf32>
    %376 = vector.broadcast %114 : vector<1x32xf32> to vector<16x32xf32>
    %377 = arith.mulf %375, %376 : vector<16x32xf32>
    %378 = arith.addf %374, %377 : vector<16x32xf32>
    %379 = vector.extract_strided_slice %365 {offsets = [48, 0], sizes = [16, 32], strides = [1, 1]} : vector<64x32xf32> to vector<16x32xf32>
    %380 = vector.broadcast %121 : vector<1x32xf32> to vector<16x32xf32>
    %381 = arith.mulf %379, %380 : vector<16x32xf32>
    %382 = arith.addf %378, %381 : vector<16x32xf32>
    %383 = arith.truncf %382 : vector<16x32xf32> to vector<16x32xbf16>
    %c1_165 = arith.constant 1 : index
    %c0_166 = arith.constant 0 : index
    %c0_167 = arith.constant 0 : index
    %384 = vector.load %arg26[%c1_165, %c0_166, %c0_167] : memref<2x32x32xbf16, #tpu.memory_space<vmem>>, vector<1x32x32xbf16>
    %385 = vector.shape_cast %384 : vector<1x32x32xbf16> to vector<32x32xbf16>
    %cst_168 = arith.constant dense<0.000000e+00> : vector<16x32xf32>
    %386 = tpu.matmul %383, %385, %cst_168 {dimension_numbers = #tpu.dot_dimension_numbers<[1], [0], [0], [1], [0, 0, 1, 1], [], []>} : vector<16x32xbf16>, vector<32x32xbf16>, vector<16x32xf32> -> vector<16x32xf32>
    %387 = arith.addf %294, %386 : vector<16x32xf32>
    %c1_169 = arith.constant 1 : index
    %c0_170 = arith.constant 0 : index
    %c0_171 = arith.constant 0 : index
    %388 = vector.load %arg30[%c1_169, %c0_170, %c0_171] : memref<2x1x32xf32, #tpu.memory_space<vmem>>, vector<1x1x32xf32>
    %389 = vector.shape_cast %388 : vector<1x1x32xf32> to vector<1x32xf32>
    %390 = vector.broadcast %389 : vector<1x32xf32> to vector<16x32xf32>
    %391 = arith.addf %387, %390 : vector<16x32xf32>
    %c0_172 = arith.constant 0 : index
    %c0_173 = arith.constant 0 : index
    %392 = vector.load %arg31[%c0_172, %c0_173] : memref<16x32xf32, #tpu.memory_space<vmem>>, vector<16x32xf32>
    tpu.vector_store %arg31[%c0_172, %c0_173], %391 {strides = array<i32>} : memref<16x32xf32, #tpu.memory_space<vmem>>, vector<16x32xf32>,
    %c0_174 = arith.constant 0 : index
    %c0_175 = arith.constant 0 : index
    %393 = vector.load %arg32[%c0_174, %c0_175] : memref<16x3xf32, #tpu.memory_space<vmem>>, vector<16x3xf32>
    tpu.vector_store %arg32[%c0_174, %c0_175], %316 {strides = array<i32>} : memref<16x3xf32, #tpu.memory_space<vmem>>, vector<16x3xf32>,
    return
  }
}

</mosaic_0001>

<llo_original>
// kernel: cross_modal_ssl_forward.1
$region0: #{cross_modal_ssl_forward.1}
  #allocation0 [shape = 'u32[]', space=smem, size = 0x4, offset = 0x4, fixed_abs, tag = 'smem constant byte address 0x4 - core index']
  #allocation1 [shape = 'u32[144,128]{1,0:T(1,128)}', space=vmem, size = 0x12000, scoped, tag = 'internal scratch']
  #allocation2 [shape = 'f32[1,1]{1,0:T(1,128)S(1)}', space=vmem, size = 0x200, scoped, tag = 'scoped memory for cross_modal_ssl_forward.1']
  %s0 = inlined_call_operand.smem [shape: u32[33], index: -1, kind: input, shape index: {}]
  %s1 = sld [smem:[%s0]]
  %s2 = scalar_lea.smem %s0, 1
  %s3 = sld [smem:[%s2]]
  %s4 = scalar_lea.smem %s0, 2
  %s5 = sld [smem:[%s4]]
  %s6 = scalar_lea.smem %s0, 3
  %s7 = sld [smem:[%s6]]
  %s8 = scalar_lea.smem %s0, 4
  %s9 = sld [smem:[%s8]]
  %s10 = scalar_lea.smem %s0, 5
  %s11 = sld [smem:[%s10]]
  %s12 = scalar_lea.smem %s0, 6
  %s13 = sld [smem:[%s12]]
  %s14 = scalar_lea.smem %s0, 7
  %s15 = sld [smem:[%s14]]
  %s16 = scalar_lea.smem %s0, 8
  %s17 = sld [smem:[%s16]]
  %s18 = scalar_lea.smem %s0, 9
  %s19 = sld [smem:[%s18]]
  %s20 = scalar_lea.smem %s0, 10
  %s21 = sld [smem:[%s20]]
  %s22 = scalar_lea.smem %s0, 11
  %s23 = sld [smem:[%s22]]
  %s24 = scalar_lea.smem %s0, 12
  %s25 = sld [smem:[%s24]]
  %s26 = scalar_lea.smem %s0, 13
  %s27 = sld [smem:[%s26]]
  %s28 = scalar_lea.smem %s0, 14
  %s29 = sld [smem:[%s28]]
  %s30 = scalar_lea.smem %s0, 15
  %s31 = sld [smem:[%s30]]
  %s32 = scalar_lea.smem %s0, 16
  %s33 = sld [smem:[%s32]]
  %s34 = scalar_lea.smem %s0, 17
  %s35 = sld [smem:[%s34]]
  %s36 = scalar_lea.smem %s0, 18
  %s37 = sld [smem:[%s36]]
  %s38 = scalar_lea.smem %s0, 19
  %s39 = sld [smem:[%s38]]
  %s40 = scalar_lea.smem %s0, 20
  %s41 = sld [smem:[%s40]]
  %s42 = scalar_lea.smem %s0, 21
  %s43 = sld [smem:[%s42]]
  %s44 = scalar_lea.smem %s0, 22
  %s45 = sld [smem:[%s44]]
  %s46 = scalar_lea.smem %s0, 23
  %s47 = sld [smem:[%s46]]
  %s48 = scalar_lea.smem %s0, 24
  %s49 = sld [smem:[%s48]]
  %s50 = scalar_lea.smem %s0, 25
  %s51 = sld [smem:[%s50]]
  %s52 = scalar_lea.smem %s0, 26
  %s53 = sld [smem:[%s52]]
  %s54 = scalar_lea.smem %s0, 27
  %s55 = sld [smem:[%s54]]
  %s56 = scalar_lea.smem %s0, 28
  %s57 = sld [smem:[%s56]]
  %s58 = scalar_lea.smem %s0, 29
  %s59 = sld [smem:[%s58]]
  %s60 = scalar_lea.smem %s0, 30
  %s61 = sld [smem:[%s60]]
  %s62 = scalar_lea.smem %s0, 31
  %s63 = sld [smem:[%s62]]
  %s64 = scalar_lea.smem %s0, 32
  %s65 = sld [smem:[%s64]]
  %66 = xla_tuple %s63, %s65
  %s67 = sld [smem:[#allocation0]]
  $region142: #{cross_modal_ssl_forward.1} parent=0
    _
  %s69 = ssub.s32 1, %s67
  %s70 = scalar_select 0, %s69, %s67
  %v71 = vstv %s21
  %72 = vst [vmem:[#allocation2] sm:$0x1] %v71
  $region1: #{cross_modal_ssl_forward.1} parent=0
    #allocation3 [shape = 'u8[8192]{0}', space=vmem, size = 0x2000, scoped, tag = 'output window, operand 0, single buffered']
    #allocation4 [shape = 's32[1]{0}', space=sflag, size = 0x4, scoped, tag = 'scoped memory for cross_modal_ssl_forward.1']
    %73 = vsyncpa [#allocation4], 0
    // Predicated region
    $region2: #{cross_modal_ssl_forward.1} parent=1 // pred_check
      _
    $region3: #{cross_modal_ssl_forward.1} parent=1 // pred_check_branch
      %75 = sbr.rel (0) target = $region5
    $region4: #{cross_modal_ssl_forward.1} parent=1 // pred_region
      _
    $region5: #{cross_modal_ssl_forward.1} parent=1 // pred_fallthru
      _
    // Predicated region
    $region6: #{cross_modal_ssl_forward.1} parent=1 // pred_check
      _
    $region7: #{cross_modal_ssl_forward.1} parent=1 // pred_check_branch
      %77 = sbr.rel (0) target = $region9
    $region8: #{cross_modal_ssl_forward.1} parent=1 // pred_region
      _
    $region9: #{cross_modal_ssl_forward.1} parent=1 // pred_fallthru
      _
    // Predicated region
    $region10: #{cross_modal_ssl_forward.1} parent=1 // pred_check
      _
    $region11: #{cross_modal_ssl_forward.1} parent=1 // pred_check_branch
      %79 = sbr.rel (0) target = $region13
    $region12: #{cross_modal_ssl_forward.1} parent=1 // pred_region
      _
    $region13: #{cross_modal_ssl_forward.1} parent=1 // pred_fallthru
      _
    // Predicated region
    $region14: #{cross_modal_ssl_forward.1} parent=1 // pred_check
      _
    $region15: #{cross_modal_ssl_forward.1} parent=1 // pred_check_branch
      %81 = sbr.rel (0) target = $region17
    $region16: #{cross_modal_ssl_forward.1} parent=1 // pred_region
      _
    $region17: #{cross_modal_ssl_forward.1} parent=1 // pred_fallthru
      _
    // Predicated region
    $region18: #{cross_modal_ssl_forward.1} parent=1 // pred_check
      _
    $region19: #{cross_modal_ssl_forward.1} parent=1 // pred_check_branch
      %83 = sbr.rel (0) target = $region21
    $region20: #{cross_modal_ssl_forward.1} parent=1 // pred_region
      _
    $region21: #{cross_modal_ssl_forward.1} parent=1 // pred_fallthru
      _
    // Predicated region
    $region22: #{cross_modal_ssl_forward.1} parent=1 // pred_check
      _
    $region23: #{cross_modal_ssl_forward.1} parent=1 // pred_check_branch
      %85 = sbr.rel (0) target = $region25
    $region24: #{cross_modal_ssl_forward.1} parent=1 // pred_region
      _
    $region25: #{cross_modal_ssl_forward.1} parent=1 // pred_fallthru
      _
    // Predicated region
    $region26: #{cross_modal_ssl_forward.1} parent=1 // pred_check
      _
    $region27: #{cross_modal_ssl_forward.1} parent=1 // pred_check_branch
      %87 = sbr.rel (0) target = $region29
    $region28: #{cross_modal_ssl_forward.1} parent=1 // pred_region
      _
    $region29: #{cross_modal_ssl_forward.1} parent=1 // pred_fallthru
      _
    // Predicated region
    $region30: #{cross_modal_ssl_forward.1} parent=1 // pred_check
      _
    $region31: #{cross_modal_ssl_forward.1} parent=1 // pred_check_branch
      %89 = sbr.rel (0) target = $region33
    $region32: #{cross_modal_ssl_forward.1} parent=1 // pred_region
      _
    $region33: #{cross_modal_ssl_forward.1} parent=1 // pred_fallthru
      _
    // Predicated region
    $region34: #{cross_modal_ssl_forward.1} parent=1 // pred_check
      _
    $region35: #{cross_modal_ssl_forward.1} parent=1 // pred_check_branch
      %91 = sbr.rel (0) target = $region37
    $region36: #{cross_modal_ssl_forward.1} parent=1 // pred_region
      _
    $region37: #{cross_modal_ssl_forward.1} parent=1 // pred_fallthru
      _
    // Predicated region
    $region38: #{cross_modal_ssl_forward.1} parent=1 // pred_check
      _
    $region39: #{cross_modal_ssl_forward.1} parent=1 // pred_check_branch
      %93 = sbr.rel (0) target = $region41
    $region40: #{cross_modal_ssl_forward.1} parent=1 // pred_region
      _
    $region41: #{cross_modal_ssl_forward.1} parent=1 // pred_fallthru
      _
    // Predicated region
    $region42: #{cross_modal_ssl_forward.1} parent=1 // pred_check
      _
    $region43: #{cross_modal_ssl_forward.1} parent=1 // pred_check_branch
      %95 = sbr.rel (0) target = $region45
    $region44: #{cross_modal_ssl_forward.1} parent=1 // pred_region
      _
    $region45: #{cross_modal_ssl_forward.1} parent=1 // pred_fallthru
      _
    // Predicated region
    $region46: #{cross_modal_ssl_forward.1} parent=1 // pred_check
      _
    $region47: #{cross_modal_ssl_forward.1} parent=1 // pred_check_branch
      %97 = sbr.rel (0) target = $region49
    $region48: #{cross_modal_ssl_forward.1} parent=1 // pred_region
      _
    $region49: #{cross_modal_ssl_forward.1} parent=1 // pred_fallthru
      _
    // Predicated region
    $region50: #{cross_modal_ssl_forward.1} parent=1 // pred_check
      _
    $region51: #{cross_modal_ssl_forward.1} parent=1 // pred_check_branch
      %99 = sbr.rel (0) target = $region53
    $region52: #{cross_modal_ssl_forward.1} parent=1 // pred_region
      _
    $region53: #{cross_modal_ssl_forward.1} parent=1 // pred_fallthru
      _
    // Predicated region
    $region54: #{cross_modal_ssl_forward.1} parent=1 // pred_check
      _
    $region55: #{cross_modal_ssl_forward.1} parent=1 // pred_check_branch
      %101 = sbr.rel (0) target = $region57
    $region56: #{cross_modal_ssl_forward.1} parent=1 // pred_region
      _
    $region57: #{cross_modal_ssl_forward.1} parent=1 // pred_fallthru
      _
    // Predicated region
    $region58: #{cross_modal_ssl_forward.1} parent=1 // pred_check
      _
    $region59: #{cross_modal_ssl_forward.1} parent=1 // pred_check_branch
      %103 = sbr.rel (0) target = $region61
    $region60: #{cross_modal_ssl_forward.1} parent=1 // pred_region
      _
    $region61: #{cross_modal_ssl_forward.1} parent=1 // pred_fallthru
      _
    // Predicated region
    $region62: #{cross_modal_ssl_forward.1} parent=1 // pred_check
      _
    $region63: #{cross_modal_ssl_forward.1} parent=1 // pred_check_branch
      %105 = sbr.rel (0) target = $region65
    $region64: #{cross_modal_ssl_forward.1} parent=1 // pred_region
      _
    $region65: #{cross_modal_ssl_forward.1} parent=1 // pred_fallthru
      _
    // Predicated region
    $region66: #{cross_modal_ssl_forward.1} parent=1 // pred_check
      _
    $region67: #{cross_modal_ssl_forward.1} parent=1 // pred_check_branch
      %107 = sbr.rel (0) target = $region69
    $region68: #{cross_modal_ssl_forward.1} parent=1 // pred_region
      _
    $region69: #{cross_modal_ssl_forward.1} parent=1 // pred_fallthru
      _
    // Predicated region
    $region70: #{cross_modal_ssl_forward.1} parent=1 // pred_check
      _
    $region71: #{cross_modal_ssl_forward.1} parent=1 // pred_check_branch
      %109 = sbr.rel (0) target = $region73
    $region72: #{cross_modal_ssl_forward.1} parent=1 // pred_region
      _
    $region73: #{cross_modal_ssl_forward.1} parent=1 // pred_fallthru
      _
    // Predicated region
    $region74: #{cross_modal_ssl_forward.1} parent=1 // pred_check
      _
    $region75: #{cross_modal_ssl_forward.1} parent=1 // pred_check_branch
      %111 = sbr.rel (0) target = $region77
    $region76: #{cross_modal_ssl_forward.1} parent=1 // pred_region
      _
    $region77: #{cross_modal_ssl_forward.1} parent=1 // pred_fallthru
      _
    // Predicated region
    $region78: #{cross_modal_ssl_forward.1} parent=1 // pred_check
      _
    $region79: #{cross_modal_ssl_forward.1} parent=1 // pred_check_branch
      %113 = sbr.rel (0) target = $region81
    $region80: #{cross_modal_ssl_forward.1} parent=1 // pred_region
      _
    $region81: #{cross_modal_ssl_forward.1} parent=1 // pred_fallthru
      _
    // Predicated region
    $region82: #{cross_modal_ssl_forward.1} parent=1 // pred_check
      _
    $region83: #{cross_modal_ssl_forward.1} parent=1 // pred_check_branch
      %115 = sbr.rel (0) target = $region85
    $region84: #{cross_modal_ssl_forward.1} parent=1 // pred_region
      _
    $region85: #{cross_modal_ssl_forward.1} parent=1 // pred_fallthru
      _
    // Predicated region
    $region86: #{cross_modal_ssl_forward.1} parent=1 // pred_check
      _
    $region87: #{cross_modal_ssl_forward.1} parent=1 // pred_check_branch
      %117 = sbr.rel (0) target = $region89
    $region88: #{cross_modal_ssl_forward.1} parent=1 // pred_region
      _
    $region89: #{cross_modal_ssl_forward.1} parent=1 // pred_fallthru
      _
    // Predicated region
    $region90: #{cross_modal_ssl_forward.1} parent=1 // pred_check
      _
    $region91: #{cross_modal_ssl_forward.1} parent=1 // pred_check_branch
      %119 = sbr.rel (0) target = $region93
    $region92: #{cross_modal_ssl_forward.1} parent=1 // pred_region
      _
    $region93: #{cross_modal_ssl_forward.1} parent=1 // pred_fallthru
      _
    // Predicated region
    $region94: #{cross_modal_ssl_forward.1} parent=1 // pred_check
      _
    $region95: #{cross_modal_ssl_forward.1} parent=1 // pred_check_branch
      %121 = sbr.rel (0) target = $region97
    $region96: #{cross_modal_ssl_forward.1} parent=1 // pred_region
      _
    $region97: #{cross_modal_ssl_forward.1} parent=1 // pred_fallthru
      _
    // Predicated region
    $region98: #{cross_modal_ssl_forward.1} parent=1 // pred_check
      _
    $region99: #{cross_modal_ssl_forward.1} parent=1 // pred_check_branch
      %123 = sbr.rel (0) target = $region101
    $region100: #{cross_modal_ssl_forward.1} parent=1 // pred_region
      _
    $region101: #{cross_modal_ssl_forward.1} parent=1 // pred_fallthru
      _
    // Predicated region
    $region102: #{cross_modal_ssl_forward.1} parent=1 // pred_check
      _
    $region103: #{cross_modal_ssl_forward.1} parent=1 // pred_check_branch
      %125 = sbr.rel (0) target = $region105
    $region104: #{cross_modal_ssl_forward.1} parent=1 // pred_region
      _
    $region105: #{cross_modal_ssl_forward.1} parent=1 // pred_fallthru
      _
    // Predicated region
    $region106: #{cross_modal_ssl_forward.1} parent=1 // pred_check
      _
    $region107: #{cross_modal_ssl_forward.1} parent=1 // pred_check_branch
      %127 = sbr.rel (0) target = $region109
    $region108: #{cross_modal_ssl_forward.1} parent=1 // pred_region
      _
    $region109: #{cross_modal_ssl_forward.1} parent=1 // pred_fallthru
      _
    // Predicated region
    $region110: #{cross_modal_ssl_forward.1} parent=1 // pred_check
      _
    $region111: #{cross_modal_ssl_forward.1} parent=1 // pred_check_branch
      %129 = sbr.rel (0) target = $region113
    $region112: #{cross_modal_ssl_forward.1} parent=1 // pred_region
      _
    $region113: #{cross_modal_ssl_forward.1} parent=1 // pred_fallthru
      _
    // Predicated region
    $region114: #{cross_modal_ssl_forward.1} parent=1 // pred_check
      _
    $region115: #{cross_modal_ssl_forward.1} parent=1 // pred_check_branch
      %131 = sbr.rel (0) target = $region117
    $region116: #{cross_modal_ssl_forward.1} parent=1 // pred_region
      _
    $region117: #{cross_modal_ssl_forward.1} parent=1 // pred_fallthru
      _
    // Predicated region
    $region118: #{cross_modal_ssl_forward.1} parent=1 // pred_check
      _
    $region119: #{cross_modal_ssl_forward.1} parent=1 // pred_check_branch
      %133 = sbr.rel (0) target = $region121
    $region120: #{cross_modal_ssl_forward.1} parent=1 // pred_region
      _
    $region121: #{cross_modal_ssl_forward.1} parent=1 // pred_fallthru
      _
    // Predicated region
    $region122: #{cross_modal_ssl_forward.1} parent=1 // pred_check
      _
    $region123: #{cross_modal_ssl_forward.1} parent=1 // pred_check_branch
      %135 = sbr.rel (0) target = $region125
    $region124: #{cross_modal_ssl_forward.1} parent=1 // pred_region
      _
    $region125: #{cross_modal_ssl_forward.1} parent=1 // pred_fallthru
      _
    %v138 = vld [vmem:[%s1] sm:$0xff]
    %v139 = vld [vmem:[%s1 + $0x8] sm:$0xff]
    %v140 = vpack.c.bf16 %v139, %v138
    %v141 = vld [vmem:[%s17] sm:$0xf]
    %v142 = vld [vmem:[%s17 + $0x4] sm:$0xf]
    %v143 = vld [vmem:[%s17 + $0x8] sm:$0xf]
    %v144 = vld [vmem:[%s17 + $0xc] sm:$0xf]
    %v145 = vld [vmem:[%s19] sm:$0x1]
    %v147 = vlaneseq
    %v148 = vshrl.u32 %v147, 7
    %v149 = vsub.s32 0, %v148
    %v150 = vrot.slane %v145, %v149
    %v156 = vunpack.c.l.b16 %v141
    %v157 = vunpack.c.l.b16 %v142
    %v158 = vunpack.c.l.b16 %v143
    %v159 = vunpack.c.l.b16 %v144
    %v160 = vpack.c.b16 %v157, %v156
    %v161 = vpack.c.b16 %v159, %v158
    %vm164 = vcmask 261120
    %v166 = vsel %vm164, %v140, 0
    %168 = vmatprep.subr.bf16.mxu0 0
    %169 = vmatpush1.bf16.msra.mxu0 %v160
    %170 = vmatprep.subr.bf16.mxu0 0
    %171 = vmatpush1.bf16.msra.mxu0 %v161
    %172 = vmatprep.subr.bf16.mxu0 0
    %173 = vmatpush1.bf16.msra.mxu0 0
    %174 = vmatprep.subr.bf16.mxu0 0
    %175 = vmatpush1.bf16.msra.mxu0 0
    %176 = vmatprep.subr.bf16.mxu0 0
    %177 = vmatpush1.bf16.msra.mxu0 0
    %178 = vmatprep.subr.bf16.mxu0 0
    %179 = vmatpush1.bf16.msra.mxu0 0
    %180 = vmatprep.subr.bf16.mxu0 0
    %181 = vmatpush1.bf16.msra.mxu0 0
    %182 = vmatprep.subr.bf16.mxu0 0
    %183 = vmatpush1.bf16.msra.mxu0 0
    %184 = vmatprep.subr.bf16.mxu0 0
    %185 = vmatpush1.bf16.msra.mxu0 0
    %186 = vmatprep.subr.bf16.mxu0 0
    %187 = vmatpush1.bf16.msra.mxu0 0
    %188 = vmatprep.subr.bf16.mxu0 0
    %189 = vmatpush1.bf16.msra.mxu0 0
    %190 = vmatprep.subr.bf16.mxu0 0
    %191 = vmatpush1.bf16.msra.mxu0 0
    %192 = vmatprep.subr.bf16.mxu0 0
    %193 = vmatpush1.bf16.msra.mxu0 0
    %194 = vmatprep.subr.bf16.mxu0 0
    %195 = vmatpush1.bf16.msra.mxu0 0
    %196 = vmatprep.subr.bf16.mxu0 0
    %197 = vmatpush1.bf16.msra.mxu0 0
    %198 = vmatprep.subr.bf16.mxu0 0
    %199 = vmatpush1.bf16.msra.mxu0 0
    %200 = vmatprep.mubr.bf16.mxu0 0
    %201 = vmatmul.mubr.bf16.gmra.mrb[0].mxu0 %v166
    %v202 = vpop.f32.mrb[0].mxu0
    %v203 = vadd.f32 %v150, %v202
    %v204 = vpop.f32.mrb[0].mxu0
    %v205 = vpop.f32.mrb[0].mxu0
    %v206 = vadd.f32 %v150, %v205
    %v207 = vpop.f32.mrb[0].mxu0
    %208 = vdwg.mxu0
    %v209 = vld [vmem:[%s5] sm:$0xff]
    %v210 = vld [vmem:[%s5 + $0x8] sm:$0xff]
    %v211 = vld [vmem:[%s5 + $0x10] sm:$0xff]
    %v212 = vld [vmem:[%s5 + $0x18] sm:$0xff]
    %v213 = vld [vmem:[#allocation2] sm:$0x1]
    %v214 = vsub.f32 0.0, %v213
    %v215 = vld [vmem:[%s23] sm:$0x1]
    %217 = vset.pattern.permute.xlu0 0
    %218 = vperm.xlu0 %217, %v209
    %v219 = vpop.permute.xlu0 %218
    %222 = vset.pattern.permute.xlu0 0
    %223 = vperm.xlu0 %222, %v210
    %v224 = vpop.permute.xlu0 %223
    %227 = vset.pattern.permute.xlu0 0
    %228 = vperm.xlu0 %227, %v211
    %v229 = vpop.permute.xlu0 %228
    %232 = vset.pattern.permute.xlu0 0
    %233 = vperm.xlu0 %232, %v212
    %v234 = vpop.permute.xlu0 %233
    %v237 = vlaneseq
    %v238 = vshrl.u32 %v237, 7
    %v239 = vsub.s32 0, %v238
    %v240 = vrot.slane %v215, %v239
    %v242 = vsub.f32 %v219, %v240
    %v243 = vsub.f32 %v224, %v240
    %v244 = vsub.f32 %v229, %v240
    %v245 = vsub.f32 %v234, %v240
    %v246 = vmul.f32 %v242, %v242
    %v247 = vmul.f32 %v243, %v243
    %v248 = vmul.f32 %v244, %v244
    %v249 = vmul.f32 %v245, %v245
    %v251 = vlaneseq
    %v252 = vshrl.u32 %v251, 7
    %v253 = vsub.s32 0, %v252
    %v254 = vrot.slane %v214, %v253
    %255 = vset.pattern.permute.xlu0 0
    %256 = vperm.xlu0 %255, %v254
    %v257 = vpop.permute.xlu0 %256
    %v259 = vmul.f32 %v257, %v246
    %v260 = vmul.f32 %v257, %v247
    %v261 = vmul.f32 %v257, %v248
    %v262 = vmul.f32 %v257, %v249
    %v263 = vmul.f32 %v259, 1.442695
    %v264 = vpow.pop %v263
    %v265 = vmul.f32 %v260, 1.442695
    %v266 = vpow.pop %v265
    %v267 = vmul.f32 %v261, 1.442695
    %v268 = vpow.pop %v267
    %v269 = vmul.f32 %v262, 1.442695
    %v270 = vpow.pop %v269
    %v271 = vpack.c.bf16 %v266, %v264
    %v272 = vpack.c.bf16 %v270, %v268
    %v273 = vld [vmem:[%s25] sm:$0xf]
    %v274 = vld [vmem:[%s25 + $0x4] sm:$0xf]
    %v275 = vld [vmem:[%s27] sm:$0x1]
    %v277 = vlaneseq
    %v278 = vshrl.u32 %v277, 7
    %v279 = vsub.s32 0, %v278
    %v280 = vrot.slane %v275, %v279
    %v284 = vunpack.c.l.b16 %v273
    %v285 = vunpack.c.l.b16 %v274
    %v286 = vpack.c.b16 %v285, %v284
    %vm288 = vcmask 130048
    %v290 = vsel %vm288, %v271, 0
    %v293 = vsel %vm288, %v272, 0
    %295 = vmatprep.subr.bf16.mxu0 0
    %296 = vmatpush1.bf16.msra.mxu0 %v286
    %297 = vmatprep.subr.bf16.mxu0 0
    %298 = vmatpush1.bf16.msra.mxu0 0
    %299 = vmatprep.subr.bf16.mxu0 0
    %300 = vmatpush1.bf16.msra.mxu0 0
    %301 = vmatprep.subr.bf16.mxu0 0
    %302 = vmatpush1.bf16.msra.mxu0 0
    %303 = vmatprep.subr.bf16.mxu0 0
    %304 = vmatpush1.bf16.msra.mxu0 0
    %305 = vmatprep.subr.bf16.mxu0 0
    %306 = vmatpush1.bf16.msra.mxu0 0
    %307 = vmatprep.subr.bf16.mxu0 0
    %308 = vmatpush1.bf16.msra.mxu0 0
    %309 = vmatprep.subr.bf16.mxu0 0
    %310 = vmatpush1.bf16.msra.mxu0 0
    %311 = vmatprep.subr.bf16.mxu0 0
    %312 = vmatpush1.bf16.msra.mxu0 0
    %313 = vmatprep.subr.bf16.mxu0 0
    %314 = vmatpush1.bf16.msra.mxu0 0
    %315 = vmatprep.subr.bf16.mxu0 0
    %316 = vmatpush1.bf16.msra.mxu0 0
    %317 = vmatprep.subr.bf16.mxu0 0
    %318 = vmatpush1.bf16.msra.mxu0 0
    %319 = vmatprep.subr.bf16.mxu0 0
    %320 = vmatpush1.bf16.msra.mxu0 0
    %321 = vmatprep.subr.bf16.mxu0 0
    %322 = vmatpush1.bf16.msra.mxu0 0
    %323 = vmatprep.subr.bf16.mxu0 0
    %324 = vmatpush1.bf16.msra.mxu0 0
    %325 = vmatprep.subr.bf16.mxu0 0
    %326 = vmatpush1.bf16.msra.mxu0 0
    %327 = vmatprep.mubr.bf16.mxu0 0
    %328 = vmatmul.mubr.bf16.gmra.mrb[0].mxu0 %v290
    %v329 = vpop.f32.mrb[0].mxu0
    %v330 = vadd.f32 %v280, %v329
    %v331 = vpop.f32.mrb[0].mxu0
    %v332 = vpop.f32.mrb[0].mxu0
    %v333 = vadd.f32 %v280, %v332
    %v334 = vpop.f32.mrb[0].mxu0
    %335 = vmatprep.mubr.bf16.mxu0 0
    %336 = vmatmul.mubr.bf16.gmra.mrb[0].mxu0 %v293
    %v337 = vpop.f32.mrb[0].mxu0
    %v338 = vadd.f32 %v280, %v337
    %v339 = vpop.f32.mrb[0].mxu0
    %v340 = vpop.f32.mrb[0].mxu0
    %v341 = vadd.f32 %v280, %v340
    %v342 = vpop.f32.mrb[0].mxu0
    %343 = vdwg.mxu0
    %v344 = vxor.u32 %v330, 2147483648
    %v345 = vxor.u32 %v333, 2147483648
    %v346 = vxor.u32 %v338, 2147483648
    %v347 = vxor.u32 %v341, 2147483648
    %v348 = vmul.f32 %v344, 1.442695
    %v349 = vpow.pop %v348
    %v350 = vmul.f32 %v345, 1.442695
    %v351 = vpow.pop %v350
    %v352 = vmul.f32 %v346, 1.442695
    %v353 = vpow.pop %v352
    %v354 = vmul.f32 %v347, 1.442695
    %v355 = vpow.pop %v354
    %v356 = vadd.f32 %v349, 1.0
    %v357 = vadd.f32 %v351, 1.0
    %v358 = vadd.f32 %v353, 1.0
    %v359 = vadd.f32 %v355, 1.0
    %v360 = vrcp.pop %v356
    %v361 = vmul.f32 1.0, %v360
    %v362 = vrcp.pop %v357
    %v363 = vmul.f32 1.0, %v362
    %v364 = vrcp.pop %v358
    %v365 = vmul.f32 1.0, %v364
    %v366 = vrcp.pop %v359
    %v367 = vmul.f32 1.0, %v366
    %v368 = vmul.f32 %v330, %v361
    %v369 = vmul.f32 %v333, %v363
    %v370 = vmul.f32 %v338, %v365
    %v371 = vmul.f32 %v341, %v367
    %v372 = vld [vmem:[%s3] sm:$0xff]
    %v373 = vld [vmem:[%s3 + $0x8] sm:$0xff]
    %v374 = vld [vmem:[%s3 + $0x10] sm:$0xff]
    %v375 = vld [vmem:[%s3 + $0x18] sm:$0xff]
    %v376 = vadd.f32 %v209, 1e-08
    %v377 = vadd.f32 %v210, 1e-08
    %v378 = vadd.f32 %v211, 1e-08
    %v379 = vadd.f32 %v212, 1e-08
    %v380 = vrcp.pop %v376
    %v381 = vrcp.pop %v377
    %v382 = vrcp.pop %v378
    %v383 = vrcp.pop %v379
    %385 = vset.pattern.permute.xlu0 0
    %386 = vperm.xlu0 %385, %v380
    %v387 = vpop.permute.xlu0 %386
    %390 = vset.pattern.permute.xlu0 0
    %391 = vperm.xlu0 %390, %v381
    %v392 = vpop.permute.xlu0 %391
    %395 = vset.pattern.permute.xlu0 0
    %396 = vperm.xlu0 %395, %v382
    %v397 = vpop.permute.xlu0 %396
    %400 = vset.pattern.permute.xlu0 0
    %401 = vperm.xlu0 %400, %v383
    %v402 = vpop.permute.xlu0 %401
    %v404 = vmul.f32 %v372, %v387
    %v405 = vmul.f32 %v373, %v392
    %v406 = vmul.f32 %v374, %v397
    %v407 = vmul.f32 %v375, %v402
    %v408 = vld [vmem:[%s11] sm:$0xff]
    %v409 = vld [vmem:[%s11 + $0x8] sm:$0xff]
    %vm410 = vcmp.gt.f32.partialorder %v408, 0.5
    %vm411 = vcmp.gt.f32.partialorder %v409, 0.5
    %v412 = vld [vmem:[%s13] sm:$0xff]
    %v413 = vld [vmem:[%s13 + $0x8] sm:$0xff]
    %v414 = vld [vmem:[%s13 + $0x10] sm:$0xff]
    %v415 = vld [vmem:[%s13 + $0x18] sm:$0xff]
    %vm416 = vcmp.gt.f32.partialorder %v412, 0.5
    %vm417 = vcmp.gt.f32.partialorder %v413, 0.5
    %vm418 = vcmp.gt.f32.partialorder %v414, 0.5
    %vm419 = vcmp.gt.f32.partialorder %v415, 0.5
    %v420 = vld [vmem:[%s29] sm:$0x1]
    %v421 = vsel %vm410, 1, 0
    %v422 = vsel %vm411, 1, 0
    %423 = vset.pattern.permute.xlu0 0
    %424 = vperm.xlu0 %423, %v421
    %v425 = vpop.permute.xlu0 %424
    %426 = vset.pattern.permute.xlu0 0
    %427 = vperm.xlu0 %426, %v422
    %v428 = vpop.permute.xlu0 %427
    %vm429 = vcmp.eq.s32.totalorder %v425, 1
    %vm430 = vcmp.eq.s32.totalorder %v428, 1
    %v432 = vlaneseq
    %v433 = vshrl.u32 %v432, 7
    %v434 = vsub.s32 0, %v433
    %v435 = vrot.slane %v420, %v434
    %v437 = vsel %vm429, %v435, %v203
    %v438 = vsel %vm430, %v435, %v206
    %v439 = vld [vmem:[%s31] sm:$0x1]
    %v440 = vsel %vm416, 1, 0
    %v441 = vsel %vm417, 1, 0
    %v442 = vsel %vm418, 1, 0
    %v443 = vsel %vm419, 1, 0
    %444 = vset.pattern.permute.xlu0 0
    %445 = vperm.xlu0 %444, %v440
    %v446 = vpop.permute.xlu0 %445
    %447 = vset.pattern.permute.xlu0 0
    %448 = vperm.xlu0 %447, %v441
    %v449 = vpop.permute.xlu0 %448
    %450 = vset.pattern.permute.xlu0 0
    %451 = vperm.xlu0 %450, %v442
    %v452 = vpop.permute.xlu0 %451
    %453 = vset.pattern.permute.xlu0 0
    %454 = vperm.xlu0 %453, %v443
    %v455 = vpop.permute.xlu0 %454
    %vm456 = vcmp.eq.s32.totalorder %v446, 1
    %vm457 = vcmp.eq.s32.totalorder %v449, 1
    %vm458 = vcmp.eq.s32.totalorder %v452, 1
    %vm459 = vcmp.eq.s32.totalorder %v455, 1
    %v461 = vlaneseq
    %v462 = vshrl.u32 %v461, 7
    %v463 = vsub.s32 0, %v462
    %v464 = vrot.slane %v439, %v463
    %v466 = vsel %vm456, %v464, %v368
    %v467 = vsel %vm457, %v464, %v369
    %v468 = vsel %vm458, %v464, %v370
    %v469 = vsel %vm459, %v464, %v371
    %v470 = vld [vmem:[%s33] sm:$0x1]
    %v472 = vlaneseq
    %v473 = vshrl.u32 %v472, 7
    %v474 = vsub.s32 0, %v473
    %v475 = vrot.slane %v470, %v474
    %v477 = vsel %vm456, %v475, %v404
    %v478 = vsel %vm457, %v475, %v405
    %v479 = vsel %vm458, %v475, %v406
    %v480 = vsel %vm459, %v475, %v407
    %v481 = vlaneseq
    %v482 = vand.u32 %v481, 127
    %v483 = vld [vmem:[%s7] sm:$0xff]
    %v484 = vld [vmem:[%s7 + $0x8] sm:$0xff]
    %v485 = vld [vmem:[%s7 + $0x10] sm:$0xff]
    %v486 = vld [vmem:[%s7 + $0x18] sm:$0xff]
    %487 = vset.pattern.permute.xlu0 0
    %488 = vperm.xlu0 %487, %v483
    %v489 = vpop.permute.xlu0 %488
    %490 = vset.pattern.permute.xlu0 0
    %491 = vperm.xlu0 %490, %v484
    %v492 = vpop.permute.xlu0 %491
    %493 = vset.pattern.permute.xlu0 0
    %494 = vperm.xlu0 %493, %v485
    %v495 = vpop.permute.xlu0 %494
    %496 = vset.pattern.permute.xlu0 0
    %497 = vperm.xlu0 %496, %v486
    %v498 = vpop.permute.xlu0 %497
    %vm499 = vcmp.eq.s32.totalorder %v482, %v489
    %vm500 = vcmp.eq.s32.totalorder %v482, %v492
    %vm501 = vcmp.eq.s32.totalorder %v482, %v495
    %vm502 = vcmp.eq.s32.totalorder %v482, %v498
    %v503 = vsel %vm499, 1, 0
    %v504 = vsel %vm500, 1, 0
    %v505 = vsel %vm501, 1, 0
    %v506 = vsel %vm502, 1, 0
    %v507 = vcvt.s32.f32 %v503
    %v508 = vcvt.s32.f32 %v504
    %v509 = vcvt.s32.f32 %v505
    %v510 = vcvt.s32.f32 %v506
    %v511 = vpack.c.bf16 %v508, %v507
    %v512 = vpack.c.bf16 %v510, %v509
    %v513 = vld [vmem:[%s9] sm:$0xff]
    %v514 = vld [vmem:[%s9 + $0x8] sm:$0xff]
    %v515 = vld [vmem:[%s9 + $0x10] sm:$0xff]
    %v516 = vld [vmem:[%s9 + $0x18] sm:$0xff]
    %517 = vset.pattern.permute.xlu0 0
    %518 = vperm.xlu0 %517, %v513
    %v519 = vpop.permute.xlu0 %518
    %520 = vset.pattern.permute.xlu0 0
    %521 = vperm.xlu0 %520, %v514
    %v522 = vpop.permute.xlu0 %521
    %523 = vset.pattern.permute.xlu0 0
    %524 = vperm.xlu0 %523, %v515
    %v525 = vpop.permute.xlu0 %524
    %526 = vset.pattern.permute.xlu0 0
    %527 = vperm.xlu0 %526, %v516
    %v528 = vpop.permute.xlu0 %527
    %vm529 = vcmp.eq.s32.totalorder %v482, %v519
    %vm530 = vcmp.eq.s32.totalorder %v482, %v522
    %vm531 = vcmp.eq.s32.totalorder %v482, %v525
    %vm532 = vcmp.eq.s32.totalorder %v482, %v528
    %v533 = vsel %vm529, 1, 0
    %v534 = vsel %vm530, 1, 0
    %v535 = vsel %vm531, 1, 0
    %v536 = vsel %vm532, 1, 0
    %v537 = vcvt.s32.f32 %v533
    %v538 = vcvt.s32.f32 %v534
    %v539 = vcvt.s32.f32 %v535
    %v540 = vcvt.s32.f32 %v536
    %v541 = vpack.c.bf16 %v538, %v537
    %v542 = vpack.c.bf16 %v540, %v539
    %543 = vxpose.xlu0.c.b16.start [1/8] %v511, 128
    %544 = vxpose.xlu0.c.b16.cont [2/8] %v512, 128
    %545 = vxpose.xlu0.c.b16.cont [3/8] 0, 128
    %546 = vxpose.xlu0.c.b16.cont [4/8] 0, 128
    %547 = vxpose.xlu0.c.b16.cont [5/8] 0, 128
    %548 = vxpose.xlu0.c.b16.cont [6/8] 0, 128
    %549 = vxpose.xlu0.c.b16.cont [7/8] 0, 128
    %550 = vxpose.xlu0.c.b16.end [8/8] 0, 128
    %v551 = vpop.trf.xlu0
    %v552 = vpop.trf.xlu0
    %v553 = vpop.trf.xlu0
    %v554 = vpop.trf.xlu0
    %v555 = vpop.trf.xlu0
    %v556 = vpop.trf.xlu0
    %v557 = vpop.trf.xlu0
    %v558 = vpop.trf.xlu0
    %v560 = vsel %vm164, %v551, 0
    %562 = vmatprep.subr.bf16.mxu0 0
    %563 = vmatpush1.bf16.msra.mxu0 1065369472
    %564 = vmatprep.subr.bf16.mxu0 0
    %565 = vmatpush1.bf16.msra.mxu0 1065369472
    %566 = vmatprep.subr.bf16.mxu0 0
    %567 = vmatpush1.bf16.msra.mxu0 0
    %568 = vmatprep.subr.bf16.mxu0 0
    %569 = vmatpush1.bf16.msra.mxu0 0
    %570 = vmatprep.subr.bf16.mxu0 0
    %571 = vmatpush1.bf16.msra.mxu0 0
    %572 = vmatprep.subr.bf16.mxu0 0
    %573 = vmatpush1.bf16.msra.mxu0 0
    %574 = vmatprep.subr.bf16.mxu0 0
    %575 = vmatpush1.bf16.msra.mxu0 0
    %576 = vmatprep.subr.bf16.mxu0 0
    %577 = vmatpush1.bf16.msra.mxu0 0
    %578 = vmatprep.subr.bf16.mxu0 0
    %579 = vmatpush1.bf16.msra.mxu0 0
    %580 = vmatprep.subr.bf16.mxu0 0
    %581 = vmatpush1.bf16.msra.mxu0 0
    %582 = vmatprep.subr.bf16.mxu0 0
    %583 = vmatpush1.bf16.msra.mxu0 0
    %584 = vmatprep.subr.bf16.mxu0 0
    %585 = vmatpush1.bf16.msra.mxu0 0
    %586 = vmatprep.subr.bf16.mxu0 0
    %587 = vmatpush1.bf16.msra.mxu0 0
    %588 = vmatprep.subr.bf16.mxu0 0
    %589 = vmatpush1.bf16.msra.mxu0 0
    %590 = vmatprep.subr.bf16.mxu0 0
    %591 = vmatpush1.bf16.msra.mxu0 0
    %592 = vmatprep.subr.bf16.mxu0 0
    %593 = vmatpush1.bf16.msra.mxu0 0
    %594 = vmatprep.mubr.bf16.mxu0 0
    %595 = vmatmul.mubr.bf16.gmra.mrb[0].mxu0 %v560
    %v596 = vpop.f32.mrb[0].mxu0
    %v597 = vadd.f32 0.0, %v596
    %v598 = vpop.f32.mrb[0].mxu0
    %v599 = vpop.f32.mrb[0].mxu0
    %v600 = vadd.f32 0.0, %v599
    %v601 = vpop.f32.mrb[0].mxu0
    %602 = vdwg.mxu0
    %603 = vxpose.xlu0.c.b16.start [1/8] %v541, 128
    %604 = vxpose.xlu0.c.b16.cont [2/8] %v542, 128
    %605 = vxpose.xlu0.c.b16.cont [3/8] 0, 128
    %606 = vxpose.xlu0.c.b16.cont [4/8] 0, 128
    %607 = vxpose.xlu0.c.b16.cont [5/8] 0, 128
    %608 = vxpose.xlu0.c.b16.cont [6/8] 0, 128
    %609 = vxpose.xlu0.c.b16.cont [7/8] 0, 128
    %610 = vxpose.xlu0.c.b16.end [8/8] 0, 128
    %v611 = vpop.trf.xlu0
    %v612 = vpop.trf.xlu0
    %v613 = vpop.trf.xlu0
    %v614 = vpop.trf.xlu0
    %v615 = vpop.trf.xlu0
    %v616 = vpop.trf.xlu0
    %v617 = vpop.trf.xlu0
    %v618 = vpop.trf.xlu0
    %v620 = vsel %vm164, %v611, 0
    %622 = vmatprep.subr.bf16.mxu0 0
    %623 = vmatpush1.bf16.msra.mxu0 1065369472
    %624 = vmatprep.subr.bf16.mxu0 0
    %625 = vmatpush1.bf16.msra.mxu0 1065369472
    %626 = vmatprep.subr.bf16.mxu0 0
    %627 = vmatpush1.bf16.msra.mxu0 0
    %628 = vmatprep.subr.bf16.mxu0 0
    %629 = vmatpush1.bf16.msra.mxu0 0
    %630 = vmatprep.subr.bf16.mxu0 0
    %631 = vmatpush1.bf16.msra.mxu0 0
    %632 = vmatprep.subr.bf16.mxu0 0
    %633 = vmatpush1.bf16.msra.mxu0 0
    %634 = vmatprep.subr.bf16.mxu0 0
    %635 = vmatpush1.bf16.msra.mxu0 0
    %636 = vmatprep.subr.bf16.mxu0 0
    %637 = vmatpush1.bf16.msra.mxu0 0
    %638 = vmatprep.subr.bf16.mxu0 0
    %639 = vmatpush1.bf16.msra.mxu0 0
    %640 = vmatprep.subr.bf16.mxu0 0
    %641 = vmatpush1.bf16.msra.mxu0 0
    %642 = vmatprep.subr.bf16.mxu0 0
    %643 = vmatpush1.bf16.msra.mxu0 0
    %644 = vmatprep.subr.bf16.mxu0 0
    %645 = vmatpush1.bf16.msra.mxu0 0
    %646 = vmatprep.subr.bf16.mxu0 0
    %647 = vmatpush1.bf16.msra.mxu0 0
    %648 = vmatprep.subr.bf16.mxu0 0
    %649 = vmatpush1.bf16.msra.mxu0 0
    %650 = vmatprep.subr.bf16.mxu0 0
    %651 = vmatpush1.bf16.msra.mxu0 0
    %652 = vmatprep.subr.bf16.mxu0 0
    %653 = vmatpush1.bf16.msra.mxu0 0
    %654 = vmatprep.mubr.bf16.mxu0 0
    %655 = vmatmul.mubr.bf16.gmra.mrb[0].mxu0 %v620
    %v656 = vpop.f32.mrb[0].mxu0
    %v657 = vadd.f32 0.0, %v656
    %v658 = vpop.f32.mrb[0].mxu0
    %v659 = vpop.f32.mrb[0].mxu0
    %v660 = vadd.f32 0.0, %v659
    %v661 = vpop.f32.mrb[0].mxu0
    %662 = vdwg.mxu0
    %v663 = vmax.f32 %v597, 1.0
    %v664 = vmax.f32 %v600, 1.0
    %v665 = vrcp.pop %v663
    %v666 = vrcp.pop %v664
    %v667 = vmax.f32 %v657, 1.0
    %v668 = vmax.f32 %v660, 1.0
    %v669 = vrcp.pop %v667
    %v670 = vrcp.pop %v668
    %v671 = vpack.c.bf16 %v478, %v477
    %v672 = vpack.c.bf16 %v480, %v479
    %673 = vmatprep.subr.bf16.mxu0 0
    %674 = vmatpush1.bf16.msra.mxu0 %v671
    %675 = vmatprep.subr.bf16.mxu0 0
    %676 = vmatpush1.bf16.msra.mxu0 %v672
    %677 = vmatprep.subr.bf16.mxu0 0
    %678 = vmatpush1.bf16.msra.mxu0 0
    %679 = vmatprep.subr.bf16.mxu0 0
    %680 = vmatpush1.bf16.msra.mxu0 0
    %681 = vmatprep.subr.bf16.mxu0 0
    %682 = vmatpush1.bf16.msra.mxu0 0
    %683 = vmatprep.subr.bf16.mxu0 0
    %684 = vmatpush1.bf16.msra.mxu0 0
    %685 = vmatprep.subr.bf16.mxu0 0
    %686 = vmatpush1.bf16.msra.mxu0 0
    %687 = vmatprep.subr.bf16.mxu0 0
    %688 = vmatpush1.bf16.msra.mxu0 0
    %689 = vmatprep.subr.bf16.mxu0 0
    %690 = vmatpush1.bf16.msra.mxu0 0
    %691 = vmatprep.subr.bf16.mxu0 0
    %692 = vmatpush1.bf16.msra.mxu0 0
    %693 = vmatprep.subr.bf16.mxu0 0
    %694 = vmatpush1.bf16.msra.mxu0 0
    %695 = vmatprep.subr.bf16.mxu0 0
    %696 = vmatpush1.bf16.msra.mxu0 0
    %697 = vmatprep.subr.bf16.mxu0 0
    %698 = vmatpush1.bf16.msra.mxu0 0
    %699 = vmatprep.subr.bf16.mxu0 0
    %700 = vmatpush1.bf16.msra.mxu0 0
    %701 = vmatprep.subr.bf16.mxu0 0
    %702 = vmatpush1.bf16.msra.mxu0 0
    %703 = vmatprep.subr.bf16.mxu0 0
    %704 = vmatpush1.bf16.msra.mxu0 0
    %705 = vmatprep.mubr.bf16.mxu0 0
    %706 = vmatmul.mubr.bf16.gmra.mrb[0].mxu0 %v560
    %v707 = vpop.f32.mrb[0].mxu0
    %v708 = vadd.f32 0.0, %v707
    %v709 = vpop.f32.mrb[0].mxu0
    %v710 = vpop.f32.mrb[0].mxu0
    %v711 = vadd.f32 0.0, %v710
    %v712 = vpop.f32.mrb[0].mxu0
    %713 = vdwg.mxu0
    %715 = vset.pattern.permute.xlu0 0
    %716 = vperm.xlu0 %715, %v665
    %v717 = vpop.permute.xlu0 %716
    %720 = vset.pattern.permute.xlu0 0
    %721 = vperm.xlu0 %720, %v666
    %v722 = vpop.permute.xlu0 %721
    %v724 = vmul.f32 %v708, %v717
    %v725 = vmul.f32 %v711, %v722
    %vm726 = vcmp.eq.f32.partialorder %v597, 0.0
    %vm727 = vcmp.eq.f32.partialorder %v600, 0.0
    %v728 = vld [vmem:[%s15] sm:$0xff]
    %v729 = vld [vmem:[%s15 + $0x8] sm:$0xff]
    %v730 = vsel %vm726, 1, 0
    %v731 = vsel %vm727, 1, 0
    %732 = vset.pattern.permute.xlu0 0
    %733 = vperm.xlu0 %732, %v730
    %v734 = vpop.permute.xlu0 %733
    %735 = vset.pattern.permute.xlu0 0
    %736 = vperm.xlu0 %735, %v731
    %v737 = vpop.permute.xlu0 %736
    %vm738 = vcmp.eq.s32.totalorder %v734, 1
    %vm739 = vcmp.eq.s32.totalorder %v737, 1
    %v740 = vsel %vm738, %v728, %v724
    %v741 = vsel %vm739, %v729, %v725
    %vm742 = vcmp.ge.s32.totalorder %v482, 0
    %vm743 = vcmp.lt.s32.totalorder %v482, 8
    %vm744 = vmand %vm742, %vm743
    %v745 = vsel %vm744, 1, 0
    %v746 = vcvt.s32.f32 %v745
    %vm747 = vcmp.ge.s32.totalorder %v482, 8
    %vm748 = vcmp.lt.s32.totalorder %v482, 16
    %vm749 = vmand %vm747, %vm748
    %v750 = vsel %vm749, 1, 0
    %v751 = vcvt.s32.f32 %v750
    %vm752 = vcmp.ge.s32.totalorder %v482, 16
    %vm753 = vcmp.lt.s32.totalorder %v482, 24
    %vm754 = vmand %vm752, %vm753
    %v755 = vsel %vm754, 1, 0
    %v756 = vcvt.s32.f32 %v755
    %vm757 = vcmp.ge.s32.totalorder %v482, 24
    %vm758 = vcmp.lt.s32.totalorder %v482, 32
    %vm759 = vmand %vm757, %vm758
    %v760 = vsel %vm759, 1, 0
    %v761 = vcvt.s32.f32 %v760
    %v762 = vpack.c.bf16 %v438, %v437
    %v764 = vsel %vm288, %v541, 0
    %v767 = vsel %vm288, %v542, 0
    %769 = vmatprep.subr.bf16.mxu0 0
    %770 = vmatpush1.bf16.msra.mxu0 %v762
    %771 = vmatprep.subr.bf16.mxu0 0
    %772 = vmatpush1.bf16.msra.mxu0 0
    %773 = vmatprep.subr.bf16.mxu0 0
    %774 = vmatpush1.bf16.msra.mxu0 0
    %775 = vmatprep.subr.bf16.mxu0 0
    %776 = vmatpush1.bf16.msra.mxu0 0
    %777 = vmatprep.subr.bf16.mxu0 0
    %778 = vmatpush1.bf16.msra.mxu0 0
    %779 = vmatprep.subr.bf16.mxu0 0
    %780 = vmatpush1.bf16.msra.mxu0 0
    %781 = vmatprep.subr.bf16.mxu0 0
    %782 = vmatpush1.bf16.msra.mxu0 0
    %783 = vmatprep.subr.bf16.mxu0 0
    %784 = vmatpush1.bf16.msra.mxu0 0
    %785 = vmatprep.subr.bf16.mxu0 0
    %786 = vmatpush1.bf16.msra.mxu0 0
    %787 = vmatprep.subr.bf16.mxu0 0
    %788 = vmatpush1.bf16.msra.mxu0 0
    %789 = vmatprep.subr.bf16.mxu0 0
    %790 = vmatpush1.bf16.msra.mxu0 0
    %791 = vmatprep.subr.bf16.mxu0 0
    %792 = vmatpush1.bf16.msra.mxu0 0
    %793 = vmatprep.subr.bf16.mxu0 0
    %794 = vmatpush1.bf16.msra.mxu0 0
    %795 = vmatprep.subr.bf16.mxu0 0
    %796 = vmatpush1.bf16.msra.mxu0 0
    %797 = vmatprep.subr.bf16.mxu0 0
    %798 = vmatpush1.bf16.msra.mxu0 0
    %799 = vmatprep.subr.bf16.mxu0 0
    %800 = vmatpush1.bf16.msra.mxu0 0
    %801 = vmatprep.mubr.bf16.mxu0 0
    %802 = vmatmul.mubr.bf16.gmra.mrb[0].mxu0 %v764
    %v803 = vpop.f32.mrb[0].mxu0
    %v804 = vadd.f32 0.0, %v803
    %v805 = vpop.f32.mrb[0].mxu0
    %v806 = vpop.f32.mrb[0].mxu0
    %v807 = vadd.f32 0.0, %v806
    %v808 = vpop.f32.mrb[0].mxu0
    %809 = vmatprep.mubr.bf16.mxu0 0
    %810 = vmatmul.mubr.bf16.gmra.mrb[0].mxu0 %v767
    %v811 = vpop.f32.mrb[0].mxu0
    %v812 = vadd.f32 0.0, %v811
    %v813 = vpop.f32.mrb[0].mxu0
    %v814 = vpop.f32.mrb[0].mxu0
    %v815 = vadd.f32 0.0, %v814
    %v816 = vpop.f32.mrb[0].mxu0
    %817 = vdwg.mxu0
    %v819 = vsel %vm288, %v511, 0
    %v822 = vsel %vm288, %v512, 0
    %824 = vmatprep.subr.bf16.mxu0 0
    %825 = vmatpush1.bf16.msra.mxu0 %v762
    %826 = vmatprep.subr.bf16.mxu0 0
    %827 = vmatpush1.bf16.msra.mxu0 0
    %828 = vmatprep.subr.bf16.mxu0 0
    %829 = vmatpush1.bf16.msra.mxu0 0
    %830 = vmatprep.subr.bf16.mxu0 0
    %831 = vmatpush1.bf16.msra.mxu0 0
    %832 = vmatprep.subr.bf16.mxu0 0
    %833 = vmatpush1.bf16.msra.mxu0 0
    %834 = vmatprep.subr.bf16.mxu0 0
    %835 = vmatpush1.bf16.msra.mxu0 0
    %836 = vmatprep.subr.bf16.mxu0 0
    %837 = vmatpush1.bf16.msra.mxu0 0
    %838 = vmatprep.subr.bf16.mxu0 0
    %839 = vmatpush1.bf16.msra.mxu0 0
    %840 = vmatprep.subr.bf16.mxu0 0
    %841 = vmatpush1.bf16.msra.mxu0 0
    %842 = vmatprep.subr.bf16.mxu0 0
    %843 = vmatpush1.bf16.msra.mxu0 0
    %844 = vmatprep.subr.bf16.mxu0 0
    %845 = vmatpush1.bf16.msra.mxu0 0
    %846 = vmatprep.subr.bf16.mxu0 0
    %847 = vmatpush1.bf16.msra.mxu0 0
    %848 = vmatprep.subr.bf16.mxu0 0
    %849 = vmatpush1.bf16.msra.mxu0 0
    %850 = vmatprep.subr.bf16.mxu0 0
    %851 = vmatpush1.bf16.msra.mxu0 0
    %852 = vmatprep.subr.bf16.mxu0 0
    %853 = vmatpush1.bf16.msra.mxu0 0
    %854 = vmatprep.subr.bf16.mxu0 0
    %855 = vmatpush1.bf16.msra.mxu0 0
    %856 = vmatprep.mubr.bf16.mxu0 0
    %857 = vmatmul.mubr.bf16.gmra.mrb[0].mxu0 %v819
    %v858 = vpop.f32.mrb[0].mxu0
    %v859 = vadd.f32 %v804, %v858
    %v860 = vpop.f32.mrb[0].mxu0
    %v861 = vpop.f32.mrb[0].mxu0
    %v862 = vadd.f32 %v807, %v861
    %v863 = vpop.f32.mrb[0].mxu0
    %864 = vmatprep.mubr.bf16.mxu0 0
    %865 = vmatmul.mubr.bf16.gmra.mrb[0].mxu0 %v822
    %v866 = vpop.f32.mrb[0].mxu0
    %v867 = vadd.f32 %v812, %v866
    %v868 = vpop.f32.mrb[0].mxu0
    %v869 = vpop.f32.mrb[0].mxu0
    %v870 = vadd.f32 %v815, %v869
    %v871 = vpop.f32.mrb[0].mxu0
    %872 = vdwg.mxu0
    %v873 = vadd.f32 %v859, %v466
    %v874 = vadd.f32 %v862, %v467
    %v875 = vadd.f32 %v867, %v468
    %v876 = vadd.f32 %v870, %v469
    %v877 = vpack.c.bf16 %v874, %v873
    %v878 = vpack.c.bf16 %v876, %v875
    %v879 = vld [vmem:[%s35] sm:$0xf]
    %v880 = vld [vmem:[%s35 + $0x4] sm:$0xf]
    %v881 = vld [vmem:[%s35 + $0x8] sm:$0xf]
    %v882 = vld [vmem:[%s35 + $0xc] sm:$0xf]
    %v883 = vld [vmem:[%s37] sm:$0x1]
    %v885 = vlaneseq
    %v886 = vshrl.u32 %v885, 7
    %v887 = vsub.s32 0, %v886
    %v888 = vrot.slane %v883, %v887
    %v894 = vunpack.c.l.b16 %v879
    %v895 = vunpack.c.l.b16 %v880
    %v896 = vunpack.c.l.b16 %v881
    %v897 = vunpack.c.l.b16 %v882
    %v898 = vpack.c.b16 %v895, %v894
    %v899 = vpack.c.b16 %v897, %v896
    %v903 = vsel %vm164, %v877, 0
    %v906 = vsel %vm164, %v878, 0
    %908 = vmatprep.subr.bf16.mxu0 0
    %909 = vmatpush1.bf16.msra.mxu0 %v898
    %910 = vmatprep.subr.bf16.mxu0 0
    %911 = vmatpush1.bf16.msra.mxu0 %v899
    %912 = vmatprep.subr.bf16.mxu0 0
    %913 = vmatpush1.bf16.msra.mxu0 0
    %914 = vmatprep.subr.bf16.mxu0 0
    %915 = vmatpush1.bf16.msra.mxu0 0
    %916 = vmatprep.subr.bf16.mxu0 0
    %917 = vmatpush1.bf16.msra.mxu0 0
    %918 = vmatprep.subr.bf16.mxu0 0
    %919 = vmatpush1.bf16.msra.mxu0 0
    %920 = vmatprep.subr.bf16.mxu0 0
    %921 = vmatpush1.bf16.msra.mxu0 0
    %922 = vmatprep.subr.bf16.mxu0 0
    %923 = vmatpush1.bf16.msra.mxu0 0
    %924 = vmatprep.subr.bf16.mxu0 0
    %925 = vmatpush1.bf16.msra.mxu0 0
    %926 = vmatprep.subr.bf16.mxu0 0
    %927 = vmatpush1.bf16.msra.mxu0 0
    %928 = vmatprep.subr.bf16.mxu0 0
    %929 = vmatpush1.bf16.msra.mxu0 0
    %930 = vmatprep.subr.bf16.mxu0 0
    %931 = vmatpush1.bf16.msra.mxu0 0
    %932 = vmatprep.subr.bf16.mxu0 0
    %933 = vmatpush1.bf16.msra.mxu0 0
    %934 = vmatprep.subr.bf16.mxu0 0
    %935 = vmatpush1.bf16.msra.mxu0 0
    %936 = vmatprep.subr.bf16.mxu0 0
    %937 = vmatpush1.bf16.msra.mxu0 0
    %938 = vmatprep.subr.bf16.mxu0 0
    %939 = vmatpush1.bf16.msra.mxu0 0
    %940 = vmatprep.mubr.bf16.mxu0 0
    %941 = vmatmul.mubr.bf16.gmra.mrb[0].mxu0 %v903
    %v942 = vpop.f32.mrb[0].mxu0
    %v943 = vadd.f32 %v888, %v942
    %v944 = vpop.f32.mrb[0].mxu0
    %v945 = vpop.f32.mrb[0].mxu0
    %v946 = vadd.f32 %v888, %v945
    %v947 = vpop.f32.mrb[0].mxu0
    %948 = vmatprep.mubr.bf16.mxu0 0
    %949 = vmatmul.mubr.bf16.gmra.mrb[0].mxu0 %v906
    %v950 = vpop.f32.mrb[0].mxu0
    %v951 = vadd.f32 %v888, %v950
    %v952 = vpop.f32.mrb[0].mxu0
    %v953 = vpop.f32.mrb[0].mxu0
    %v954 = vadd.f32 %v888, %v953
    %v955 = vpop.f32.mrb[0].mxu0
    %956 = vdwg.mxu0
    %v957 = vxor.u32 %v943, 2147483648
    %v958 = vxor.u32 %v946, 2147483648
    %v959 = vxor.u32 %v951, 2147483648
    %v960 = vxor.u32 %v954, 2147483648
    %v961 = vmul.f32 %v957, 1.442695
    %v962 = vpow.pop %v961
    %v963 = vmul.f32 %v958, 1.442695
    %v964 = vpow.pop %v963
    %v965 = vmul.f32 %v959, 1.442695
    %v966 = vpow.pop %v965
    %v967 = vmul.f32 %v960, 1.442695
    %v968 = vpow.pop %v967
    %v969 = vadd.f32 %v962, 1.0
    %v970 = vadd.f32 %v964, 1.0
    %v971 = vadd.f32 %v966, 1.0
    %v972 = vadd.f32 %v968, 1.0
    %v973 = vrcp.pop %v969
    %v974 = vmul.f32 1.0, %v973
    %v975 = vrcp.pop %v970
    %v976 = vmul.f32 1.0, %v975
    %v977 = vrcp.pop %v971
    %v978 = vmul.f32 1.0, %v977
    %v979 = vrcp.pop %v972
    %v980 = vmul.f32 1.0, %v979
    %v981 = vmul.f32 %v943, %v974
    %v982 = vmul.f32 %v946, %v976
    %v983 = vmul.f32 %v951, %v978
    %v984 = vmul.f32 %v954, %v980
    %v985 = vpack.c.bf16 %v982, %v981
    %v986 = vpack.c.bf16 %v984, %v983
    %987 = vmatprep.subr.bf16.mxu0 0
    %988 = vmatpush1.bf16.msra.mxu0 %v985
    %989 = vmatprep.subr.bf16.mxu0 0
    %990 = vmatpush1.bf16.msra.mxu0 %v986
    %991 = vmatprep.subr.bf16.mxu0 0
    %992 = vmatpush1.bf16.msra.mxu0 0
    %993 = vmatprep.subr.bf16.mxu0 0
    %994 = vmatpush1.bf16.msra.mxu0 0
    %995 = vmatprep.subr.bf16.mxu0 0
    %996 = vmatpush1.bf16.msra.mxu0 0
    %997 = vmatprep.subr.bf16.mxu0 0
    %998 = vmatpush1.bf16.msra.mxu0 0
    %999 = vmatprep.subr.bf16.mxu0 0
    %1000 = vmatpush1.bf16.msra.mxu0 0
    %1001 = vmatprep.subr.bf16.mxu0 0
    %1002 = vmatpush1.bf16.msra.mxu0 0
    %1003 = vmatprep.subr.bf16.mxu0 0
    %1004 = vmatpush1.bf16.msra.mxu0 0
    %1005 = vmatprep.subr.bf16.mxu0 0
    %1006 = vmatpush1.bf16.msra.mxu0 0
    %1007 = vmatprep.subr.bf16.mxu0 0
    %1008 = vmatpush1.bf16.msra.mxu0 0
    %1009 = vmatprep.subr.bf16.mxu0 0
    %1010 = vmatpush1.bf16.msra.mxu0 0
    %1011 = vmatprep.subr.bf16.mxu0 0
    %1012 = vmatpush1.bf16.msra.mxu0 0
    %1013 = vmatprep.subr.bf16.mxu0 0
    %1014 = vmatpush1.bf16.msra.mxu0 0
    %1015 = vmatprep.subr.bf16.mxu0 0
    %1016 = vmatpush1.bf16.msra.mxu0 0
    %1017 = vmatprep.subr.bf16.mxu0 0
    %1018 = vmatpush1.bf16.msra.mxu0 0
    %1019 = vmatprep.mubr.bf16.mxu0 0
    %1020 = vmatmul.mubr.bf16.gmra.mrb[0].mxu0 %v620
    %v1021 = vpop.f32.mrb[0].mxu0
    %v1022 = vadd.f32 0.0, %v1021
    %v1023 = vpop.f32.mrb[0].mxu0
    %v1024 = vpop.f32.mrb[0].mxu0
    %v1025 = vadd.f32 0.0, %v1024
    %v1026 = vpop.f32.mrb[0].mxu0
    %1027 = vdwg.mxu0
    %1029 = vset.pattern.permute.xlu0 0
    %1030 = vperm.xlu0 %1029, %v669
    %v1031 = vpop.permute.xlu0 %1030
    %1034 = vset.pattern.permute.xlu0 0
    %1035 = vperm.xlu0 %1034, %v670
    %v1036 = vpop.permute.xlu0 %1035
    %v1038 = vmul.f32 %v1022, %v1031
    %v1039 = vmul.f32 %v1025, %v1036
    %v1040 = vpack.c.bf16 %v1039, %v1038
    %v1041 = vld [vmem:[%s39] sm:$0xf]
    %v1042 = vld [vmem:[%s39 + $0x4] sm:$0xf]
    %v1043 = vld [vmem:[%s39 + $0x8] sm:$0xf]
    %v1044 = vld [vmem:[%s39 + $0xc] sm:$0xf]
    %v1045 = vld [vmem:[%s41] sm:$0x1]
    %v1047 = vlaneseq
    %v1048 = vshrl.u32 %v1047, 7
    %v1049 = vsub.s32 0, %v1048
    %v1050 = vrot.slane %v1045, %v1049
    %v1056 = vunpack.c.l.b16 %v1041
    %v1057 = vunpack.c.l.b16 %v1042
    %v1058 = vunpack.c.l.b16 %v1043
    %v1059 = vunpack.c.l.b16 %v1044
    %v1060 = vpack.c.b16 %v1057, %v1056
    %v1061 = vpack.c.b16 %v1059, %v1058
    %v1065 = vsel %vm164, %v1040, 0
    %1067 = vmatprep.subr.bf16.mxu0 0
    %1068 = vmatpush1.bf16.msra.mxu0 %v1060
    %1069 = vmatprep.subr.bf16.mxu0 0
    %1070 = vmatpush1.bf16.msra.mxu0 %v1061
    %1071 = vmatprep.subr.bf16.mxu0 0
    %1072 = vmatpush1.bf16.msra.mxu0 0
    %1073 = vmatprep.subr.bf16.mxu0 0
    %1074 = vmatpush1.bf16.msra.mxu0 0
    %1075 = vmatprep.subr.bf16.mxu0 0
    %1076 = vmatpush1.bf16.msra.mxu0 0
    %1077 = vmatprep.subr.bf16.mxu0 0
    %1078 = vmatpush1.bf16.msra.mxu0 0
    %1079 = vmatprep.subr.bf16.mxu0 0
    %1080 = vmatpush1.bf16.msra.mxu0 0
    %1081 = vmatprep.subr.bf16.mxu0 0
    %1082 = vmatpush1.bf16.msra.mxu0 0
    %1083 = vmatprep.subr.bf16.mxu0 0
    %1084 = vmatpush1.bf16.msra.mxu0 0
    %1085 = vmatprep.subr.bf16.mxu0 0
    %1086 = vmatpush1.bf16.msra.mxu0 0
    %1087 = vmatprep.subr.bf16.mxu0 0
    %1088 = vmatpush1.bf16.msra.mxu0 0
    %1089 = vmatprep.subr.bf16.mxu0 0
    %1090 = vmatpush1.bf16.msra.mxu0 0
    %1091 = vmatprep.subr.bf16.mxu0 0
    %1092 = vmatpush1.bf16.msra.mxu0 0
    %1093 = vmatprep.subr.bf16.mxu0 0
    %1094 = vmatpush1.bf16.msra.mxu0 0
    %1095 = vmatprep.subr.bf16.mxu0 0
    %1096 = vmatpush1.bf16.msra.mxu0 0
    %1097 = vmatprep.subr.bf16.mxu0 0
    %1098 = vmatpush1.bf16.msra.mxu0 0
    %1099 = vmatprep.mubr.bf16.mxu0 0
    %1100 = vmatmul.mubr.bf16.gmra.mrb[0].mxu0 %v1065
    %v1101 = vpop.f32.mrb[0].mxu0
    %v1102 = vadd.f32 %v1050, %v1101
    %v1103 = vpop.f32.mrb[0].mxu0
    %v1104 = vpop.f32.mrb[0].mxu0
    %v1105 = vadd.f32 %v1050, %v1104
    %v1106 = vpop.f32.mrb[0].mxu0
    %1107 = vdwg.mxu0
    %v1108 = vxor.u32 %v1102, 2147483648
    %v1109 = vxor.u32 %v1105, 2147483648
    %v1110 = vmul.f32 %v1108, 1.442695
    %v1111 = vpow.pop %v1110
    %v1112 = vmul.f32 %v1109, 1.442695
    %v1113 = vpow.pop %v1112
    %v1114 = vadd.f32 %v1111, 1.0
    %v1115 = vadd.f32 %v1113, 1.0
    %v1116 = vrcp.pop %v1114
    %v1117 = vmul.f32 1.0, %v1116
    %v1118 = vrcp.pop %v1115
    %v1119 = vmul.f32 1.0, %v1118
    %v1120 = vmul.f32 %v1102, %v1117
    %v1121 = vmul.f32 %v1105, %v1119
    %v1122 = vadd.f32 %v437, %v1120
    %v1123 = vadd.f32 %v438, %v1121
    %v1124 = vld [vmem:[%s43] sm:$0x1]
    %v1126 = vlaneseq
    %v1127 = vshrl.u32 %v1126, 7
    %v1128 = vsub.s32 0, %v1127
    %v1129 = vrot.slane %v1124, %v1128
    %v1131 = vmul.f32 %v981, %v1129
    %v1132 = vmul.f32 %v982, %v1129
    %v1133 = vmul.f32 %v983, %v1129
    %v1134 = vmul.f32 %v984, %v1129
    %v1135 = vsel %vm164, %v1131, 0.0
    %1136 = vadd.xlane.f32.xlu0 %v1135
    %v1137 = vpop.xlane.xlu0 %1136
    %v1138 = vsel %vm164, %v1132, 0.0
    %1139 = vadd.xlane.f32.xlu0 %v1138
    %v1140 = vpop.xlane.xlu0 %1139
    %v1141 = vsel %vm164, %v1133, 0.0
    %1142 = vadd.xlane.f32.xlu0 %v1141
    %v1143 = vpop.xlane.xlu0 %1142
    %v1144 = vsel %vm164, %v1134, 0.0
    %1145 = vadd.xlane.f32.xlu0 %v1144
    %v1146 = vpop.xlane.xlu0 %1145
    %v1147 = vld [vmem:[%s45] sm:$0x1]
    %v1149 = vlaneseq
    %v1150 = vshrl.u32 %v1149, 7
    %v1151 = vsub.s32 0, %v1150
    %v1152 = vrot.slane %v1147, %v1151
    %v1154 = vadd.f32 %v1137, %v1152
    %v1155 = vadd.f32 %v1140, %v1152
    %v1156 = vadd.f32 %v1143, %v1152
    %v1157 = vadd.f32 %v1146, %v1152
    %v1158 = vxor.u32 %v1154, 2147483648
    %v1159 = vxor.u32 %v1155, 2147483648
    %v1160 = vxor.u32 %v1156, 2147483648
    %v1161 = vxor.u32 %v1157, 2147483648
    %v1162 = vmul.f32 %v1158, 1.442695
    %v1163 = vpow.pop %v1162
    %v1164 = vmul.f32 %v1159, 1.442695
    %v1165 = vpow.pop %v1164
    %v1166 = vmul.f32 %v1160, 1.442695
    %v1167 = vpow.pop %v1166
    %v1168 = vmul.f32 %v1161, 1.442695
    %v1169 = vpow.pop %v1168
    %v1170 = vadd.f32 %v1163, 1.0
    %v1171 = vadd.f32 %v1165, 1.0
    %v1172 = vadd.f32 %v1167, 1.0
    %v1173 = vadd.f32 %v1169, 1.0
    %v1174 = vrcp.pop %v1170
    %v1175 = vmul.f32 1.0, %v1174
    %v1176 = vrcp.pop %v1171
    %v1177 = vmul.f32 1.0, %v1176
    %v1178 = vrcp.pop %v1172
    %v1179 = vmul.f32 1.0, %v1178
    %v1180 = vrcp.pop %v1173
    %v1181 = vmul.f32 1.0, %v1180
    %1183 = vset.pattern.permute.xlu0 0
    %1184 = vperm.xlu0 %1183, %v1175
    %v1185 = vpop.permute.xlu0 %1184
    %1188 = vset.pattern.permute.xlu0 0
    %1189 = vperm.xlu0 %1188, %v1177
    %v1190 = vpop.permute.xlu0 %1189
    %1193 = vset.pattern.permute.xlu0 0
    %1194 = vperm.xlu0 %1193, %v1179
    %v1195 = vpop.permute.xlu0 %1194
    %1198 = vset.pattern.permute.xlu0 0
    %1199 = vperm.xlu0 %1198, %v1181
    %v1200 = vpop.permute.xlu0 %1199
    %v1202 = vmul.f32 %v1185, %v477
    %v1203 = vmul.f32 %v1190, %v478
    %v1204 = vmul.f32 %v1195, %v479
    %v1205 = vmul.f32 %v1200, %v480
    %v1206 = vpack.c.bf16 %v1203, %v1202
    %v1207 = vpack.c.bf16 %v1205, %v1204
    %1208 = vmatprep.subr.bf16.mxu0 0
    %1209 = vmatpush1.bf16.msra.mxu0 %v1206
    %1210 = vmatprep.subr.bf16.mxu0 0
    %1211 = vmatpush1.bf16.msra.mxu0 %v1207
    %1212 = vmatprep.subr.bf16.mxu0 0
    %1213 = vmatpush1.bf16.msra.mxu0 0
    %1214 = vmatprep.subr.bf16.mxu0 0
    %1215 = vmatpush1.bf16.msra.mxu0 0
    %1216 = vmatprep.subr.bf16.mxu0 0
    %1217 = vmatpush1.bf16.msra.mxu0 0
    %1218 = vmatprep.subr.bf16.mxu0 0
    %1219 = vmatpush1.bf16.msra.mxu0 0
    %1220 = vmatprep.subr.bf16.mxu0 0
    %1221 = vmatpush1.bf16.msra.mxu0 0
    %1222 = vmatprep.subr.bf16.mxu0 0
    %1223 = vmatpush1.bf16.msra.mxu0 0
    %1224 = vmatprep.subr.bf16.mxu0 0
    %1225 = vmatpush1.bf16.msra.mxu0 0
    %1226 = vmatprep.subr.bf16.mxu0 0
    %1227 = vmatpush1.bf16.msra.mxu0 0
    %1228 = vmatprep.subr.bf16.mxu0 0
    %1229 = vmatpush1.bf16.msra.mxu0 0
    %1230 = vmatprep.subr.bf16.mxu0 0
    %1231 = vmatpush1.bf16.msra.mxu0 0
    %1232 = vmatprep.subr.bf16.mxu0 0
    %1233 = vmatpush1.bf16.msra.mxu0 0
    %1234 = vmatprep.subr.bf16.mxu0 0
    %1235 = vmatpush1.bf16.msra.mxu0 0
    %1236 = vmatprep.subr.bf16.mxu0 0
    %1237 = vmatpush1.bf16.msra.mxu0 0
    %1238 = vmatprep.subr.bf16.mxu0 0
    %1239 = vmatpush1.bf16.msra.mxu0 0
    %1240 = vmatprep.mubr.bf16.mxu0 0
    %1241 = vmatmul.mubr.bf16.gmra.mrb[0].mxu0 %v620
    %v1242 = vpop.f32.mrb[0].mxu0
    %v1243 = vadd.f32 0.0, %v1242
    %v1244 = vpop.f32.mrb[0].mxu0
    %v1245 = vpop.f32.mrb[0].mxu0
    %v1246 = vadd.f32 0.0, %v1245
    %v1247 = vpop.f32.mrb[0].mxu0
    %1248 = vdwg.mxu0
    %v1249 = vmul.f32 %v1243, %v1031
    %v1250 = vmul.f32 %v1246, %v1036
    %v1251 = vadd.f32 %v740, %v1249
    %v1252 = vadd.f32 %v741, %v1250
    %v1253 = vpack.c.bf16 %v1123, %v1122
    %v1254 = vld [vmem:[%s47] sm:$0xf]
    %v1255 = vld [vmem:[%s47 + $0x4] sm:$0xf]
    %v1256 = vld [vmem:[%s47 + $0x8] sm:$0xf]
    %v1257 = vld [vmem:[%s47 + $0xc] sm:$0xf]
    %v1258 = vld [vmem:[%s55] sm:$0x1]
    %v1260 = vlaneseq
    %v1261 = vshrl.u32 %v1260, 7
    %v1262 = vsub.s32 0, %v1261
    %v1263 = vrot.slane %v1258, %v1262
    %v1269 = vunpack.c.l.b16 %v1254
    %v1270 = vunpack.c.l.b16 %v1255
    %v1271 = vunpack.c.l.b16 %v1256
    %v1272 = vunpack.c.l.b16 %v1257
    %v1273 = vpack.c.b16 %v1270, %v1269
    %v1274 = vpack.c.b16 %v1272, %v1271
    %v1278 = vsel %vm164, %v1253, 0
    %1280 = vmatprep.subr.bf16.mxu0 0
    %1281 = vmatpush1.bf16.msra.mxu0 %v1273
    %1282 = vmatprep.subr.bf16.mxu0 0
    %1283 = vmatpush1.bf16.msra.mxu0 %v1274
    %1284 = vmatprep.subr.bf16.mxu0 0
    %1285 = vmatpush1.bf16.msra.mxu0 0
    %1286 = vmatprep.subr.bf16.mxu0 0
    %1287 = vmatpush1.bf16.msra.mxu0 0
    %1288 = vmatprep.subr.bf16.mxu0 0
    %1289 = vmatpush1.bf16.msra.mxu0 0
    %1290 = vmatprep.subr.bf16.mxu0 0
    %1291 = vmatpush1.bf16.msra.mxu0 0
    %1292 = vmatprep.subr.bf16.mxu0 0
    %1293 = vmatpush1.bf16.msra.mxu0 0
    %1294 = vmatprep.subr.bf16.mxu0 0
    %1295 = vmatpush1.bf16.msra.mxu0 0
    %1296 = vmatprep.subr.bf16.mxu0 0
    %1297 = vmatpush1.bf16.msra.mxu0 0
    %1298 = vmatprep.subr.bf16.mxu0 0
    %1299 = vmatpush1.bf16.msra.mxu0 0
    %1300 = vmatprep.subr.bf16.mxu0 0
    %1301 = vmatpush1.bf16.msra.mxu0 0
    %1302 = vmatprep.subr.bf16.mxu0 0
    %1303 = vmatpush1.bf16.msra.mxu0 0
    %1304 = vmatprep.subr.bf16.mxu0 0
    %1305 = vmatpush1.bf16.msra.mxu0 0
    %1306 = vmatprep.subr.bf16.mxu0 0
    %1307 = vmatpush1.bf16.msra.mxu0 0
    %1308 = vmatprep.subr.bf16.mxu0 0
    %1309 = vmatpush1.bf16.msra.mxu0 0
    %1310 = vmatprep.subr.bf16.mxu0 0
    %1311 = vmatpush1.bf16.msra.mxu0 0
    %1312 = vmatprep.mubr.bf16.mxu0 0
    %1313 = vmatmul.mubr.bf16.gmra.mrb[0].mxu0 %v1278
    %v1314 = vpop.f32.mrb[0].mxu0
    %v1315 = vadd.f32 %v1263, %v1314
    %v1316 = vpop.f32.mrb[0].mxu0
    %v1317 = vpop.f32.mrb[0].mxu0
    %v1318 = vadd.f32 %v1263, %v1317
    %v1319 = vpop.f32.mrb[0].mxu0
    %1320 = vdwg.mxu0
    %v1321 = vld [vmem:[%s49] sm:$0xf]
    %v1322 = vld [vmem:[%s49 + $0x4] sm:$0xf]
    %v1323 = vld [vmem:[%s49 + $0x8] sm:$0xf]
    %v1324 = vld [vmem:[%s49 + $0xc] sm:$0xf]
    %v1325 = vld [vmem:[%s57] sm:$0x1]
    %v1327 = vlaneseq
    %v1328 = vshrl.u32 %v1327, 7
    %v1329 = vsub.s32 0, %v1328
    %v1330 = vrot.slane %v1325, %v1329
    %v1336 = vunpack.c.l.b16 %v1321
    %v1337 = vunpack.c.l.b16 %v1322
    %v1338 = vunpack.c.l.b16 %v1323
    %v1339 = vunpack.c.l.b16 %v1324
    %v1340 = vpack.c.b16 %v1337, %v1336
    %v1341 = vpack.c.b16 %v1339, %v1338
    %1344 = vmatprep.subr.bf16.mxu0 0
    %1345 = vmatpush1.bf16.msra.mxu0 %v1340
    %1346 = vmatprep.subr.bf16.mxu0 0
    %1347 = vmatpush1.bf16.msra.mxu0 %v1341
    %1348 = vmatprep.subr.bf16.mxu0 0
    %1349 = vmatpush1.bf16.msra.mxu0 0
    %1350 = vmatprep.subr.bf16.mxu0 0
    %1351 = vmatpush1.bf16.msra.mxu0 0
    %1352 = vmatprep.subr.bf16.mxu0 0
    %1353 = vmatpush1.bf16.msra.mxu0 0
    %1354 = vmatprep.subr.bf16.mxu0 0
    %1355 = vmatpush1.bf16.msra.mxu0 0
    %1356 = vmatprep.subr.bf16.mxu0 0
    %1357 = vmatpush1.bf16.msra.mxu0 0
    %1358 = vmatprep.subr.bf16.mxu0 0
    %1359 = vmatpush1.bf16.msra.mxu0 0
    %1360 = vmatprep.subr.bf16.mxu0 0
    %1361 = vmatpush1.bf16.msra.mxu0 0
    %1362 = vmatprep.subr.bf16.mxu0 0
    %1363 = vmatpush1.bf16.msra.mxu0 0
    %1364 = vmatprep.subr.bf16.mxu0 0
    %1365 = vmatpush1.bf16.msra.mxu0 0
    %1366 = vmatprep.subr.bf16.mxu0 0
    %1367 = vmatpush1.bf16.msra.mxu0 0
    %1368 = vmatprep.subr.bf16.mxu0 0
    %1369 = vmatpush1.bf16.msra.mxu0 0
    %1370 = vmatprep.subr.bf16.mxu0 0
    %1371 = vmatpush1.bf16.msra.mxu0 0
    %1372 = vmatprep.subr.bf16.mxu0 0
    %1373 = vmatpush1.bf16.msra.mxu0 0
    %1374 = vmatprep.subr.bf16.mxu0 0
    %1375 = vmatpush1.bf16.msra.mxu0 0
    %1376 = vmatprep.mubr.bf16.mxu0 0
    %1377 = vmatmul.mubr.bf16.gmra.mrb[0].mxu0 %v1278
    %v1378 = vpop.f32.mrb[0].mxu0
    %v1379 = vadd.f32 %v1330, %v1378
    %v1380 = vpop.f32.mrb[0].mxu0
    %v1381 = vpop.f32.mrb[0].mxu0
    %v1382 = vadd.f32 %v1330, %v1381
    %v1383 = vpop.f32.mrb[0].mxu0
    %1384 = vdwg.mxu0
    %v1385 = vld [vmem:[%s51] sm:$0xf]
    %v1386 = vld [vmem:[%s51 + $0x4] sm:$0xf]
    %v1387 = vld [vmem:[%s51 + $0x8] sm:$0xf]
    %v1388 = vld [vmem:[%s51 + $0xc] sm:$0xf]
    %v1389 = vld [vmem:[%s59] sm:$0x1]
    %v1391 = vlaneseq
    %v1392 = vshrl.u32 %v1391, 7
    %v1393 = vsub.s32 0, %v1392
    %v1394 = vrot.slane %v1389, %v1393
    %v1400 = vunpack.c.l.b16 %v1385
    %v1401 = vunpack.c.l.b16 %v1386
    %v1402 = vunpack.c.l.b16 %v1387
    %v1403 = vunpack.c.l.b16 %v1388
    %v1404 = vpack.c.b16 %v1401, %v1400
    %v1405 = vpack.c.b16 %v1403, %v1402
    %1408 = vmatprep.subr.bf16.mxu0 0
    %1409 = vmatpush1.bf16.msra.mxu0 %v1404
    %1410 = vmatprep.subr.bf16.mxu0 0
    %1411 = vmatpush1.bf16.msra.mxu0 %v1405
    %1412 = vmatprep.subr.bf16.mxu0 0
    %1413 = vmatpush1.bf16.msra.mxu0 0
    %1414 = vmatprep.subr.bf16.mxu0 0
    %1415 = vmatpush1.bf16.msra.mxu0 0
    %1416 = vmatprep.subr.bf16.mxu0 0
    %1417 = vmatpush1.bf16.msra.mxu0 0
    %1418 = vmatprep.subr.bf16.mxu0 0
    %1419 = vmatpush1.bf16.msra.mxu0 0
    %1420 = vmatprep.subr.bf16.mxu0 0
    %1421 = vmatpush1.bf16.msra.mxu0 0
    %1422 = vmatprep.subr.bf16.mxu0 0
    %1423 = vmatpush1.bf16.msra.mxu0 0
    %1424 = vmatprep.subr.bf16.mxu0 0
    %1425 = vmatpush1.bf16.msra.mxu0 0
    %1426 = vmatprep.subr.bf16.mxu0 0
    %1427 = vmatpush1.bf16.msra.mxu0 0
    %1428 = vmatprep.subr.bf16.mxu0 0
    %1429 = vmatpush1.bf16.msra.mxu0 0
    %1430 = vmatprep.subr.bf16.mxu0 0
    %1431 = vmatpush1.bf16.msra.mxu0 0
    %1432 = vmatprep.subr.bf16.mxu0 0
    %1433 = vmatpush1.bf16.msra.mxu0 0
    %1434 = vmatprep.subr.bf16.mxu0 0
    %1435 = vmatpush1.bf16.msra.mxu0 0
    %1436 = vmatprep.subr.bf16.mxu0 0
    %1437 = vmatpush1.bf16.msra.mxu0 0
    %1438 = vmatprep.subr.bf16.mxu0 0
    %1439 = vmatpush1.bf16.msra.mxu0 0
    %1440 = vmatprep.mubr.bf16.mxu0 0
    %1441 = vmatmul.mubr.bf16.gmra.mrb[0].mxu0 %v1278
    %v1442 = vpop.f32.mrb[0].mxu0
    %v1443 = vadd.f32 %v1394, %v1442
    %v1444 = vpop.f32.mrb[0].mxu0
    %v1445 = vpop.f32.mrb[0].mxu0
    %v1446 = vadd.f32 %v1394, %v1445
    %v1447 = vpop.f32.mrb[0].mxu0
    %1448 = vdwg.mxu0
    %v1449 = vmul.f32 %v1315, %v746
    %v1450 = vmul.f32 %v1318, %v746
    %v1451 = vmul.f32 %v1315, %v751
    %v1452 = vmul.f32 %v1318, %v751
    %v1453 = vmul.f32 %v1315, %v756
    %v1454 = vmul.f32 %v1318, %v756
    %v1455 = vmul.f32 %v1315, %v761
    %v1456 = vmul.f32 %v1318, %v761
    %v1457 = vpack.c.bf16 %v1450, %v1449
    %v1458 = vpack.c.bf16 %v1452, %v1451
    %v1459 = vpack.c.bf16 %v1454, %v1453
    %v1460 = vpack.c.bf16 %v1456, %v1455
    %v1461 = vpack.c.bf16 %v1382, %v1379
    %v1463 = vsel %vm164, %v1457, 0
    %v1466 = vsel %vm164, %v1458, 0
    %v1469 = vsel %vm164, %v1459, 0
    %v1472 = vsel %vm164, %v1460, 0
    %v1475 = vsel %vm164, %v1461, 0
    %1477 = vmatprep.subr.bf16.mxu0 0
    %1478 = vmatpush1.bf16.xpose.msra.mxu0 %v1475
    %1479 = vmatprep.subr.bf16.mxu0 0
    %1480 = vmatpush1.bf16.xpose.msra.mxu0 0
    %1481 = vmatprep.subr.bf16.mxu0 0
    %1482 = vmatpush1.bf16.xpose.msra.mxu0 0
    %1483 = vmatprep.subr.bf16.mxu0 0
    %1484 = vmatpush1.bf16.xpose.msra.mxu0 0
    %1485 = vmatprep.subr.bf16.mxu0 0
    %1486 = vmatpush1.bf16.xpose.msra.mxu0 0
    %1487 = vmatprep.subr.bf16.mxu0 0
    %1488 = vmatpush1.bf16.xpose.msra.mxu0 0
    %1489 = vmatprep.subr.bf16.mxu0 0
    %1490 = vmatpush1.bf16.xpose.msra.mxu0 0
    %1491 = vmatprep.subr.bf16.mxu0 0
    %1492 = vmatpush1.bf16.xpose.msra.mxu0 0
    %1493 = vmatprep.subr.bf16.mxu0 0
    %1494 = vmatpush1.bf16.xpose.msra.mxu0 0
    %1495 = vmatprep.subr.bf16.mxu0 0
    %1496 = vmatpush1.bf16.xpose.msra.mxu0 0
    %1497 = vmatprep.subr.bf16.mxu0 0
    %1498 = vmatpush1.bf16.xpose.msra.mxu0 0
    %1499 = vmatprep.subr.bf16.mxu0 0
    %1500 = vmatpush1.bf16.xpose.msra.mxu0 0
    %1501 = vmatprep.subr.bf16.mxu0 0
    %1502 = vmatpush1.bf16.xpose.msra.mxu0 0
    %1503 = vmatprep.subr.bf16.mxu0 0
    %1504 = vmatpush1.bf16.xpose.msra.mxu0 0
    %1505 = vmatprep.subr.bf16.mxu0 0
    %1506 = vmatpush1.bf16.xpose.msra.mxu0 0
    %1507 = vmatprep.subr.bf16.mxu0 0
    %1508 = vmatpush1.bf16.xpose.msra.mxu0 0
    %1509 = vmatprep.mubr.bf16.mxu0 0
    %1510 = vmatmul.mubr.bf16.gmra.mrb[0].mxu0 %v1463
    %v1511 = vpop.f32.mrb[0].mxu0
    %v1512 = vadd.f32 0.0, %v1511
    %v1513 = vpop.f32.mrb[0].mxu0
    %v1514 = vpop.f32.mrb[0].mxu0
    %v1515 = vadd.f32 0.0, %v1514
    %v1516 = vpop.f32.mrb[0].mxu0
    %1517 = vmatprep.mubr.bf16.mxu0 0
    %1518 = vmatmul.mubr.bf16.gmra.mrb[0].mxu0 %v1466
    %v1519 = vpop.f32.mrb[0].mxu0
    %v1520 = vadd.f32 0.0, %v1519
    %v1521 = vpop.f32.mrb[0].mxu0
    %v1522 = vpop.f32.mrb[0].mxu0
    %v1523 = vadd.f32 0.0, %v1522
    %v1524 = vpop.f32.mrb[0].mxu0
    %1525 = vmatprep.mubr.bf16.mxu0 0
    %1526 = vmatmul.mubr.bf16.gmra.mrb[0].mxu0 %v1469
    %v1527 = vpop.f32.mrb[0].mxu0
    %v1528 = vadd.f32 0.0, %v1527
    %v1529 = vpop.f32.mrb[0].mxu0
    %v1530 = vpop.f32.mrb[0].mxu0
    %v1531 = vadd.f32 0.0, %v1530
    %v1532 = vpop.f32.mrb[0].mxu0
    %1533 = vmatprep.mubr.bf16.mxu0 0
    %1534 = vmatmul.mubr.bf16.gmra.mrb[0].mxu0 %v1472
    %v1535 = vpop.f32.mrb[0].mxu0
    %v1536 = vadd.f32 0.0, %v1535
    %v1537 = vpop.f32.mrb[0].mxu0
    %v1538 = vpop.f32.mrb[0].mxu0
    %v1539 = vadd.f32 0.0, %v1538
    %v1540 = vpop.f32.mrb[0].mxu0
    %1541 = vdwg.mxu0
    %v1542 = vmul.f32 %v1512, 0.35355338
    %v1543 = vmul.f32 %v1515, 0.35355338
    %v1544 = vmul.f32 %v1520, 0.35355338
    %v1545 = vmul.f32 %v1523, 0.35355338
    %v1546 = vmul.f32 %v1528, 0.35355338
    %v1547 = vmul.f32 %v1531, 0.35355338
    %v1548 = vmul.f32 %v1536, 0.35355338
    %v1549 = vmul.f32 %v1539, 0.35355338
    %v1550 = vsel %vm288, %v1542, -inf
    %1551 = vmax.xlane.f32.xlu0 %v1550
    %v1552 = vpop.xlane.xlu0 %1551
    %v1553 = vsel %vm288, %v1543, -inf
    %1554 = vmax.xlane.f32.xlu0 %v1553
    %v1555 = vpop.xlane.xlu0 %1554
    %v1556 = vsel %vm288, %v1544, -inf
    %1557 = vmax.xlane.f32.xlu0 %v1556
    %v1558 = vpop.xlane.xlu0 %1557
    %v1559 = vsel %vm288, %v1545, -inf
    %1560 = vmax.xlane.f32.xlu0 %v1559
    %v1561 = vpop.xlane.xlu0 %1560
    %v1562 = vsel %vm288, %v1546, -inf
    %1563 = vmax.xlane.f32.xlu0 %v1562
    %v1564 = vpop.xlane.xlu0 %1563
    %v1565 = vsel %vm288, %v1547, -inf
    %1566 = vmax.xlane.f32.xlu0 %v1565
    %v1567 = vpop.xlane.xlu0 %1566
    %v1568 = vsel %vm288, %v1548, -inf
    %1569 = vmax.xlane.f32.xlu0 %v1568
    %v1570 = vpop.xlane.xlu0 %1569
    %v1571 = vsel %vm288, %v1549, -inf
    %1572 = vmax.xlane.f32.xlu0 %v1571
    %v1573 = vpop.xlane.xlu0 %1572
    %v1574 = vsub.f32 %v1542, %v1552
    %v1575 = vsub.f32 %v1543, %v1555
    %v1576 = vsub.f32 %v1544, %v1558
    %v1577 = vsub.f32 %v1545, %v1561
    %v1578 = vsub.f32 %v1546, %v1564
    %v1579 = vsub.f32 %v1547, %v1567
    %v1580 = vsub.f32 %v1548, %v1570
    %v1581 = vsub.f32 %v1549, %v1573
    %v1582 = vmul.f32 %v1574, 1.442695
    %v1583 = vpow.pop %v1582
    %v1584 = vmul.f32 %v1575, 1.442695
    %v1585 = vpow.pop %v1584
    %v1586 = vmul.f32 %v1576, 1.442695
    %v1587 = vpow.pop %v1586
    %v1588 = vmul.f32 %v1577, 1.442695
    %v1589 = vpow.pop %v1588
    %v1590 = vmul.f32 %v1578, 1.442695
    %v1591 = vpow.pop %v1590
    %v1592 = vmul.f32 %v1579, 1.442695
    %v1593 = vpow.pop %v1592
    %v1594 = vmul.f32 %v1580, 1.442695
    %v1595 = vpow.pop %v1594
    %v1596 = vmul.f32 %v1581, 1.442695
    %v1597 = vpow.pop %v1596
    %v1598 = vsel %vm288, %v1583, 0.0
    %1599 = vadd.xlane.f32.xlu0 %v1598
    %v1600 = vpop.xlane.xlu0 %1599
    %v1601 = vsel %vm288, %v1585, 0.0
    %1602 = vadd.xlane.f32.xlu0 %v1601
    %v1603 = vpop.xlane.xlu0 %1602
    %v1604 = vsel %vm288, %v1587, 0.0
    %1605 = vadd.xlane.f32.xlu0 %v1604
    %v1606 = vpop.xlane.xlu0 %1605
    %v1607 = vsel %vm288, %v1589, 0.0
    %1608 = vadd.xlane.f32.xlu0 %v1607
    %v1609 = vpop.xlane.xlu0 %1608
    %v1610 = vsel %vm288, %v1591, 0.0
    %1611 = vadd.xlane.f32.xlu0 %v1610
    %v1612 = vpop.xlane.xlu0 %1611
    %v1613 = vsel %vm288, %v1593, 0.0
    %1614 = vadd.xlane.f32.xlu0 %v1613
    %v1615 = vpop.xlane.xlu0 %1614
    %v1616 = vsel %vm288, %v1595, 0.0
    %1617 = vadd.xlane.f32.xlu0 %v1616
    %v1618 = vpop.xlane.xlu0 %1617
    %v1619 = vsel %vm288, %v1597, 0.0
    %1620 = vadd.xlane.f32.xlu0 %v1619
    %v1621 = vpop.xlane.xlu0 %1620
    %v1622 = vrcp.pop %v1600
    %v1623 = vrcp.pop %v1603
    %v1624 = vrcp.pop %v1606
    %v1625 = vrcp.pop %v1609
    %v1626 = vrcp.pop %v1612
    %v1627 = vrcp.pop %v1615
    %v1628 = vrcp.pop %v1618
    %v1629 = vrcp.pop %v1621
    %v1630 = vmul.f32 %v1583, %v1622
    %v1631 = vmul.f32 %v1585, %v1623
    %v1632 = vmul.f32 %v1587, %v1624
    %v1633 = vmul.f32 %v1589, %v1625
    %v1634 = vmul.f32 %v1591, %v1626
    %v1635 = vmul.f32 %v1593, %v1627
    %v1636 = vmul.f32 %v1595, %v1628
    %v1637 = vmul.f32 %v1597, %v1629
    %v1638 = vpack.c.bf16 %v1631, %v1630
    %v1639 = vpack.c.bf16 %v1633, %v1632
    %v1640 = vpack.c.bf16 %v1635, %v1634
    %v1641 = vpack.c.bf16 %v1637, %v1636
    %v1642 = vpack.c.bf16 %v1446, %v1443
    %v1644 = vsel %vm288, %v1638, 0
    %v1647 = vsel %vm288, %v1639, 0
    %v1650 = vsel %vm288, %v1640, 0
    %v1653 = vsel %vm288, %v1641, 0
    %1655 = vmatprep.subr.bf16.mxu0 0
    %1656 = vmatpush1.bf16.msra.mxu0 %v1642
    %1657 = vmatprep.subr.bf16.mxu0 0
    %1658 = vmatpush1.bf16.msra.mxu0 0
    %1659 = vmatprep.subr.bf16.mxu0 0
    %1660 = vmatpush1.bf16.msra.mxu0 0
    %1661 = vmatprep.subr.bf16.mxu0 0
    %1662 = vmatpush1.bf16.msra.mxu0 0
    %1663 = vmatprep.subr.bf16.mxu0 0
    %1664 = vmatpush1.bf16.msra.mxu0 0
    %1665 = vmatprep.subr.bf16.mxu0 0
    %1666 = vmatpush1.bf16.msra.mxu0 0
    %1667 = vmatprep.subr.bf16.mxu0 0
    %1668 = vmatpush1.bf16.msra.mxu0 0
    %1669 = vmatprep.subr.bf16.mxu0 0
    %1670 = vmatpush1.bf16.msra.mxu0 0
    %1671 = vmatprep.subr.bf16.mxu0 0
    %1672 = vmatpush1.bf16.msra.mxu0 0
    %1673 = vmatprep.subr.bf16.mxu0 0
    %1674 = vmatpush1.bf16.msra.mxu0 0
    %1675 = vmatprep.subr.bf16.mxu0 0
    %1676 = vmatpush1.bf16.msra.mxu0 0
    %1677 = vmatprep.subr.bf16.mxu0 0
    %1678 = vmatpush1.bf16.msra.mxu0 0
    %1679 = vmatprep.subr.bf16.mxu0 0
    %1680 = vmatpush1.bf16.msra.mxu0 0
    %1681 = vmatprep.subr.bf16.mxu0 0
    %1682 = vmatpush1.bf16.msra.mxu0 0
    %1683 = vmatprep.subr.bf16.mxu0 0
    %1684 = vmatpush1.bf16.msra.mxu0 0
    %1685 = vmatprep.subr.bf16.mxu0 0
    %1686 = vmatpush1.bf16.msra.mxu0 0
    %1687 = vmatprep.mubr.bf16.mxu0 0
    %1688 = vmatmul.mubr.bf16.gmra.mrb[0].mxu0 %v1644
    %v1689 = vpop.f32.mrb[0].mxu0
    %v1690 = vadd.f32 0.0, %v1689
    %v1691 = vpop.f32.mrb[0].mxu0
    %v1692 = vpop.f32.mrb[0].mxu0
    %v1693 = vadd.f32 0.0, %v1692
    %v1694 = vpop.f32.mrb[0].mxu0
    %1695 = vmatprep.mubr.bf16.mxu0 0
    %1696 = vmatmul.mubr.bf16.gmra.mrb[0].mxu0 %v1647
    %v1697 = vpop.f32.mrb[0].mxu0
    %v1698 = vadd.f32 0.0, %v1697
    %v1699 = vpop.f32.mrb[0].mxu0
    %v1700 = vpop.f32.mrb[0].mxu0
    %v1701 = vadd.f32 0.0, %v1700
    %v1702 = vpop.f32.mrb[0].mxu0
    %1703 = vmatprep.mubr.bf16.mxu0 0
    %1704 = vmatmul.mubr.bf16.gmra.mrb[0].mxu0 %v1650
    %v1705 = vpop.f32.mrb[0].mxu0
    %v1706 = vadd.f32 0.0, %v1705
    %v1707 = vpop.f32.mrb[0].mxu0
    %v1708 = vpop.f32.mrb[0].mxu0
    %v1709 = vadd.f32 0.0, %v1708
    %v1710 = vpop.f32.mrb[0].mxu0
    %1711 = vmatprep.mubr.bf16.mxu0 0
    %1712 = vmatmul.mubr.bf16.gmra.mrb[0].mxu0 %v1653
    %v1713 = vpop.f32.mrb[0].mxu0
    %v1714 = vadd.f32 0.0, %v1713
    %v1715 = vpop.f32.mrb[0].mxu0
    %v1716 = vpop.f32.mrb[0].mxu0
    %v1717 = vadd.f32 0.0, %v1716
    %v1718 = vpop.f32.mrb[0].mxu0
    %1719 = vdwg.mxu0
    %v1720 = vmul.f32 %v1690, %v746
    %v1721 = vmul.f32 %v1693, %v746
    %v1722 = vadd.f32 %v1720, 0.0
    %v1723 = vadd.f32 %v1721, 0.0
    %v1724 = vmul.f32 %v1698, %v751
    %v1725 = vmul.f32 %v1701, %v751
    %v1726 = vadd.f32 %v1722, %v1724
    %v1727 = vadd.f32 %v1723, %v1725
    %v1728 = vmul.f32 %v1706, %v756
    %v1729 = vmul.f32 %v1709, %v756
    %v1730 = vadd.f32 %v1726, %v1728
    %v1731 = vadd.f32 %v1727, %v1729
    %v1732 = vmul.f32 %v1714, %v761
    %v1733 = vmul.f32 %v1717, %v761
    %v1734 = vadd.f32 %v1730, %v1732
    %v1735 = vadd.f32 %v1731, %v1733
    %v1736 = vpack.c.bf16 %v1735, %v1734
    %v1737 = vld [vmem:[%s53] sm:$0xf]
    %v1738 = vld [vmem:[%s53 + $0x4] sm:$0xf]
    %v1739 = vld [vmem:[%s53 + $0x8] sm:$0xf]
    %v1740 = vld [vmem:[%s53 + $0xc] sm:$0xf]
    %v1745 = vunpack.c.l.b16 %v1737
    %v1746 = vunpack.c.l.b16 %v1738
    %v1747 = vunpack.c.l.b16 %v1739
    %v1748 = vunpack.c.l.b16 %v1740
    %v1749 = vpack.c.b16 %v1746, %v1745
    %v1750 = vpack.c.b16 %v1748, %v1747
    %v1754 = vsel %vm164, %v1736, 0
    %1756 = vmatprep.subr.bf16.mxu0 0
    %1757 = vmatpush1.bf16.msra.mxu0 %v1749
    %1758 = vmatprep.subr.bf16.mxu0 0
    %1759 = vmatpush1.bf16.msra.mxu0 %v1750
    %1760 = vmatprep.subr.bf16.mxu0 0
    %1761 = vmatpush1.bf16.msra.mxu0 0
    %1762 = vmatprep.subr.bf16.mxu0 0
    %1763 = vmatpush1.bf16.msra.mxu0 0
    %1764 = vmatprep.subr.bf16.mxu0 0
    %1765 = vmatpush1.bf16.msra.mxu0 0
    %1766 = vmatprep.subr.bf16.mxu0 0
    %1767 = vmatpush1.bf16.msra.mxu0 0
    %1768 = vmatprep.subr.bf16.mxu0 0
    %1769 = vmatpush1.bf16.msra.mxu0 0
    %1770 = vmatprep.subr.bf16.mxu0 0
    %1771 = vmatpush1.bf16.msra.mxu0 0
    %1772 = vmatprep.subr.bf16.mxu0 0
    %1773 = vmatpush1.bf16.msra.mxu0 0
    %1774 = vmatprep.subr.bf16.mxu0 0
    %1775 = vmatpush1.bf16.msra.mxu0 0
    %1776 = vmatprep.subr.bf16.mxu0 0
    %1777 = vmatpush1.bf16.msra.mxu0 0
    %1778 = vmatprep.subr.bf16.mxu0 0
    %1779 = vmatpush1.bf16.msra.mxu0 0
    %1780 = vmatprep.subr.bf16.mxu0 0
    %1781 = vmatpush1.bf16.msra.mxu0 0
    %1782 = vmatprep.subr.bf16.mxu0 0
    %1783 = vmatpush1.bf16.msra.mxu0 0
    %1784 = vmatprep.subr.bf16.mxu0 0
    %1785 = vmatpush1.bf16.msra.mxu0 0
    %1786 = vmatprep.subr.bf16.mxu0 0
    %1787 = vmatpush1.bf16.msra.mxu0 0
    %1788 = vmatprep.mubr.bf16.mxu0 0
    %1789 = vmatmul.mubr.bf16.gmra.mrb[0].mxu0 %v1754
    %v1790 = vpop.f32.mrb[0].mxu0
    %v1791 = vadd.f32 0.0, %v1790
    %v1792 = vpop.f32.mrb[0].mxu0
    %v1793 = vpop.f32.mrb[0].mxu0
    %v1794 = vadd.f32 0.0, %v1793
    %v1795 = vpop.f32.mrb[0].mxu0
    %1796 = vdwg.mxu0
    %v1797 = vadd.f32 %v1122, %v1791
    %v1798 = vadd.f32 %v1123, %v1794
    %v1799 = vld [vmem:[%s61] sm:$0x1]
    %v1801 = vlaneseq
    %v1802 = vshrl.u32 %v1801, 7
    %v1803 = vsub.s32 0, %v1802
    %v1804 = vrot.slane %v1799, %v1803
    %v1806 = vadd.f32 %v1797, %v1804
    %v1807 = vadd.f32 %v1798, %v1804
    %v1808 = vpack.c.bf16 %v1807, %v1806
    %1809 = vmatprep.subr.bf16.mxu0 0
    %1810 = vmatpush1.bf16.msra.mxu0 %v1808
    %1811 = vmatprep.subr.bf16.mxu0 0
    %1812 = vmatpush1.bf16.msra.mxu0 0
    %1813 = vmatprep.subr.bf16.mxu0 0
    %1814 = vmatpush1.bf16.msra.mxu0 0
    %1815 = vmatprep.subr.bf16.mxu0 0
    %1816 = vmatpush1.bf16.msra.mxu0 0
    %1817 = vmatprep.subr.bf16.mxu0 0
    %1818 = vmatpush1.bf16.msra.mxu0 0
    %1819 = vmatprep.subr.bf16.mxu0 0
    %1820 = vmatpush1.bf16.msra.mxu0 0
    %1821 = vmatprep.subr.bf16.mxu0 0
    %1822 = vmatpush1.bf16.msra.mxu0 0
    %1823 = vmatprep.subr.bf16.mxu0 0
    %1824 = vmatpush1.bf16.msra.mxu0 0
    %1825 = vmatprep.subr.bf16.mxu0 0
    %1826 = vmatpush1.bf16.msra.mxu0 0
    %1827 = vmatprep.subr.bf16.mxu0 0
    %1828 = vmatpush1.bf16.msra.mxu0 0
    %1829 = vmatprep.subr.bf16.mxu0 0
    %1830 = vmatpush1.bf16.msra.mxu0 0
    %1831 = vmatprep.subr.bf16.mxu0 0
    %1832 = vmatpush1.bf16.msra.mxu0 0
    %1833 = vmatprep.subr.bf16.mxu0 0
    %1834 = vmatpush1.bf16.msra.mxu0 0
    %1835 = vmatprep.subr.bf16.mxu0 0
    %1836 = vmatpush1.bf16.msra.mxu0 0
    %1837 = vmatprep.subr.bf16.mxu0 0
    %1838 = vmatpush1.bf16.msra.mxu0 0
    %1839 = vmatprep.subr.bf16.mxu0 0
    %1840 = vmatpush1.bf16.msra.mxu0 0
    %1841 = vmatprep.mubr.bf16.mxu0 0
    %1842 = vmatmul.mubr.bf16.gmra.mrb[0].mxu0 %v764
    %v1843 = vpop.f32.mrb[0].mxu0
    %v1844 = vadd.f32 0.0, %v1843
    %v1845 = vpop.f32.mrb[0].mxu0
    %v1846 = vpop.f32.mrb[0].mxu0
    %v1847 = vadd.f32 0.0, %v1846
    %v1848 = vpop.f32.mrb[0].mxu0
    %1849 = vmatprep.mubr.bf16.mxu0 0
    %1850 = vmatmul.mubr.bf16.gmra.mrb[0].mxu0 %v767
    %v1851 = vpop.f32.mrb[0].mxu0
    %v1852 = vadd.f32 0.0, %v1851
    %v1853 = vpop.f32.mrb[0].mxu0
    %v1854 = vpop.f32.mrb[0].mxu0
    %v1855 = vadd.f32 0.0, %v1854
    %v1856 = vpop.f32.mrb[0].mxu0
    %1857 = vdwg.mxu0
    %1858 = vmatprep.subr.bf16.mxu0 0
    %1859 = vmatpush1.bf16.msra.mxu0 %v1808
    %1860 = vmatprep.subr.bf16.mxu0 0
    %1861 = vmatpush1.bf16.msra.mxu0 0
    %1862 = vmatprep.subr.bf16.mxu0 0
    %1863 = vmatpush1.bf16.msra.mxu0 0
    %1864 = vmatprep.subr.bf16.mxu0 0
    %1865 = vmatpush1.bf16.msra.mxu0 0
    %1866 = vmatprep.subr.bf16.mxu0 0
    %1867 = vmatpush1.bf16.msra.mxu0 0
    %1868 = vmatprep.subr.bf16.mxu0 0
    %1869 = vmatpush1.bf16.msra.mxu0 0
    %1870 = vmatprep.subr.bf16.mxu0 0
    %1871 = vmatpush1.bf16.msra.mxu0 0
    %1872 = vmatprep.subr.bf16.mxu0 0
    %1873 = vmatpush1.bf16.msra.mxu0 0
    %1874 = vmatprep.subr.bf16.mxu0 0
    %1875 = vmatpush1.bf16.msra.mxu0 0
    %1876 = vmatprep.subr.bf16.mxu0 0
    %1877 = vmatpush1.bf16.msra.mxu0 0
    %1878 = vmatprep.subr.bf16.mxu0 0
    %1879 = vmatpush1.bf16.msra.mxu0 0
    %1880 = vmatprep.subr.bf16.mxu0 0
    %1881 = vmatpush1.bf16.msra.mxu0 0
    %1882 = vmatprep.subr.bf16.mxu0 0
    %1883 = vmatpush1.bf16.msra.mxu0 0
    %1884 = vmatprep.subr.bf16.mxu0 0
    %1885 = vmatpush1.bf16.msra.mxu0 0
    %1886 = vmatprep.subr.bf16.mxu0 0
    %1887 = vmatpush1.bf16.msra.mxu0 0
    %1888 = vmatprep.subr.bf16.mxu0 0
    %1889 = vmatpush1.bf16.msra.mxu0 0
    %1890 = vmatprep.mubr.bf16.mxu0 0
    %1891 = vmatmul.mubr.bf16.gmra.mrb[0].mxu0 %v819
    %v1892 = vpop.f32.mrb[0].mxu0
    %v1893 = vadd.f32 %v1844, %v1892
    %v1894 = vpop.f32.mrb[0].mxu0
    %v1895 = vpop.f32.mrb[0].mxu0
    %v1896 = vadd.f32 %v1847, %v1895
    %v1897 = vpop.f32.mrb[0].mxu0
    %1898 = vmatprep.mubr.bf16.mxu0 0
    %1899 = vmatmul.mubr.bf16.gmra.mrb[0].mxu0 %v822
    %v1900 = vpop.f32.mrb[0].mxu0
    %v1901 = vadd.f32 %v1852, %v1900
    %v1902 = vpop.f32.mrb[0].mxu0
    %v1903 = vpop.f32.mrb[0].mxu0
    %v1904 = vadd.f32 %v1855, %v1903
    %v1905 = vpop.f32.mrb[0].mxu0
    %1906 = vdwg.mxu0
    %v1907 = vadd.f32 %v1893, %v466
    %v1908 = vadd.f32 %v1896, %v467
    %v1909 = vadd.f32 %v1901, %v468
    %v1910 = vadd.f32 %v1904, %v469
    %v1911 = vpack.c.bf16 %v1908, %v1907
    %v1912 = vpack.c.bf16 %v1910, %v1909
    %s1913 = scalar_lea.vmem %s35, 16
    %v1914 = vld [vmem:[%s1913] sm:$0xf]
    %v1915 = vld [vmem:[%s1913 + $0x4] sm:$0xf]
    %v1916 = vld [vmem:[%s1913 + $0x8] sm:$0xf]
    %v1917 = vld [vmem:[%s1913 + $0xc] sm:$0xf]
    %s1918 = scalar_lea.vmem %s37, 1
    %v1919 = vld [vmem:[%s1918] sm:$0x1]
    %v1921 = vlaneseq
    %v1922 = vshrl.u32 %v1921, 7
    %v1923 = vsub.s32 0, %v1922
    %v1924 = vrot.slane %v1919, %v1923
    %v1930 = vunpack.c.l.b16 %v1914
    %v1931 = vunpack.c.l.b16 %v1915
    %v1932 = vunpack.c.l.b16 %v1916
    %v1933 = vunpack.c.l.b16 %v1917
    %v1934 = vpack.c.b16 %v1931, %v1930
    %v1935 = vpack.c.b16 %v1933, %v1932
    %v1939 = vsel %vm164, %v1911, 0
    %v1942 = vsel %vm164, %v1912, 0
    %1944 = vmatprep.subr.bf16.mxu0 0
    %1945 = vmatpush1.bf16.msra.mxu0 %v1934
    %1946 = vmatprep.subr.bf16.mxu0 0
    %1947 = vmatpush1.bf16.msra.mxu0 %v1935
    %1948 = vmatprep.subr.bf16.mxu0 0
    %1949 = vmatpush1.bf16.msra.mxu0 0
    %1950 = vmatprep.subr.bf16.mxu0 0
    %1951 = vmatpush1.bf16.msra.mxu0 0
    %1952 = vmatprep.subr.bf16.mxu0 0
    %1953 = vmatpush1.bf16.msra.mxu0 0
    %1954 = vmatprep.subr.bf16.mxu0 0
    %1955 = vmatpush1.bf16.msra.mxu0 0
    %1956 = vmatprep.subr.bf16.mxu0 0
    %1957 = vmatpush1.bf16.msra.mxu0 0
    %1958 = vmatprep.subr.bf16.mxu0 0
    %1959 = vmatpush1.bf16.msra.mxu0 0
    %1960 = vmatprep.subr.bf16.mxu0 0
    %1961 = vmatpush1.bf16.msra.mxu0 0
    %1962 = vmatprep.subr.bf16.mxu0 0
    %1963 = vmatpush1.bf16.msra.mxu0 0
    %1964 = vmatprep.subr.bf16.mxu0 0
    %1965 = vmatpush1.bf16.msra.mxu0 0
    %1966 = vmatprep.subr.bf16.mxu0 0
    %1967 = vmatpush1.bf16.msra.mxu0 0
    %1968 = vmatprep.subr.bf16.mxu0 0
    %1969 = vmatpush1.bf16.msra.mxu0 0
    %1970 = vmatprep.subr.bf16.mxu0 0
    %1971 = vmatpush1.bf16.msra.mxu0 0
    %1972 = vmatprep.subr.bf16.mxu0 0
    %1973 = vmatpush1.bf16.msra.mxu0 0
    %1974 = vmatprep.subr.bf16.mxu0 0
    %1975 = vmatpush1.bf16.msra.mxu0 0
    %1976 = vmatprep.mubr.bf16.mxu0 0
    %1977 = vmatmul.mubr.bf16.gmra.mrb[0].mxu0 %v1939
    %v1978 = vpop.f32.mrb[0].mxu0
    %v1979 = vadd.f32 %v1924, %v1978
    %v1980 = vpop.f32.mrb[0].mxu0
    %v1981 = vpop.f32.mrb[0].mxu0
    %v1982 = vadd.f32 %v1924, %v1981
    %v1983 = vpop.f32.mrb[0].mxu0
    %1984 = vmatprep.mubr.bf16.mxu0 0
    %1985 = vmatmul.mubr.bf16.gmra.mrb[0].mxu0 %v1942
    %v1986 = vpop.f32.mrb[0].mxu0
    %v1987 = vadd.f32 %v1924, %v1986
    %v1988 = vpop.f32.mrb[0].mxu0
    %v1989 = vpop.f32.mrb[0].mxu0
    %v1990 = vadd.f32 %v1924, %v1989
    %v1991 = vpop.f32.mrb[0].mxu0
    %1992 = vdwg.mxu0
    %v1993 = vxor.u32 %v1979, 2147483648
    %v1994 = vxor.u32 %v1982, 2147483648
    %v1995 = vxor.u32 %v1987, 2147483648
    %v1996 = vxor.u32 %v1990, 2147483648
    %v1997 = vmul.f32 %v1993, 1.442695
    %v1998 = vpow.pop %v1997
    %v1999 = vmul.f32 %v1994, 1.442695
    %v2000 = vpow.pop %v1999
    %v2001 = vmul.f32 %v1995, 1.442695
    %v2002 = vpow.pop %v2001
    %v2003 = vmul.f32 %v1996, 1.442695
    %v2004 = vpow.pop %v2003
    %v2005 = vadd.f32 %v1998, 1.0
    %v2006 = vadd.f32 %v2000, 1.0
    %v2007 = vadd.f32 %v2002, 1.0
    %v2008 = vadd.f32 %v2004, 1.0
    %v2009 = vrcp.pop %v2005
    %v2010 = vmul.f32 1.0, %v2009
    %v2011 = vrcp.pop %v2006
    %v2012 = vmul.f32 1.0, %v2011
    %v2013 = vrcp.pop %v2007
    %v2014 = vmul.f32 1.0, %v2013
    %v2015 = vrcp.pop %v2008
    %v2016 = vmul.f32 1.0, %v2015
    %v2017 = vmul.f32 %v1979, %v2010
    %v2018 = vmul.f32 %v1982, %v2012
    %v2019 = vmul.f32 %v1987, %v2014
    %v2020 = vmul.f32 %v1990, %v2016
    %v2021 = vpack.c.bf16 %v2018, %v2017
    %v2022 = vpack.c.bf16 %v2020, %v2019
    %2023 = vmatprep.subr.bf16.mxu0 0
    %2024 = vmatpush1.bf16.msra.mxu0 %v2021
    %2025 = vmatprep.subr.bf16.mxu0 0
    %2026 = vmatpush1.bf16.msra.mxu0 %v2022
    %2027 = vmatprep.subr.bf16.mxu0 0
    %2028 = vmatpush1.bf16.msra.mxu0 0
    %2029 = vmatprep.subr.bf16.mxu0 0
    %2030 = vmatpush1.bf16.msra.mxu0 0
    %2031 = vmatprep.subr.bf16.mxu0 0
    %2032 = vmatpush1.bf16.msra.mxu0 0
    %2033 = vmatprep.subr.bf16.mxu0 0
    %2034 = vmatpush1.bf16.msra.mxu0 0
    %2035 = vmatprep.subr.bf16.mxu0 0
    %2036 = vmatpush1.bf16.msra.mxu0 0
    %2037 = vmatprep.subr.bf16.mxu0 0
    %2038 = vmatpush1.bf16.msra.mxu0 0
    %2039 = vmatprep.subr.bf16.mxu0 0
    %2040 = vmatpush1.bf16.msra.mxu0 0
    %2041 = vmatprep.subr.bf16.mxu0 0
    %2042 = vmatpush1.bf16.msra.mxu0 0
    %2043 = vmatprep.subr.bf16.mxu0 0
    %2044 = vmatpush1.bf16.msra.mxu0 0
    %2045 = vmatprep.subr.bf16.mxu0 0
    %2046 = vmatpush1.bf16.msra.mxu0 0
    %2047 = vmatprep.subr.bf16.mxu0 0
    %2048 = vmatpush1.bf16.msra.mxu0 0
    %2049 = vmatprep.subr.bf16.mxu0 0
    %2050 = vmatpush1.bf16.msra.mxu0 0
    %2051 = vmatprep.subr.bf16.mxu0 0
    %2052 = vmatpush1.bf16.msra.mxu0 0
    %2053 = vmatprep.subr.bf16.mxu0 0
    %2054 = vmatpush1.bf16.msra.mxu0 0
    %2055 = vmatprep.mubr.bf16.mxu0 0
    %2056 = vmatmul.mubr.bf16.gmra.mrb[0].mxu0 %v620
    %v2057 = vpop.f32.mrb[0].mxu0
    %v2058 = vadd.f32 0.0, %v2057
    %v2059 = vpop.f32.mrb[0].mxu0
    %v2060 = vpop.f32.mrb[0].mxu0
    %v2061 = vadd.f32 0.0, %v2060
    %v2062 = vpop.f32.mrb[0].mxu0
    %2063 = vdwg.mxu0
    %v2064 = vmul.f32 %v2058, %v1031
    %v2065 = vmul.f32 %v2061, %v1036
    %v2066 = vpack.c.bf16 %v2065, %v2064
    %s2067 = scalar_lea.vmem %s39, 16
    %v2068 = vld [vmem:[%s2067] sm:$0xf]
    %v2069 = vld [vmem:[%s2067 + $0x4] sm:$0xf]
    %v2070 = vld [vmem:[%s2067 + $0x8] sm:$0xf]
    %v2071 = vld [vmem:[%s2067 + $0xc] sm:$0xf]
    %s2072 = scalar_lea.vmem %s41, 1
    %v2073 = vld [vmem:[%s2072] sm:$0x1]
    %v2075 = vlaneseq
    %v2076 = vshrl.u32 %v2075, 7
    %v2077 = vsub.s32 0, %v2076
    %v2078 = vrot.slane %v2073, %v2077
    %v2084 = vunpack.c.l.b16 %v2068
    %v2085 = vunpack.c.l.b16 %v2069
    %v2086 = vunpack.c.l.b16 %v2070
    %v2087 = vunpack.c.l.b16 %v2071
    %v2088 = vpack.c.b16 %v2085, %v2084
    %v2089 = vpack.c.b16 %v2087, %v2086
    %v2093 = vsel %vm164, %v2066, 0
    %2095 = vmatprep.subr.bf16.mxu0 0
    %2096 = vmatpush1.bf16.msra.mxu0 %v2088
    %2097 = vmatprep.subr.bf16.mxu0 0
    %2098 = vmatpush1.bf16.msra.mxu0 %v2089
    %2099 = vmatprep.subr.bf16.mxu0 0
    %2100 = vmatpush1.bf16.msra.mxu0 0
    %2101 = vmatprep.subr.bf16.mxu0 0
    %2102 = vmatpush1.bf16.msra.mxu0 0
    %2103 = vmatprep.subr.bf16.mxu0 0
    %2104 = vmatpush1.bf16.msra.mxu0 0
    %2105 = vmatprep.subr.bf16.mxu0 0
    %2106 = vmatpush1.bf16.msra.mxu0 0
    %2107 = vmatprep.subr.bf16.mxu0 0
    %2108 = vmatpush1.bf16.msra.mxu0 0
    %2109 = vmatprep.subr.bf16.mxu0 0
    %2110 = vmatpush1.bf16.msra.mxu0 0
    %2111 = vmatprep.subr.bf16.mxu0 0
    %2112 = vmatpush1.bf16.msra.mxu0 0
    %2113 = vmatprep.subr.bf16.mxu0 0
    %2114 = vmatpush1.bf16.msra.mxu0 0
    %2115 = vmatprep.subr.bf16.mxu0 0
    %2116 = vmatpush1.bf16.msra.mxu0 0
    %2117 = vmatprep.subr.bf16.mxu0 0
    %2118 = vmatpush1.bf16.msra.mxu0 0
    %2119 = vmatprep.subr.bf16.mxu0 0
    %2120 = vmatpush1.bf16.msra.mxu0 0
    %2121 = vmatprep.subr.bf16.mxu0 0
    %2122 = vmatpush1.bf16.msra.mxu0 0
    %2123 = vmatprep.subr.bf16.mxu0 0
    %2124 = vmatpush1.bf16.msra.mxu0 0
    %2125 = vmatprep.subr.bf16.mxu0 0
    %2126 = vmatpush1.bf16.msra.mxu0 0
    %2127 = vmatprep.mubr.bf16.mxu0 0
    %2128 = vmatmul.mubr.bf16.gmra.mrb[0].mxu0 %v2093
    %v2129 = vpop.f32.mrb[0].mxu0
    %v2130 = vadd.f32 %v2078, %v2129
    %v2131 = vpop.f32.mrb[0].mxu0
    %v2132 = vpop.f32.mrb[0].mxu0
    %v2133 = vadd.f32 %v2078, %v2132
    %v2134 = vpop.f32.mrb[0].mxu0
    %2135 = vdwg.mxu0
    %v2136 = vxor.u32 %v2130, 2147483648
    %v2137 = vxor.u32 %v2133, 2147483648
    %v2138 = vmul.f32 %v2136, 1.442695
    %v2139 = vpow.pop %v2138
    %v2140 = vmul.f32 %v2137, 1.442695
    %v2141 = vpow.pop %v2140
    %v2142 = vadd.f32 %v2139, 1.0
    %v2143 = vadd.f32 %v2141, 1.0
    %v2144 = vrcp.pop %v2142
    %v2145 = vmul.f32 1.0, %v2144
    %v2146 = vrcp.pop %v2143
    %v2147 = vmul.f32 1.0, %v2146
    %v2148 = vmul.f32 %v2130, %v2145
    %v2149 = vmul.f32 %v2133, %v2147
    %v2150 = vadd.f32 %v1806, %v2148
    %v2151 = vadd.f32 %v1807, %v2149
    %s2152 = scalar_lea.vmem %s43, 1
    %v2153 = vld [vmem:[%s2152] sm:$0x1]
    %v2155 = vlaneseq
    %v2156 = vshrl.u32 %v2155, 7
    %v2157 = vsub.s32 0, %v2156
    %v2158 = vrot.slane %v2153, %v2157
    %v2160 = vmul.f32 %v2017, %v2158
    %v2161 = vmul.f32 %v2018, %v2158
    %v2162 = vmul.f32 %v2019, %v2158
    %v2163 = vmul.f32 %v2020, %v2158
    %v2164 = vsel %vm164, %v2160, 0.0
    %2165 = vadd.xlane.f32.xlu0 %v2164
    %v2166 = vpop.xlane.xlu0 %2165
    %v2167 = vsel %vm164, %v2161, 0.0
    %2168 = vadd.xlane.f32.xlu0 %v2167
    %v2169 = vpop.xlane.xlu0 %2168
    %v2170 = vsel %vm164, %v2162, 0.0
    %2171 = vadd.xlane.f32.xlu0 %v2170
    %v2172 = vpop.xlane.xlu0 %2171
    %v2173 = vsel %vm164, %v2163, 0.0
    %2174 = vadd.xlane.f32.xlu0 %v2173
    %v2175 = vpop.xlane.xlu0 %2174
    %s2176 = scalar_lea.vmem %s45, 1
    %v2177 = vld [vmem:[%s2176] sm:$0x1]
    %v2179 = vlaneseq
    %v2180 = vshrl.u32 %v2179, 7
    %v2181 = vsub.s32 0, %v2180
    %v2182 = vrot.slane %v2177, %v2181
    %v2184 = vadd.f32 %v2166, %v2182
    %v2185 = vadd.f32 %v2169, %v2182
    %v2186 = vadd.f32 %v2172, %v2182
    %v2187 = vadd.f32 %v2175, %v2182
    %v2188 = vxor.u32 %v2184, 2147483648
    %v2189 = vxor.u32 %v2185, 2147483648
    %v2190 = vxor.u32 %v2186, 2147483648
    %v2191 = vxor.u32 %v2187, 2147483648
    %v2192 = vmul.f32 %v2188, 1.442695
    %v2193 = vpow.pop %v2192
    %v2194 = vmul.f32 %v2189, 1.442695
    %v2195 = vpow.pop %v2194
    %v2196 = vmul.f32 %v2190, 1.442695
    %v2197 = vpow.pop %v2196
    %v2198 = vmul.f32 %v2191, 1.442695
    %v2199 = vpow.pop %v2198
    %v2200 = vadd.f32 %v2193, 1.0
    %v2201 = vadd.f32 %v2195, 1.0
    %v2202 = vadd.f32 %v2197, 1.0
    %v2203 = vadd.f32 %v2199, 1.0
    %v2204 = vrcp.pop %v2200
    %v2205 = vmul.f32 1.0, %v2204
    %v2206 = vrcp.pop %v2201
    %v2207 = vmul.f32 1.0, %v2206
    %v2208 = vrcp.pop %v2202
    %v2209 = vmul.f32 1.0, %v2208
    %v2210 = vrcp.pop %v2203
    %v2211 = vmul.f32 1.0, %v2210
    %2213 = vset.pattern.permute.xlu0 0
    %2214 = vperm.xlu0 %2213, %v2205
    %v2215 = vpop.permute.xlu0 %2214
    %2218 = vset.pattern.permute.xlu0 0
    %2219 = vperm.xlu0 %2218, %v2207
    %v2220 = vpop.permute.xlu0 %2219
    %2223 = vset.pattern.permute.xlu0 0
    %2224 = vperm.xlu0 %2223, %v2209
    %v2225 = vpop.permute.xlu0 %2224
    %2228 = vset.pattern.permute.xlu0 0
    %2229 = vperm.xlu0 %2228, %v2211
    %v2230 = vpop.permute.xlu0 %2229
    %v2232 = vmul.f32 %v2215, %v477
    %v2233 = vmul.f32 %v2220, %v478
    %v2234 = vmul.f32 %v2225, %v479
    %v2235 = vmul.f32 %v2230, %v480
    %v2236 = vpack.c.bf16 %v2233, %v2232
    %v2237 = vpack.c.bf16 %v2235, %v2234
    %2238 = vmatprep.subr.bf16.mxu0 0
    %2239 = vmatpush1.bf16.msra.mxu0 %v2236
    %2240 = vmatprep.subr.bf16.mxu0 0
    %2241 = vmatpush1.bf16.msra.mxu0 %v2237
    %2242 = vmatprep.subr.bf16.mxu0 0
    %2243 = vmatpush1.bf16.msra.mxu0 0
    %2244 = vmatprep.subr.bf16.mxu0 0
    %2245 = vmatpush1.bf16.msra.mxu0 0
    %2246 = vmatprep.subr.bf16.mxu0 0
    %2247 = vmatpush1.bf16.msra.mxu0 0
    %2248 = vmatprep.subr.bf16.mxu0 0
    %2249 = vmatpush1.bf16.msra.mxu0 0
    %2250 = vmatprep.subr.bf16.mxu0 0
    %2251 = vmatpush1.bf16.msra.mxu0 0
    %2252 = vmatprep.subr.bf16.mxu0 0
    %2253 = vmatpush1.bf16.msra.mxu0 0
    %2254 = vmatprep.subr.bf16.mxu0 0
    %2255 = vmatpush1.bf16.msra.mxu0 0
    %2256 = vmatprep.subr.bf16.mxu0 0
    %2257 = vmatpush1.bf16.msra.mxu0 0
    %2258 = vmatprep.subr.bf16.mxu0 0
    %2259 = vmatpush1.bf16.msra.mxu0 0
    %2260 = vmatprep.subr.bf16.mxu0 0
    %2261 = vmatpush1.bf16.msra.mxu0 0
    %2262 = vmatprep.subr.bf16.mxu0 0
    %2263 = vmatpush1.bf16.msra.mxu0 0
    %2264 = vmatprep.subr.bf16.mxu0 0
    %2265 = vmatpush1.bf16.msra.mxu0 0
    %2266 = vmatprep.subr.bf16.mxu0 0
    %2267 = vmatpush1.bf16.msra.mxu0 0
    %2268 = vmatprep.subr.bf16.mxu0 0
    %2269 = vmatpush1.bf16.msra.mxu0 0
    %2270 = vmatprep.mubr.bf16.mxu0 0
    %2271 = vmatmul.mubr.bf16.gmra.mrb[0].mxu0 %v620
    %v2272 = vpop.f32.mrb[0].mxu0
    %v2273 = vadd.f32 0.0, %v2272
    %v2274 = vpop.f32.mrb[0].mxu0
    %v2275 = vpop.f32.mrb[0].mxu0
    %v2276 = vadd.f32 0.0, %v2275
    %v2277 = vpop.f32.mrb[0].mxu0
    %2278 = vdwg.mxu0
    %v2279 = vmul.f32 %v2273, %v1031
    %v2280 = vmul.f32 %v2276, %v1036
    %v2281 = vadd.f32 %v1251, %v2279
    %v2282 = vadd.f32 %v1252, %v2280
    %v2283 = vpack.c.bf16 %v2151, %v2150
    %s2284 = scalar_lea.vmem %s47, 16
    %v2285 = vld [vmem:[%s2284] sm:$0xf]
    %v2286 = vld [vmem:[%s2284 + $0x4] sm:$0xf]
    %v2287 = vld [vmem:[%s2284 + $0x8] sm:$0xf]
    %v2288 = vld [vmem:[%s2284 + $0xc] sm:$0xf]
    %s2289 = scalar_lea.vmem %s55, 1
    %v2290 = vld [vmem:[%s2289] sm:$0x1]
    %v2292 = vlaneseq
    %v2293 = vshrl.u32 %v2292, 7
    %v2294 = vsub.s32 0, %v2293
    %v2295 = vrot.slane %v2290, %v2294
    %v2301 = vunpack.c.l.b16 %v2285
    %v2302 = vunpack.c.l.b16 %v2286
    %v2303 = vunpack.c.l.b16 %v2287
    %v2304 = vunpack.c.l.b16 %v2288
    %v2305 = vpack.c.b16 %v2302, %v2301
    %v2306 = vpack.c.b16 %v2304, %v2303
    %v2310 = vsel %vm164, %v2283, 0
    %2312 = vmatprep.subr.bf16.mxu0 0
    %2313 = vmatpush1.bf16.msra.mxu0 %v2305
    %2314 = vmatprep.subr.bf16.mxu0 0
    %2315 = vmatpush1.bf16.msra.mxu0 %v2306
    %2316 = vmatprep.subr.bf16.mxu0 0
    %2317 = vmatpush1.bf16.msra.mxu0 0
    %2318 = vmatprep.subr.bf16.mxu0 0
    %2319 = vmatpush1.bf16.msra.mxu0 0
    %2320 = vmatprep.subr.bf16.mxu0 0
    %2321 = vmatpush1.bf16.msra.mxu0 0
    %2322 = vmatprep.subr.bf16.mxu0 0
    %2323 = vmatpush1.bf16.msra.mxu0 0
    %2324 = vmatprep.subr.bf16.mxu0 0
    %2325 = vmatpush1.bf16.msra.mxu0 0
    %2326 = vmatprep.subr.bf16.mxu0 0
    %2327 = vmatpush1.bf16.msra.mxu0 0
    %2328 = vmatprep.subr.bf16.mxu0 0
    %2329 = vmatpush1.bf16.msra.mxu0 0
    %2330 = vmatprep.subr.bf16.mxu0 0
    %2331 = vmatpush1.bf16.msra.mxu0 0
    %2332 = vmatprep.subr.bf16.mxu0 0
    %2333 = vmatpush1.bf16.msra.mxu0 0
    %2334 = vmatprep.subr.bf16.mxu0 0
    %2335 = vmatpush1.bf16.msra.mxu0 0
    %2336 = vmatprep.subr.bf16.mxu0 0
    %2337 = vmatpush1.bf16.msra.mxu0 0
    %2338 = vmatprep.subr.bf16.mxu0 0
    %2339 = vmatpush1.bf16.msra.mxu0 0
    %2340 = vmatprep.subr.bf16.mxu0 0
    %2341 = vmatpush1.bf16.msra.mxu0 0
    %2342 = vmatprep.subr.bf16.mxu0 0
    %2343 = vmatpush1.bf16.msra.mxu0 0
    %2344 = vmatprep.mubr.bf16.mxu0 0
    %2345 = vmatmul.mubr.bf16.gmra.mrb[0].mxu0 %v2310
    %v2346 = vpop.f32.mrb[0].mxu0
    %v2347 = vadd.f32 %v2295, %v2346
    %v2348 = vpop.f32.mrb[0].mxu0
    %v2349 = vpop.f32.mrb[0].mxu0
    %v2350 = vadd.f32 %v2295, %v2349
    %v2351 = vpop.f32.mrb[0].mxu0
    %2352 = vdwg.mxu0
    %s2353 = scalar_lea.vmem %s49, 16
    %v2354 = vld [vmem:[%s2353] sm:$0xf]
    %v2355 = vld [vmem:[%s2353 + $0x4] sm:$0xf]
    %v2356 = vld [vmem:[%s2353 + $0x8] sm:$0xf]
    %v2357 = vld [vmem:[%s2353 + $0xc] sm:$0xf]
    %s2358 = scalar_lea.vmem %s57, 1
    %v2359 = vld [vmem:[%s2358] sm:$0x1]
    %v2361 = vlaneseq
    %v2362 = vshrl.u32 %v2361, 7
    %v2363 = vsub.s32 0, %v2362
    %v2364 = vrot.slane %v2359, %v2363
    %v2370 = vunpack.c.l.b16 %v2354
    %v2371 = vunpack.c.l.b16 %v2355
    %v2372 = vunpack.c.l.b16 %v2356
    %v2373 = vunpack.c.l.b16 %v2357
    %v2374 = vpack.c.b16 %v2371, %v2370
    %v2375 = vpack.c.b16 %v2373, %v2372
    %2378 = vmatprep.subr.bf16.mxu0 0
    %2379 = vmatpush1.bf16.msra.mxu0 %v2374
    %2380 = vmatprep.subr.bf16.mxu0 0
    %2381 = vmatpush1.bf16.msra.mxu0 %v2375
    %2382 = vmatprep.subr.bf16.mxu0 0
    %2383 = vmatpush1.bf16.msra.mxu0 0
    %2384 = vmatprep.subr.bf16.mxu0 0
    %2385 = vmatpush1.bf16.msra.mxu0 0
    %2386 = vmatprep.subr.bf16.mxu0 0
    %2387 = vmatpush1.bf16.msra.mxu0 0
    %2388 = vmatprep.subr.bf16.mxu0 0
    %2389 = vmatpush1.bf16.msra.mxu0 0
    %2390 = vmatprep.subr.bf16.mxu0 0
    %2391 = vmatpush1.bf16.msra.mxu0 0
    %2392 = vmatprep.subr.bf16.mxu0 0
    %2393 = vmatpush1.bf16.msra.mxu0 0
    %2394 = vmatprep.subr.bf16.mxu0 0
    %2395 = vmatpush1.bf16.msra.mxu0 0
    %2396 = vmatprep.subr.bf16.mxu0 0
    %2397 = vmatpush1.bf16.msra.mxu0 0
    %2398 = vmatprep.subr.bf16.mxu0 0
    %2399 = vmatpush1.bf16.msra.mxu0 0
    %2400 = vmatprep.subr.bf16.mxu0 0
    %2401 = vmatpush1.bf16.msra.mxu0 0
    %2402 = vmatprep.subr.bf16.mxu0 0
    %2403 = vmatpush1.bf16.msra.mxu0 0
    %2404 = vmatprep.subr.bf16.mxu0 0
    %2405 = vmatpush1.bf16.msra.mxu0 0
    %2406 = vmatprep.subr.bf16.mxu0 0
    %2407 = vmatpush1.bf16.msra.mxu0 0
    %2408 = vmatprep.subr.bf16.mxu0 0
    %2409 = vmatpush1.bf16.msra.mxu0 0
    %2410 = vmatprep.mubr.bf16.mxu0 0
    %2411 = vmatmul.mubr.bf16.gmra.mrb[0].mxu0 %v2310
    %v2412 = vpop.f32.mrb[0].mxu0
    %v2413 = vadd.f32 %v2364, %v2412
    %v2414 = vpop.f32.mrb[0].mxu0
    %v2415 = vpop.f32.mrb[0].mxu0
    %v2416 = vadd.f32 %v2364, %v2415
    %v2417 = vpop.f32.mrb[0].mxu0
    %2418 = vdwg.mxu0
    %s2419 = scalar_lea.vmem %s51, 16
    %v2420 = vld [vmem:[%s2419] sm:$0xf]
    %v2421 = vld [vmem:[%s2419 + $0x4] sm:$0xf]
    %v2422 = vld [vmem:[%s2419 + $0x8] sm:$0xf]
    %v2423 = vld [vmem:[%s2419 + $0xc] sm:$0xf]
    %s2424 = scalar_lea.vmem %s59, 1
    %v2425 = vld [vmem:[%s2424] sm:$0x1]
    %v2427 = vlaneseq
    %v2428 = vshrl.u32 %v2427, 7
    %v2429 = vsub.s32 0, %v2428
    %v2430 = vrot.slane %v2425, %v2429
    %v2436 = vunpack.c.l.b16 %v2420
    %v2437 = vunpack.c.l.b16 %v2421
    %v2438 = vunpack.c.l.b16 %v2422
    %v2439 = vunpack.c.l.b16 %v2423
    %v2440 = vpack.c.b16 %v2437, %v2436
    %v2441 = vpack.c.b16 %v2439, %v2438
    %2444 = vmatprep.subr.bf16.mxu0 0
    %2445 = vmatpush1.bf16.msra.mxu0 %v2440
    %2446 = vmatprep.subr.bf16.mxu0 0
    %2447 = vmatpush1.bf16.msra.mxu0 %v2441
    %2448 = vmatprep.subr.bf16.mxu0 0
    %2449 = vmatpush1.bf16.msra.mxu0 0
    %2450 = vmatprep.subr.bf16.mxu0 0
    %2451 = vmatpush1.bf16.msra.mxu0 0
    %2452 = vmatprep.subr.bf16.mxu0 0
    %2453 = vmatpush1.bf16.msra.mxu0 0
    %2454 = vmatprep.subr.bf16.mxu0 0
    %2455 = vmatpush1.bf16.msra.mxu0 0
    %2456 = vmatprep.subr.bf16.mxu0 0
    %2457 = vmatpush1.bf16.msra.mxu0 0
    %2458 = vmatprep.subr.bf16.mxu0 0
    %2459 = vmatpush1.bf16.msra.mxu0 0
    %2460 = vmatprep.subr.bf16.mxu0 0
    %2461 = vmatpush1.bf16.msra.mxu0 0
    %2462 = vmatprep.subr.bf16.mxu0 0
    %2463 = vmatpush1.bf16.msra.mxu0 0
    %2464 = vmatprep.subr.bf16.mxu0 0
    %2465 = vmatpush1.bf16.msra.mxu0 0
    %2466 = vmatprep.subr.bf16.mxu0 0
    %2467 = vmatpush1.bf16.msra.mxu0 0
    %2468 = vmatprep.subr.bf16.mxu0 0
    %2469 = vmatpush1.bf16.msra.mxu0 0
    %2470 = vmatprep.subr.bf16.mxu0 0
    %2471 = vmatpush1.bf16.msra.mxu0 0
    %2472 = vmatprep.subr.bf16.mxu0 0
    %2473 = vmatpush1.bf16.msra.mxu0 0
    %2474 = vmatprep.subr.bf16.mxu0 0
    %2475 = vmatpush1.bf16.msra.mxu0 0
    %2476 = vmatprep.mubr.bf16.mxu0 0
    %2477 = vmatmul.mubr.bf16.gmra.mrb[0].mxu0 %v2310
    %v2478 = vpop.f32.mrb[0].mxu0
    %v2479 = vadd.f32 %v2430, %v2478
    %v2480 = vpop.f32.mrb[0].mxu0
    %v2481 = vpop.f32.mrb[0].mxu0
    %v2482 = vadd.f32 %v2430, %v2481
    %v2483 = vpop.f32.mrb[0].mxu0
    %2484 = vdwg.mxu0
    %v2485 = vmul.f32 %v2347, %v746
    %v2486 = vmul.f32 %v2350, %v746
    %v2487 = vmul.f32 %v2347, %v751
    %v2488 = vmul.f32 %v2350, %v751
    %v2489 = vmul.f32 %v2347, %v756
    %v2490 = vmul.f32 %v2350, %v756
    %v2491 = vmul.f32 %v2347, %v761
    %v2492 = vmul.f32 %v2350, %v761
    %v2493 = vpack.c.bf16 %v2486, %v2485
    %v2494 = vpack.c.bf16 %v2488, %v2487
    %v2495 = vpack.c.bf16 %v2490, %v2489
    %v2496 = vpack.c.bf16 %v2492, %v2491
    %v2497 = vpack.c.bf16 %v2416, %v2413
    %v2499 = vsel %vm164, %v2493, 0
    %v2502 = vsel %vm164, %v2494, 0
    %v2505 = vsel %vm164, %v2495, 0
    %v2508 = vsel %vm164, %v2496, 0
    %v2511 = vsel %vm164, %v2497, 0
    %2513 = vmatprep.subr.bf16.mxu0 0
    %2514 = vmatpush1.bf16.xpose.msra.mxu0 %v2511
    %2515 = vmatprep.subr.bf16.mxu0 0
    %2516 = vmatpush1.bf16.xpose.msra.mxu0 0
    %2517 = vmatprep.subr.bf16.mxu0 0
    %2518 = vmatpush1.bf16.xpose.msra.mxu0 0
    %2519 = vmatprep.subr.bf16.mxu0 0
    %2520 = vmatpush1.bf16.xpose.msra.mxu0 0
    %2521 = vmatprep.subr.bf16.mxu0 0
    %2522 = vmatpush1.bf16.xpose.msra.mxu0 0
    %2523 = vmatprep.subr.bf16.mxu0 0
    %2524 = vmatpush1.bf16.xpose.msra.mxu0 0
    %2525 = vmatprep.subr.bf16.mxu0 0
    %2526 = vmatpush1.bf16.xpose.msra.mxu0 0
    %2527 = vmatprep.subr.bf16.mxu0 0
    %2528 = vmatpush1.bf16.xpose.msra.mxu0 0
    %2529 = vmatprep.subr.bf16.mxu0 0
    %2530 = vmatpush1.bf16.xpose.msra.mxu0 0
    %2531 = vmatprep.subr.bf16.mxu0 0
    %2532 = vmatpush1.bf16.xpose.msra.mxu0 0
    %2533 = vmatprep.subr.bf16.mxu0 0
    %2534 = vmatpush1.bf16.xpose.msra.mxu0 0
    %2535 = vmatprep.subr.bf16.mxu0 0
    %2536 = vmatpush1.bf16.xpose.msra.mxu0 0
    %2537 = vmatprep.subr.bf16.mxu0 0
    %2538 = vmatpush1.bf16.xpose.msra.mxu0 0
    %2539 = vmatprep.subr.bf16.mxu0 0
    %2540 = vmatpush1.bf16.xpose.msra.mxu0 0
    %2541 = vmatprep.subr.bf16.mxu0 0
    %2542 = vmatpush1.bf16.xpose.msra.mxu0 0
    %2543 = vmatprep.subr.bf16.mxu0 0
    %2544 = vmatpush1.bf16.xpose.msra.mxu0 0
    %2545 = vmatprep.mubr.bf16.mxu0 0
    %2546 = vmatmul.mubr.bf16.gmra.mrb[0].mxu0 %v2499
    %v2547 = vpop.f32.mrb[0].mxu0
    %v2548 = vadd.f32 0.0, %v2547
    %v2549 = vpop.f32.mrb[0].mxu0
    %v2550 = vpop.f32.mrb[0].mxu0
    %v2551 = vadd.f32 0.0, %v2550
    %v2552 = vpop.f32.mrb[0].mxu0
    %2553 = vmatprep.mubr.bf16.mxu0 0
    %2554 = vmatmul.mubr.bf16.gmra.mrb[0].mxu0 %v2502
    %v2555 = vpop.f32.mrb[0].mxu0
    %v2556 = vadd.f32 0.0, %v2555
    %v2557 = vpop.f32.mrb[0].mxu0
    %v2558 = vpop.f32.mrb[0].mxu0
    %v2559 = vadd.f32 0.0, %v2558
    %v2560 = vpop.f32.mrb[0].mxu0
    %2561 = vmatprep.mubr.bf16.mxu0 0
    %2562 = vmatmul.mubr.bf16.gmra.mrb[0].mxu0 %v2505
    %v2563 = vpop.f32.mrb[0].mxu0
    %v2564 = vadd.f32 0.0, %v2563
    %v2565 = vpop.f32.mrb[0].mxu0
    %v2566 = vpop.f32.mrb[0].mxu0
    %v2567 = vadd.f32 0.0, %v2566
    %v2568 = vpop.f32.mrb[0].mxu0
    %2569 = vmatprep.mubr.bf16.mxu0 0
    %2570 = vmatmul.mubr.bf16.gmra.mrb[0].mxu0 %v2508
    %v2571 = vpop.f32.mrb[0].mxu0
    %v2572 = vadd.f32 0.0, %v2571
    %v2573 = vpop.f32.mrb[0].mxu0
    %v2574 = vpop.f32.mrb[0].mxu0
    %v2575 = vadd.f32 0.0, %v2574
    %v2576 = vpop.f32.mrb[0].mxu0
    %2577 = vdwg.mxu0
    %v2578 = vmul.f32 %v2548, 0.35355338
    %v2579 = vmul.f32 %v2551, 0.35355338
    %v2580 = vmul.f32 %v2556, 0.35355338
    %v2581 = vmul.f32 %v2559, 0.35355338
    %v2582 = vmul.f32 %v2564, 0.35355338
    %v2583 = vmul.f32 %v2567, 0.35355338
    %v2584 = vmul.f32 %v2572, 0.35355338
    %v2585 = vmul.f32 %v2575, 0.35355338
    %v2586 = vsel %vm288, %v2578, -inf
    %2587 = vmax.xlane.f32.xlu0 %v2586
    %v2588 = vpop.xlane.xlu0 %2587
    %v2589 = vsel %vm288, %v2579, -inf
    %2590 = vmax.xlane.f32.xlu0 %v2589
    %v2591 = vpop.xlane.xlu0 %2590
    %v2592 = vsel %vm288, %v2580, -inf
    %2593 = vmax.xlane.f32.xlu0 %v2592
    %v2594 = vpop.xlane.xlu0 %2593
    %v2595 = vsel %vm288, %v2581, -inf
    %2596 = vmax.xlane.f32.xlu0 %v2595
    %v2597 = vpop.xlane.xlu0 %2596
    %v2598 = vsel %vm288, %v2582, -inf
    %2599 = vmax.xlane.f32.xlu0 %v2598
    %v2600 = vpop.xlane.xlu0 %2599
    %v2601 = vsel %vm288, %v2583, -inf
    %2602 = vmax.xlane.f32.xlu0 %v2601
    %v2603 = vpop.xlane.xlu0 %2602
    %v2604 = vsel %vm288, %v2584, -inf
    %2605 = vmax.xlane.f32.xlu0 %v2604
    %v2606 = vpop.xlane.xlu0 %2605
    %v2607 = vsel %vm288, %v2585, -inf
    %2608 = vmax.xlane.f32.xlu0 %v2607
    %v2609 = vpop.xlane.xlu0 %2608
    %v2610 = vsub.f32 %v2578, %v2588
    %v2611 = vsub.f32 %v2579, %v2591
    %v2612 = vsub.f32 %v2580, %v2594
    %v2613 = vsub.f32 %v2581, %v2597
    %v2614 = vsub.f32 %v2582, %v2600
    %v2615 = vsub.f32 %v2583, %v2603
    %v2616 = vsub.f32 %v2584, %v2606
    %v2617 = vsub.f32 %v2585, %v2609
    %v2618 = vmul.f32 %v2610, 1.442695
    %v2619 = vpow.pop %v2618
    %v2620 = vmul.f32 %v2611, 1.442695
    %v2621 = vpow.pop %v2620
    %v2622 = vmul.f32 %v2612, 1.442695
    %v2623 = vpow.pop %v2622
    %v2624 = vmul.f32 %v2613, 1.442695
    %v2625 = vpow.pop %v2624
    %v2626 = vmul.f32 %v2614, 1.442695
    %v2627 = vpow.pop %v2626
    %v2628 = vmul.f32 %v2615, 1.442695
    %v2629 = vpow.pop %v2628
    %v2630 = vmul.f32 %v2616, 1.442695
    %v2631 = vpow.pop %v2630
    %v2632 = vmul.f32 %v2617, 1.442695
    %v2633 = vpow.pop %v2632
    %v2634 = vsel %vm288, %v2619, 0.0
    %2635 = vadd.xlane.f32.xlu0 %v2634
    %v2636 = vpop.xlane.xlu0 %2635
    %v2637 = vsel %vm288, %v2621, 0.0
    %2638 = vadd.xlane.f32.xlu0 %v2637
    %v2639 = vpop.xlane.xlu0 %2638
    %v2640 = vsel %vm288, %v2623, 0.0
    %2641 = vadd.xlane.f32.xlu0 %v2640
    %v2642 = vpop.xlane.xlu0 %2641
    %v2643 = vsel %vm288, %v2625, 0.0
    %2644 = vadd.xlane.f32.xlu0 %v2643
    %v2645 = vpop.xlane.xlu0 %2644
    %v2646 = vsel %vm288, %v2627, 0.0
    %2647 = vadd.xlane.f32.xlu0 %v2646
    %v2648 = vpop.xlane.xlu0 %2647
    %v2649 = vsel %vm288, %v2629, 0.0
    %2650 = vadd.xlane.f32.xlu0 %v2649
    %v2651 = vpop.xlane.xlu0 %2650
    %v2652 = vsel %vm288, %v2631, 0.0
    %2653 = vadd.xlane.f32.xlu0 %v2652
    %v2654 = vpop.xlane.xlu0 %2653
    %v2655 = vsel %vm288, %v2633, 0.0
    %2656 = vadd.xlane.f32.xlu0 %v2655
    %v2657 = vpop.xlane.xlu0 %2656
    %v2658 = vrcp.pop %v2636
    %v2659 = vrcp.pop %v2639
    %v2660 = vrcp.pop %v2642
    %v2661 = vrcp.pop %v2645
    %v2662 = vrcp.pop %v2648
    %v2663 = vrcp.pop %v2651
    %v2664 = vrcp.pop %v2654
    %v2665 = vrcp.pop %v2657
    %v2666 = vmul.f32 %v2619, %v2658
    %v2667 = vmul.f32 %v2621, %v2659
    %v2668 = vmul.f32 %v2623, %v2660
    %v2669 = vmul.f32 %v2625, %v2661
    %v2670 = vmul.f32 %v2627, %v2662
    %v2671 = vmul.f32 %v2629, %v2663
    %v2672 = vmul.f32 %v2631, %v2664
    %v2673 = vmul.f32 %v2633, %v2665
    %v2674 = vpack.c.bf16 %v2667, %v2666
    %v2675 = vpack.c.bf16 %v2669, %v2668
    %v2676 = vpack.c.bf16 %v2671, %v2670
    %v2677 = vpack.c.bf16 %v2673, %v2672
    %v2678 = vpack.c.bf16 %v2482, %v2479
    %v2680 = vsel %vm288, %v2674, 0
    %v2683 = vsel %vm288, %v2675, 0
    %v2686 = vsel %vm288, %v2676, 0
    %v2689 = vsel %vm288, %v2677, 0
    %2691 = vmatprep.subr.bf16.mxu0 0
    %2692 = vmatpush1.bf16.msra.mxu0 %v2678
    %2693 = vmatprep.subr.bf16.mxu0 0
    %2694 = vmatpush1.bf16.msra.mxu0 0
    %2695 = vmatprep.subr.bf16.mxu0 0
    %2696 = vmatpush1.bf16.msra.mxu0 0
    %2697 = vmatprep.subr.bf16.mxu0 0
    %2698 = vmatpush1.bf16.msra.mxu0 0
    %2699 = vmatprep.subr.bf16.mxu0 0
    %2700 = vmatpush1.bf16.msra.mxu0 0
    %2701 = vmatprep.subr.bf16.mxu0 0
    %2702 = vmatpush1.bf16.msra.mxu0 0
    %2703 = vmatprep.subr.bf16.mxu0 0
    %2704 = vmatpush1.bf16.msra.mxu0 0
    %2705 = vmatprep.subr.bf16.mxu0 0
    %2706 = vmatpush1.bf16.msra.mxu0 0
    %2707 = vmatprep.subr.bf16.mxu0 0
    %2708 = vmatpush1.bf16.msra.mxu0 0
    %2709 = vmatprep.subr.bf16.mxu0 0
    %2710 = vmatpush1.bf16.msra.mxu0 0
    %2711 = vmatprep.subr.bf16.mxu0 0
    %2712 = vmatpush1.bf16.msra.mxu0 0
    %2713 = vmatprep.subr.bf16.mxu0 0
    %2714 = vmatpush1.bf16.msra.mxu0 0
    %2715 = vmatprep.subr.bf16.mxu0 0
    %2716 = vmatpush1.bf16.msra.mxu0 0
    %2717 = vmatprep.subr.bf16.mxu0 0
    %2718 = vmatpush1.bf16.msra.mxu0 0
    %2719 = vmatprep.subr.bf16.mxu0 0
    %2720 = vmatpush1.bf16.msra.mxu0 0
    %2721 = vmatprep.subr.bf16.mxu0 0
    %2722 = vmatpush1.bf16.msra.mxu0 0
    %2723 = vmatprep.mubr.bf16.mxu0 0
    %2724 = vmatmul.mubr.bf16.gmra.mrb[0].mxu0 %v2680
    %v2725 = vpop.f32.mrb[0].mxu0
    %v2726 = vadd.f32 0.0, %v2725
    %v2727 = vpop.f32.mrb[0].mxu0
    %v2728 = vpop.f32.mrb[0].mxu0
    %v2729 = vadd.f32 0.0, %v2728
    %v2730 = vpop.f32.mrb[0].mxu0
    %2731 = vmatprep.mubr.bf16.mxu0 0
    %2732 = vmatmul.mubr.bf16.gmra.mrb[0].mxu0 %v2683
    %v2733 = vpop.f32.mrb[0].mxu0
    %v2734 = vadd.f32 0.0, %v2733
    %v2735 = vpop.f32.mrb[0].mxu0
    %v2736 = vpop.f32.mrb[0].mxu0
    %v2737 = vadd.f32 0.0, %v2736
    %v2738 = vpop.f32.mrb[0].mxu0
    %2739 = vmatprep.mubr.bf16.mxu0 0
    %2740 = vmatmul.mubr.bf16.gmra.mrb[0].mxu0 %v2686
    %v2741 = vpop.f32.mrb[0].mxu0
    %v2742 = vadd.f32 0.0, %v2741
    %v2743 = vpop.f32.mrb[0].mxu0
    %v2744 = vpop.f32.mrb[0].mxu0
    %v2745 = vadd.f32 0.0, %v2744
    %v2746 = vpop.f32.mrb[0].mxu0
    %2747 = vmatprep.mubr.bf16.mxu0 0
    %2748 = vmatmul.mubr.bf16.gmra.mrb[0].mxu0 %v2689
    %v2749 = vpop.f32.mrb[0].mxu0
    %v2750 = vadd.f32 0.0, %v2749
    %v2751 = vpop.f32.mrb[0].mxu0
    %v2752 = vpop.f32.mrb[0].mxu0
    %v2753 = vadd.f32 0.0, %v2752
    %v2754 = vpop.f32.mrb[0].mxu0
    %2755 = vdwg.mxu0
    %v2756 = vmul.f32 %v2726, %v746
    %v2757 = vmul.f32 %v2729, %v746
    %v2758 = vadd.f32 %v2756, 0.0
    %v2759 = vadd.f32 %v2757, 0.0
    %v2760 = vmul.f32 %v2734, %v751
    %v2761 = vmul.f32 %v2737, %v751
    %v2762 = vadd.f32 %v2758, %v2760
    %v2763 = vadd.f32 %v2759, %v2761
    %v2764 = vmul.f32 %v2742, %v756
    %v2765 = vmul.f32 %v2745, %v756
    %v2766 = vadd.f32 %v2762, %v2764
    %v2767 = vadd.f32 %v2763, %v2765
    %v2768 = vmul.f32 %v2750, %v761
    %v2769 = vmul.f32 %v2753, %v761
    %v2770 = vadd.f32 %v2766, %v2768
    %v2771 = vadd.f32 %v2767, %v2769
    %v2772 = vpack.c.bf16 %v2771, %v2770
    %s2773 = scalar_lea.vmem %s53, 16
    %v2774 = vld [vmem:[%s2773] sm:$0xf]
    %v2775 = vld [vmem:[%s2773 + $0x4] sm:$0xf]
    %v2776 = vld [vmem:[%s2773 + $0x8] sm:$0xf]
    %v2777 = vld [vmem:[%s2773 + $0xc] sm:$0xf]
    %v2782 = vunpack.c.l.b16 %v2774
    %v2783 = vunpack.c.l.b16 %v2775
    %v2784 = vunpack.c.l.b16 %v2776
    %v2785 = vunpack.c.l.b16 %v2777
    %v2786 = vpack.c.b16 %v2783, %v2782
    %v2787 = vpack.c.b16 %v2785, %v2784
    %v2791 = vsel %vm164, %v2772, 0
    %2793 = vmatprep.subr.bf16.mxu0 0
    %2794 = vmatpush1.bf16.msra.mxu0 %v2786
    %2795 = vmatprep.subr.bf16.mxu0 0
    %2796 = vmatpush1.bf16.msra.mxu0 %v2787
    %2797 = vmatprep.subr.bf16.mxu0 0
    %2798 = vmatpush1.bf16.msra.mxu0 0
    %2799 = vmatprep.subr.bf16.mxu0 0
    %2800 = vmatpush1.bf16.msra.mxu0 0
    %2801 = vmatprep.subr.bf16.mxu0 0
    %2802 = vmatpush1.bf16.msra.mxu0 0
    %2803 = vmatprep.subr.bf16.mxu0 0
    %2804 = vmatpush1.bf16.msra.mxu0 0
    %2805 = vmatprep.subr.bf16.mxu0 0
    %2806 = vmatpush1.bf16.msra.mxu0 0
    %2807 = vmatprep.subr.bf16.mxu0 0
    %2808 = vmatpush1.bf16.msra.mxu0 0
    %2809 = vmatprep.subr.bf16.mxu0 0
    %2810 = vmatpush1.bf16.msra.mxu0 0
    %2811 = vmatprep.subr.bf16.mxu0 0
    %2812 = vmatpush1.bf16.msra.mxu0 0
    %2813 = vmatprep.subr.bf16.mxu0 0
    %2814 = vmatpush1.bf16.msra.mxu0 0
    %2815 = vmatprep.subr.bf16.mxu0 0
    %2816 = vmatpush1.bf16.msra.mxu0 0
    %2817 = vmatprep.subr.bf16.mxu0 0
    %2818 = vmatpush1.bf16.msra.mxu0 0
    %2819 = vmatprep.subr.bf16.mxu0 0
    %2820 = vmatpush1.bf16.msra.mxu0 0
    %2821 = vmatprep.subr.bf16.mxu0 0
    %2822 = vmatpush1.bf16.msra.mxu0 0
    %2823 = vmatprep.subr.bf16.mxu0 0
    %2824 = vmatpush1.bf16.msra.mxu0 0
    %2825 = vmatprep.mubr.bf16.mxu0 0
    %2826 = vmatmul.mubr.bf16.gmra.mrb[0].mxu0 %v2791
    %v2827 = vpop.f32.mrb[0].mxu0
    %v2828 = vadd.f32 0.0, %v2827
    %v2829 = vpop.f32.mrb[0].mxu0
    %v2830 = vpop.f32.mrb[0].mxu0
    %v2831 = vadd.f32 0.0, %v2830
    %v2832 = vpop.f32.mrb[0].mxu0
    %2833 = vdwg.mxu0
    %v2834 = vadd.f32 %v2150, %v2828
    %v2835 = vadd.f32 %v2151, %v2831
    %s2836 = scalar_lea.vmem %s61, 1
    %v2837 = vld [vmem:[%s2836] sm:$0x1]
    %v2839 = vlaneseq
    %v2840 = vshrl.u32 %v2839, 7
    %v2841 = vsub.s32 0, %v2840
    %v2842 = vrot.slane %v2837, %v2841
    %v2844 = vadd.f32 %v2834, %v2842
    %v2845 = vadd.f32 %v2835, %v2842
    %2846 = vst.msk [vmem:[#allocation3] sm:$0xff] %vm164, %v2844
    %2847 = vst.msk [vmem:[#allocation3 + $0x8] sm:$0xff] %vm164, %v2845
    %vm2848 = vcmask 23552
    %2849 = vst.msk [vmem:[%s65] sm:$0xff] %vm2848, %v2281
    %2850 = vst.msk [vmem:[%s65 + $0x8] sm:$0xff] %vm2848, %v2282
    // Predicated region
    $region126: #{cross_modal_ssl_forward.1} parent=1 // pred_check
      _
    $region127: #{cross_modal_ssl_forward.1} parent=1 // pred_check_branch
      %2852 = sbr.rel (0) target = $region129
    $region128: #{cross_modal_ssl_forward.1} parent=1 // pred_region
      %s2854 = ssub.s32 256, 256
      %2855 = vsyncadd [#allocation4], %s2854
      %s2856 = sshll.u32 [#allocation3], 4
      %s2857 = int_to_ptr.vmem [resolvable:$true] %s2856
      %2862 = dma.vmem_to_hbm [thread:$0]  %s2857, 256, %s63, [#allocation4], 128, 128, 8
    $region129: #{cross_modal_ssl_forward.1} parent=1 // pred_fallthru
      _
    // Predicated region
    $region130: #{cross_modal_ssl_forward.1} parent=1 // pred_check
      _
    $region131: #{cross_modal_ssl_forward.1} parent=1 // pred_check_branch
      %2864 = sbr.rel (0) target = $region133
    $region132: #{cross_modal_ssl_forward.1} parent=1 // pred_region
      _
    $region133: #{cross_modal_ssl_forward.1} parent=1 // pred_fallthru
      _
    // Predicated region
    $region134: #{cross_modal_ssl_forward.1} parent=1 // pred_check
      _
    $region135: #{cross_modal_ssl_forward.1} parent=1 // pred_check_branch
      %2866 = sbr.rel (0) target = $region137
    $region136: #{cross_modal_ssl_forward.1} parent=1 // pred_region
      %2867 = dma.done [#allocation4], 256
    $region137: #{cross_modal_ssl_forward.1} parent=1 // pred_fallthru
      _
    // Predicated region
    $region138: #{cross_modal_ssl_forward.1} parent=1 // pred_check
      _
    $region139: #{cross_modal_ssl_forward.1} parent=1 // pred_check_branch
      %2869 = sbr.rel (0) target = $region141
    $region140: #{cross_modal_ssl_forward.1} parent=1 // pred_region
      _
    $region141: #{cross_modal_ssl_forward.1} parent=1 // pred_fallthru
      _
    %2870 = vsyncpa [#allocation4], 1

</llo_original>
